<compile_context>
chip_gen: v6e
topology: v6e:2x2x1
jax: 0.10.0
libtpu: 0.0.40
codegen_flags: <defaults>
</compile_context>

<pallas_src>
import jax
import jax.numpy as jnp
import numpy as np
from jax.experimental import pallas as pl
from jax.experimental.pallas import tpu as pltpu


def _round_up(x, m):
    return (x + m - 1) // m * m


def history_encoder_forward(pv_r_u, pv_r_u_len, params, *,
                            matmul_dtype=jnp.bfloat16, t_chunk=32):
    """pv_r_u: (B, T, E) embeddings, pv_r_u_len: (B,) int lengths.

    Returns (rnn_outputs (B, T, 2H), hidden (1, B, 2H)).
    """
    B, T, E = pv_r_u.shape
    H = params["whh_f"].shape[0]
    G = 3 * H

    # ---- batch tiling: sublane multiple, >=2 tiles when possible (v7x) ------
    B_tile = min(_round_up(max(1, -(-B // 2)), 8), 128)
    B_pad = _round_up(B, B_tile)
    n_bt = B_pad // B_tile

    # ---- time chunking (streams the gate slab / outputs, bounds VMEM) -------
    T_chunk = max(1, min(int(t_chunk), T))
    T_pad = _round_up(T, T_chunk)
    n_tc = T_pad // T_chunk

    strict = (matmul_dtype == jnp.float32)
    proj_prec = jax.lax.Precision.HIGHEST if strict else None
    rec_prec = jax.lax.Precision.HIGHEST if strict else jax.lax.Precision.DEFAULT
    gate_dtype = matmul_dtype          # bf16 slab on the fast path

    x = pv_r_u.astype(jnp.float32)
    lens = pv_r_u_len.astype(jnp.int32)
    if B_pad != B:
        x = jnp.pad(x, ((0, B_pad - B), (0, 0), (0, 0)))
        lens = jnp.pad(lens, (0, B_pad - B))               # padded rows: len 0
    x_tm = jnp.transpose(x, (1, 0, 2))                     # (T, B_pad, E)
    lens2 = lens[:, None]                                  # (B_pad, 1)

    # ---- fold b_ih and the r/z halves of b_hh into the input projection -----
    def fold_bias(bih, bhh):
        bih = jnp.asarray(bih, jnp.float32).reshape(3, H)
        bhh = jnp.asarray(bhh, jnp.float32).reshape(3, H)
        fused = bih.at[0].add(bhh[0]).at[1].add(bhh[1])    # r,z folded; n kept
        return fused.reshape(1, G), bhh[2].reshape(1, H)

    bias_f, bhn_f = fold_bias(params["bih_f"], params["bhh_f"])
    bias_b, bhn_b = fold_bias(params["bih_b"], params["bhh_b"])
    bhn = jnp.concatenate([bhn_f, bhn_b], axis=1)          # (1, 2H)  f32

    # ---- hoisted input projection: two big MXU matmuls, no slab permutes ----
    xb = x_tm.reshape(T * B_pad, E).astype(matmul_dtype)

    def proj(w, bias):
        w = jnp.asarray(w, jnp.float32).astype(matmul_dtype)   # (E, 3H)
        g = jnp.dot(xb, w, preferred_element_type=jnp.float32,
                    precision=proj_prec)
        g = (g + bias).astype(gate_dtype).reshape(T, B_pad, G)
        if T_pad != T:
            g = jnp.pad(g, ((0, T_pad - T), (0, 0), (0, 0)))
        return g

    gi_f = proj(params["wih_f"], bias_f)                   # (T_pad, B_pad, 3H)
    gi_b = proj(params["wih_b"], bias_b)                   # (T_pad, B_pad, 3H)

    # recurrent weights stay f32 (tiny; state never round-trips through bf16)
    whh_f = jnp.asarray(params["whh_f"], jnp.float32)      # (H, 3H)
    whh_b = jnp.asarray(params["whh_b"], jnp.float32)      # (H, 3H)

    unroll = max(1, min(8, T_chunk))

    # ------------------------------ kernel -----------------------------------
    def kernel(len_ref, gif_ref, gib_ref, whf_ref, whb_ref, bhn_ref,
               out_f_ref, out_b_ref, hid_ref, hf_ref, hb_ref):
        tc = pl.program_id(1)

        @pl.when(tc == 0)
        def _():
            hf_ref[...] = jnp.zeros_like(hf_ref)
            hb_ref[...] = jnp.zeros_like(hb_ref)

        lens_v = len_ref[...]                              # (B_tile, 1) i32
        whf = whf_ref[...]                                 # (H, 3H) f32
        whb = whb_ref[...]
        bhn_fv = bhn_ref[:, :H]                            # (1, H) hoisted
        bhn_bv = bhn_ref[:, H:]
        t0 = tc * T_chunk

        def cell(gi, gh, bhn_v, h):
            r = jax.nn.sigmoid(gi[:, :H] + gh[:, :H])
            z = jax.nn.sigmoid(gi[:, H:2 * H] + gh[:, H:2 * H])
            n = jnp.tanh(gi[:, 2 * H:] + r * (gh[:, 2 * H:] + bhn_v))
            return n + z * (h - n)                          # == (1-z)*n + z*h

        def step(s, carry):
            h_f, h_b = carry
            t_f = t0 + s
            t_b = T_pad - 1 - t_f

            gi_fs = gif_ref[s].astype(jnp.float32)                   # (B, 3H)
            gi_bs = gib_ref[T_chunk - 1 - s].astype(jnp.float32)     # (B, 3H)

            gh_f = jnp.dot(h_f, whf, preferred_element_type=jnp.float32,
                           precision=rec_prec)
            gh_b = jnp.dot(h_b, whb, preferred_element_type=jnp.float32,
                           precision=rec_prec)

            hn_f = cell(gi_fs, gh_f, bhn_fv, h_f)
            hn_b = cell(gi_bs, gh_b, bhn_bv, h_b)

            m_f = lens_v > t_f                             # (B, 1) bool
            m_b = lens_v > t_b
            h_f2 = jnp.where(m_f, hn_f, h_f)
            h_b2 = jnp.where(m_b, hn_b, h_b)

            out_f_ref[s] = jnp.where(m_f, h_f2, 0.0)
            out_b_ref[T_chunk - 1 - s] = jnp.where(m_b, h_b2, 0.0)
            return (h_f2, h_b2)

        h_f, h_b = jax.lax.fori_loop(0, T_chunk, step,
                                     (hf_ref[...], hb_ref[...]), unroll=unroll)
        hf_ref[...] = h_f
        hb_ref[...] = h_b

        @pl.when(tc == n_tc - 1)
        def _():
            hid_ref[0] = h_f
            hid_ref[1] = h_b

    # ---------------------------- pallas_call --------------------------------
    gate_itemsize = jnp.dtype(gate_dtype).itemsize
    block_bytes = (2 * T_chunk * B_tile * G * gate_itemsize   # gi_f + gi_b
                   + 2 * T_chunk * B_tile * H * 4             # out_f + out_b
                   + 2 * H * G * 4 + 2 * H * 4                # weights + b_hn
                   + B_tile * 4 + 2 * B_tile * H * 4 + 2 * B_tile * H * 4)
    vmem_limit = int(min(64 * 1024 * 1024,
                         max(16 * 1024 * 1024, 2 * block_bytes + (4 << 20))))

    out_f, out_b, hid = pl.pallas_call(
        kernel,
        out_shape=(jax.ShapeDtypeStruct((T_pad, B_pad, H), jnp.float32),
                   jax.ShapeDtypeStruct((T_pad, B_pad, H), jnp.float32),
                   jax.ShapeDtypeStruct((2, B_pad, H), jnp.float32)),
        grid_spec=pltpu.PrefetchScalarGridSpec(
            num_scalar_prefetch=0,
            grid=(n_bt, n_tc),
            in_specs=[
                pl.BlockSpec((B_tile, 1), lambda b, tc: (b, 0)),           # lens
                pl.BlockSpec((T_chunk, B_tile, G),                         # gi fwd
                             lambda b, tc: (tc, b, 0)),
                pl.BlockSpec((T_chunk, B_tile, G),                         # gi bwd (reversed stream)
                             lambda b, tc: (n_tc - 1 - tc, b, 0)),
                pl.BlockSpec((H, G), lambda b, tc: (0, 0)),                # W_hh fwd
                pl.BlockSpec((H, G), lambda b, tc: (0, 0)),                # W_hh bwd
                pl.BlockSpec((1, 2 * H), lambda b, tc: (0, 0)),            # b_hn
            ],
            out_specs=[
                pl.BlockSpec((T_chunk, B_tile, H), lambda b, tc: (tc, b, 0)),
                pl.BlockSpec((T_chunk, B_tile, H),
                             lambda b, tc: (n_tc - 1 - tc, b, 0)),
                pl.BlockSpec((2, B_tile, H), lambda b, tc: (0, b, 0)),     # hidden
            ],
            scratch_shapes=[pltpu.VMEM((B_tile, H), jnp.float32),          # h_f
                            pltpu.VMEM((B_tile, H), jnp.float32)],         # h_b
        ),
        compiler_params=pltpu.CompilerParams(
            dimension_semantics=("parallel", "arbitrary"),
            vmem_limit_bytes=vmem_limit),
    )(lens2, gi_f, gi_b, whh_f, whh_b, bhn)

    out_tm = jnp.concatenate([out_f[:T, :B], out_b[:T, :B]], axis=-1)
    rnn_outputs = jnp.transpose(out_tm, (1, 0, 2))          # (B, T, 2H)
    hidden = jnp.concatenate([hid[0, :B], hid[1, :B]], axis=-1)[None]  # (1,B,2H)
    return rnn_outputs, hidden


# ----------------------------- pure numpy reference -------------------------
def _ref_forward(x, lens, p):
    x = np.asarray(x, np.float32)
    lens = np.asarray(lens, np.int64)
    B, T, E = x.shape
    H = p["whh_f"].shape[0]

    def sigmoid(v):
        return 1.0 / (1.0 + np.exp(-v))

    def cell(x_t, h, wih, whh, bih, bhh):
        gi = x_t @ np.asarray(wih) + np.asarray(bih)
        gh = h @ np.asarray(whh) + np.asarray(bhh)
        r = sigmoid(gi[:, :H] + gh[:, :H])
        z = sigmoid(gi[:, H:2 * H] + gh[:, H:2 * H])
        n = np.tanh(gi[:, 2 * H:] + r * gh[:, 2 * H:])
        return (1.0 - z) * n + z * h

    out = np.zeros((B, T, 2 * H), np.float32)
    hf = np.zeros((B, H), np.float32)
    hb = np.zeros((B, H), np.float32)
    for t in range(T):
        m = (lens > t)[:, None]
        hf = np.where(m, cell(x[:, t], hf, p["wih_f"], p["whh_f"], p["bih_f"], p["bhh_f"]), hf)
        out[:, t, :H] = np.where(m, hf, 0.0)
    for t in range(T - 1, -1, -1):
        m = (lens > t)[:, None]
        hb = np.where(m, cell(x[:, t], hb, p["wih_b"], p["whh_b"], p["bih_b"], p["bhh_b"]), hb)
        out[:, t, H:] = np.where(m, hb, 0.0)
    hidden = np.concatenate([hf, hb], axis=-1)[None]
    return out, hidden


def _init_params(key, embed_dim, hidden_units):
    H = hidden_units // 2
    bound = 1.0 / np.sqrt(H)
    ks = jax.random.split(key, 8)

    def u(k, shape):
        return jax.random.uniform(k, shape, jnp.float32, minval=-bound, maxval=bound)

    return {
        "wih_f": u(ks[0], (embed_dim, 3 * H)),
        "whh_f": u(ks[1], (H, 3 * H)),
        "bih_f": u(ks[2], (1, 3 * H)),
        "bhh_f": u(ks[3], (1, 3 * H)),
        "wih_b": u(ks[4], (embed_dim, 3 * H)),
        "whh_b": u(ks[5], (H, 3 * H)),
        "bih_b": u(ks[6], (1, 3 * H)),
        "bhh_b": u(ks[7], (1, 3 * H)),
    }


if __name__ == "__main__":
    B, T, embed_dim, hidden_units = 4, 8, 32, 32

    key = jax.random.PRNGKey(0)
    k_par, k_x = jax.random.split(key)
    params = _init_params(k_par, embed_dim, hidden_units)

    pv_r_u = jax.random.normal(k_x, (B, T, embed_dim), jnp.float32)
    # varied lengths, including a zero-length row (torch's re-pad path)
    pv_r_u_len = jnp.array([T, 3, 0, 5], dtype=jnp.int32)

    ref_out, ref_hid = _ref_forward(np.asarray(pv_r_u), np.asarray(pv_r_u_len), params)

    # strict check: f32 operands + HIGHEST precision; t_chunk=3 exercises the
    # multi-chunk streaming path (reversed bwd stream, time padding, h carry).
    out32, hid32 = history_encoder_forward(pv_r_u, pv_r_u_len, params,
                                           matmul_dtype=jnp.float32, t_chunk=3)
    jax.block_until_ready((out32, hid32))
    np.testing.assert_allclose(np.asarray(out32), ref_out, rtol=5e-3, atol=5e-3)
    np.testing.assert_allclose(np.asarray(hid32), ref_hid, rtol=5e-3, atol=5e-3)

    # fast path: bf16 operands + bf16 gate slab (state / accumulation stay f32)
    outbf, hidbf = history_encoder_forward(pv_r_u, pv_r_u_len, params,
                                           matmul_dtype=jnp.bfloat16)
    jax.block_until_ready((outbf, hidbf))
    np.testing.assert_allclose(np.asarray(outbf), ref_out, rtol=3e-2, atol=3e-2)
    np.testing.assert_allclose(np.asarray(hidbf), ref_hid, rtol=3e-2, atol=3e-2)

    print("KERNEL_OK")
</pallas_src>

<mosaic_0001>
module attributes {stable_mosaic.version = 11 : i64} {
  func.func @kernel(%arg0: i32, %arg1: i32, %arg2: memref<8x1xi32, #tpu.memory_space<vmem>>, %arg3: memref<3x8x48xf32, #tpu.memory_space<vmem>>, %arg4: memref<3x8x48xf32, #tpu.memory_space<vmem>>, %arg5: memref<16x48xf32, #tpu.memory_space<vmem>>, %arg6: memref<16x48xf32, #tpu.memory_space<vmem>>, %arg7: memref<1x32xf32, #tpu.memory_space<vmem>>, %arg8: memref<3x8x16xf32, #tpu.memory_space<vmem>>, %arg9: memref<3x8x16xf32, #tpu.memory_space<vmem>>, %arg10: memref<2x8x16xf32, #tpu.memory_space<vmem>>, %arg11: memref<8x16xf32, #tpu.memory_space<vmem>>, %arg12: memref<8x16xf32, #tpu.memory_space<vmem>>) attributes {dimension_semantics = [#tpu.dimension_semantics<parallel>, #tpu.dimension_semantics<arbitrary>], iteration_bounds = array<i64: 1, 3>, scalar_prefetch = 0 : i64, scratch_operands = 2 : i64, tpu.core_type = #tpu.core_type<tc>, window_params = [{transform_indices = @transform_0, window_bounds = array<i64: 8, 1>}, {transform_indices = @transform_1, window_bounds = array<i64: 3, 8, 48>}, {transform_indices = @transform_2, window_bounds = array<i64: 3, 8, 48>}, {pipeline_mode = #tpu.pipeline_mode<synchronous>, transform_indices = @transform_3, window_bounds = array<i64: 16, 48>}, {pipeline_mode = #tpu.pipeline_mode<synchronous>, transform_indices = @transform_4, window_bounds = array<i64: 16, 48>}, {pipeline_mode = #tpu.pipeline_mode<synchronous>, transform_indices = @transform_5, window_bounds = array<i64: 1, 32>}, {transform_indices = @transform_6, window_bounds = array<i64: 3, 8, 16>}, {transform_indices = @transform_7, window_bounds = array<i64: 3, 8, 16>}, {transform_indices = @transform_8, window_bounds = array<i64: 2, 8, 16>}]} {
    %c0_i32 = arith.constant 0 : i32
    %0 = arith.cmpi eq, %arg1, %c0_i32 : i32
    %1 = arith.extui %0 : i1 to i32
    %c0_i32_0 = arith.constant 0 : i32
    %2 = arith.cmpi ne, %1, %c0_i32_0 : i32
    scf.if %2 {
      %cst_76 = arith.constant 0.000000e+00 : f32
      %286 = vector.broadcast %cst_76 : f32 to vector<8x16xf32>
      %c0_77 = arith.constant 0 : index
      %c0_78 = arith.constant 0 : index
      %287 = vector.load %arg11[%c0_77, %c0_78] : memref<8x16xf32, #tpu.memory_space<vmem>>, vector<8x16xf32>
      tpu.vector_store %arg11[%c0_77, %c0_78], %286 {strides = array<i32>} : memref<8x16xf32, #tpu.memory_space<vmem>>, vector<8x16xf32>,
      %cst_79 = arith.constant 0.000000e+00 : f32
      %288 = vector.broadcast %cst_79 : f32 to vector<8x16xf32>
      %c0_80 = arith.constant 0 : index
      %c0_81 = arith.constant 0 : index
      %289 = vector.load %arg12[%c0_80, %c0_81] : memref<8x16xf32, #tpu.memory_space<vmem>>, vector<8x16xf32>
      tpu.vector_store %arg12[%c0_80, %c0_81], %288 {strides = array<i32>} : memref<8x16xf32, #tpu.memory_space<vmem>>, vector<8x16xf32>,
    } else {
    }
    %c0 = arith.constant 0 : index
    %c0_1 = arith.constant 0 : index
    %3 = vector.load %arg2[%c0, %c0_1] : memref<8x1xi32, #tpu.memory_space<vmem>>, vector<8x1xi32>
    %c0_2 = arith.constant 0 : index
    %c0_3 = arith.constant 0 : index
    %4 = vector.load %arg5[%c0_2, %c0_3] : memref<16x48xf32, #tpu.memory_space<vmem>>, vector<16x48xf32>
    %c0_4 = arith.constant 0 : index
    %c0_5 = arith.constant 0 : index
    %5 = vector.load %arg6[%c0_4, %c0_5] : memref<16x48xf32, #tpu.memory_space<vmem>>, vector<16x48xf32>
    %c0_6 = arith.constant 0 : index
    %c0_7 = arith.constant 0 : index
    %6 = vector.load %arg7[%c0_6, %c0_7] : memref<1x32xf32, #tpu.memory_space<vmem>>, vector<1x16xf32>
    %c0_8 = arith.constant 0 : index
    %c16 = arith.constant 16 : index
    %7 = vector.load %arg7[%c0_8, %c16] : memref<1x32xf32, #tpu.memory_space<vmem>>, vector<1x16xf32>
    %c3_i32 = arith.constant 3 : i32
    %8 = arith.muli %arg1, %c3_i32 : i32
    %c0_9 = arith.constant 0 : index
    %c0_10 = arith.constant 0 : index
    %9 = vector.load %arg11[%c0_9, %c0_10] : memref<8x16xf32, #tpu.memory_space<vmem>>, vector<8x16xf32>
    %c0_11 = arith.constant 0 : index
    %c0_12 = arith.constant 0 : index
    %10 = vector.load %arg12[%c0_11, %c0_12] : memref<8x16xf32, #tpu.memory_space<vmem>>, vector<8x16xf32>
    %c0_i32_13 = arith.constant 0 : i32
    %11 = arith.addi %8, %c0_i32_13 : i32
    %c8_i32 = arith.constant 8 : i32
    %12 = arith.subi %c8_i32, %11 : i32
    %13 = arith.index_cast %c0_i32_13 : i32 to index
    %c0_14 = arith.constant 0 : index
    %c0_15 = arith.constant 0 : index
    %14 = vector.load %arg3[%13, %c0_14, %c0_15] : memref<3x8x48xf32, #tpu.memory_space<vmem>>, vector<1x8x48xf32>
    %15 = vector.shape_cast %14 : vector<1x8x48xf32> to vector<8x48xf32>
    %c2_i32 = arith.constant 2 : i32
    %16 = arith.subi %c2_i32, %c0_i32_13 : i32
    %17 = arith.index_cast %16 : i32 to index
    %c0_16 = arith.constant 0 : index
    %c0_17 = arith.constant 0 : index
    %18 = vector.load %arg4[%17, %c0_16, %c0_17] : memref<3x8x48xf32, #tpu.memory_space<vmem>>, vector<1x8x48xf32>
    %19 = vector.shape_cast %18 : vector<1x8x48xf32> to vector<8x48xf32>
    %cst = arith.constant dense<0.000000e+00> : vector<8x48xf32>
    %20 = tpu.matmul %9, %4, %cst {dimension_numbers = #tpu.dot_dimension_numbers<[1], [0], [0], [1], [0, 0, 1, 1], [], []>, precision = #tpu.contract_precision<fp32>} : vector<8x16xf32>, vector<16x48xf32>, vector<8x48xf32> -> vector<8x48xf32>
    %cst_18 = arith.constant dense<0.000000e+00> : vector<8x48xf32>
    %21 = tpu.matmul %10, %5, %cst_18 {dimension_numbers = #tpu.dot_dimension_numbers<[1], [0], [0], [1], [0, 0, 1, 1], [], []>, precision = #tpu.contract_precision<fp32>} : vector<8x16xf32>, vector<16x48xf32>, vector<8x48xf32> -> vector<8x48xf32>
    %22 = vector.extract_strided_slice %15 {offsets = [0, 0], sizes = [8, 16], strides = [1, 1]} : vector<8x48xf32> to vector<8x16xf32>
    %23 = vector.extract_strided_slice %20 {offsets = [0, 0], sizes = [8, 16], strides = [1, 1]} : vector<8x48xf32> to vector<8x16xf32>
    %24 = arith.addf %22, %23 : vector<8x16xf32>
    %25 = arith.negf %24 : vector<8x16xf32>
    %26 = math.exp %25 : vector<8x16xf32>
    %cst_19 = arith.constant 1.000000e+00 : f32
    %27 = vector.broadcast %cst_19 : f32 to vector<8x16xf32>
    %28 = arith.addf %27, %26 : vector<8x16xf32>
    %29 = arith.divf %27, %28 : vector<8x16xf32>
    %30 = vector.extract_strided_slice %15 {offsets = [0, 16], sizes = [8, 16], strides = [1, 1]} : vector<8x48xf32> to vector<8x16xf32>
    %31 = vector.extract_strided_slice %20 {offsets = [0, 16], sizes = [8, 16], strides = [1, 1]} : vector<8x48xf32> to vector<8x16xf32>
    %32 = arith.addf %30, %31 : vector<8x16xf32>
    %33 = arith.negf %32 : vector<8x16xf32>
    %34 = math.exp %33 : vector<8x16xf32>
    %cst_20 = arith.constant 1.000000e+00 : f32
    %35 = vector.broadcast %cst_20 : f32 to vector<8x16xf32>
    %36 = arith.addf %35, %34 : vector<8x16xf32>
    %37 = arith.divf %35, %36 : vector<8x16xf32>
    %38 = vector.extract_strided_slice %15 {offsets = [0, 32], sizes = [8, 16], strides = [1, 1]} : vector<8x48xf32> to vector<8x16xf32>
    %39 = vector.extract_strided_slice %20 {offsets = [0, 32], sizes = [8, 16], strides = [1, 1]} : vector<8x48xf32> to vector<8x16xf32>
    %40 = vector.broadcast %6 : vector<1x16xf32> to vector<8x16xf32>
    %41 = arith.addf %39, %40 : vector<8x16xf32>
    %42 = arith.mulf %29, %41 : vector<8x16xf32>
    %43 = arith.addf %38, %42 : vector<8x16xf32>
    %44 = math.tanh %43 : vector<8x16xf32>
    %45 = arith.subf %9, %44 : vector<8x16xf32>
    %46 = arith.mulf %37, %45 : vector<8x16xf32>
    %47 = arith.addf %44, %46 : vector<8x16xf32>
    %48 = vector.extract_strided_slice %19 {offsets = [0, 0], sizes = [8, 16], strides = [1, 1]} : vector<8x48xf32> to vector<8x16xf32>
    %49 = vector.extract_strided_slice %21 {offsets = [0, 0], sizes = [8, 16], strides = [1, 1]} : vector<8x48xf32> to vector<8x16xf32>
    %50 = arith.addf %48, %49 : vector<8x16xf32>
    %51 = arith.negf %50 : vector<8x16xf32>
    %52 = math.exp %51 : vector<8x16xf32>
    %cst_21 = arith.constant 1.000000e+00 : f32
    %53 = vector.broadcast %cst_21 : f32 to vector<8x16xf32>
    %54 = arith.addf %53, %52 : vector<8x16xf32>
    %55 = arith.divf %53, %54 : vector<8x16xf32>
    %56 = vector.extract_strided_slice %19 {offsets = [0, 16], sizes = [8, 16], strides = [1, 1]} : vector<8x48xf32> to vector<8x16xf32>
    %57 = vector.extract_strided_slice %21 {offsets = [0, 16], sizes = [8, 16], strides = [1, 1]} : vector<8x48xf32> to vector<8x16xf32>
    %58 = arith.addf %56, %57 : vector<8x16xf32>
    %59 = arith.negf %58 : vector<8x16xf32>
    %60 = math.exp %59 : vector<8x16xf32>
    %cst_22 = arith.constant 1.000000e+00 : f32
    %61 = vector.broadcast %cst_22 : f32 to vector<8x16xf32>
    %62 = arith.addf %61, %60 : vector<8x16xf32>
    %63 = arith.divf %61, %62 : vector<8x16xf32>
    %64 = vector.extract_strided_slice %19 {offsets = [0, 32], sizes = [8, 16], strides = [1, 1]} : vector<8x48xf32> to vector<8x16xf32>
    %65 = vector.extract_strided_slice %21 {offsets = [0, 32], sizes = [8, 16], strides = [1, 1]} : vector<8x48xf32> to vector<8x16xf32>
    %66 = vector.broadcast %7 : vector<1x16xf32> to vector<8x16xf32>
    %67 = arith.addf %65, %66 : vector<8x16xf32>
    %68 = arith.mulf %55, %67 : vector<8x16xf32>
    %69 = arith.addf %64, %68 : vector<8x16xf32>
    %70 = math.tanh %69 : vector<8x16xf32>
    %71 = arith.subf %10, %70 : vector<8x16xf32>
    %72 = arith.mulf %63, %71 : vector<8x16xf32>
    %73 = arith.addf %70, %72 : vector<8x16xf32>
    %74 = vector.broadcast %11 : i32 to vector<8x1xi32>
    %75 = arith.cmpi sgt, %3, %74 : vector<8x1xi32>
    %76 = vector.broadcast %12 : i32 to vector<8x1xi32>
    %77 = arith.cmpi sgt, %3, %76 : vector<8x1xi32>
    %78 = vector.shape_cast %75 : vector<8x1xi1> to vector<8x1xi1>
    %79 = vector.broadcast %78 : vector<8x1xi1> to vector<8x16xi1>
    %80 = arith.select %79, %47, %9 : vector<8x16xi1>, vector<8x16xf32>
    %81 = vector.shape_cast %77 : vector<8x1xi1> to vector<8x1xi1>
    %82 = vector.broadcast %81 : vector<8x1xi1> to vector<8x16xi1>
    %83 = arith.select %82, %73, %10 : vector<8x16xi1>, vector<8x16xf32>
    %cst_23 = arith.constant 0.000000e+00 : f32
    %84 = vector.shape_cast %75 : vector<8x1xi1> to vector<8x1xi1>
    %85 = vector.broadcast %84 : vector<8x1xi1> to vector<8x16xi1>
    %86 = vector.broadcast %cst_23 : f32 to vector<8x16xf32>
    %87 = arith.select %85, %80, %86 : vector<8x16xi1>, vector<8x16xf32>
    %88 = arith.index_cast %c0_i32_13 : i32 to index
    %c0_24 = arith.constant 0 : index
    %c0_25 = arith.constant 0 : index
    %89 = vector.load %arg8[%88, %c0_24, %c0_25] : memref<3x8x16xf32, #tpu.memory_space<vmem>>, vector<1x8x16xf32>
    %90 = vector.shape_cast %89 : vector<1x8x16xf32> to vector<8x16xf32>
    %91 = vector.shape_cast %87 : vector<8x16xf32> to vector<1x8x16xf32>
    tpu.vector_store %arg8[%88, %c0_24, %c0_25], %91 {strides = array<i32>} : memref<3x8x16xf32, #tpu.memory_space<vmem>>, vector<1x8x16xf32>,
    %cst_26 = arith.constant 0.000000e+00 : f32
    %92 = vector.shape_cast %77 : vector<8x1xi1> to vector<8x1xi1>
    %93 = vector.broadcast %92 : vector<8x1xi1> to vector<8x16xi1>
    %94 = vector.broadcast %cst_26 : f32 to vector<8x16xf32>
    %95 = arith.select %93, %83, %94 : vector<8x16xi1>, vector<8x16xf32>
    %c2_i32_27 = arith.constant 2 : i32
    %96 = arith.subi %c2_i32_27, %c0_i32_13 : i32
    %97 = arith.index_cast %96 : i32 to index
    %c0_28 = arith.constant 0 : index
    %c0_29 = arith.constant 0 : index
    %98 = vector.load %arg9[%97, %c0_28, %c0_29] : memref<3x8x16xf32, #tpu.memory_space<vmem>>, vector<1x8x16xf32>
    %99 = vector.shape_cast %98 : vector<1x8x16xf32> to vector<8x16xf32>
    %100 = vector.shape_cast %95 : vector<8x16xf32> to vector<1x8x16xf32>
    tpu.vector_store %arg9[%97, %c0_28, %c0_29], %100 {strides = array<i32>} : memref<3x8x16xf32, #tpu.memory_space<vmem>>, vector<1x8x16xf32>,
    %c1_i32 = arith.constant 1 : i32
    %101 = arith.addi %8, %c1_i32 : i32
    %c8_i32_30 = arith.constant 8 : i32
    %102 = arith.subi %c8_i32_30, %101 : i32
    %103 = arith.index_cast %c1_i32 : i32 to index
    %c0_31 = arith.constant 0 : index
    %c0_32 = arith.constant 0 : index
    %104 = vector.load %arg3[%103, %c0_31, %c0_32] : memref<3x8x48xf32, #tpu.memory_space<vmem>>, vector<1x8x48xf32>
    %105 = vector.shape_cast %104 : vector<1x8x48xf32> to vector<8x48xf32>
    %c2_i32_33 = arith.constant 2 : i32
    %106 = arith.subi %c2_i32_33, %c1_i32 : i32
    %107 = arith.index_cast %106 : i32 to index
    %c0_34 = arith.constant 0 : index
    %c0_35 = arith.constant 0 : index
    %108 = vector.load %arg4[%107, %c0_34, %c0_35] : memref<3x8x48xf32, #tpu.memory_space<vmem>>, vector<1x8x48xf32>
    %109 = vector.shape_cast %108 : vector<1x8x48xf32> to vector<8x48xf32>
    %cst_36 = arith.constant dense<0.000000e+00> : vector<8x48xf32>
    %110 = tpu.matmul %80, %4, %cst_36 {dimension_numbers = #tpu.dot_dimension_numbers<[1], [0], [0], [1], [0, 0, 1, 1], [], []>, precision = #tpu.contract_precision<fp32>} : vector<8x16xf32>, vector<16x48xf32>, vector<8x48xf32> -> vector<8x48xf32>
    %cst_37 = arith.constant dense<0.000000e+00> : vector<8x48xf32>
    %111 = tpu.matmul %83, %5, %cst_37 {dimension_numbers = #tpu.dot_dimension_numbers<[1], [0], [0], [1], [0, 0, 1, 1], [], []>, precision = #tpu.contract_precision<fp32>} : vector<8x16xf32>, vector<16x48xf32>, vector<8x48xf32> -> vector<8x48xf32>
    %112 = vector.extract_strided_slice %105 {offsets = [0, 0], sizes = [8, 16], strides = [1, 1]} : vector<8x48xf32> to vector<8x16xf32>
    %113 = vector.extract_strided_slice %110 {offsets = [0, 0], sizes = [8, 16], strides = [1, 1]} : vector<8x48xf32> to vector<8x16xf32>
    %114 = arith.addf %112, %113 : vector<8x16xf32>
    %115 = arith.negf %114 : vector<8x16xf32>
    %116 = math.exp %115 : vector<8x16xf32>
    %cst_38 = arith.constant 1.000000e+00 : f32
    %117 = vector.broadcast %cst_38 : f32 to vector<8x16xf32>
    %118 = arith.addf %117, %116 : vector<8x16xf32>
    %119 = arith.divf %117, %118 : vector<8x16xf32>
    %120 = vector.extract_strided_slice %105 {offsets = [0, 16], sizes = [8, 16], strides = [1, 1]} : vector<8x48xf32> to vector<8x16xf32>
    %121 = vector.extract_strided_slice %110 {offsets = [0, 16], sizes = [8, 16], strides = [1, 1]} : vector<8x48xf32> to vector<8x16xf32>
    %122 = arith.addf %120, %121 : vector<8x16xf32>
    %123 = arith.negf %122 : vector<8x16xf32>
    %124 = math.exp %123 : vector<8x16xf32>
    %cst_39 = arith.constant 1.000000e+00 : f32
    %125 = vector.broadcast %cst_39 : f32 to vector<8x16xf32>
    %126 = arith.addf %125, %124 : vector<8x16xf32>
    %127 = arith.divf %125, %126 : vector<8x16xf32>
    %128 = vector.extract_strided_slice %105 {offsets = [0, 32], sizes = [8, 16], strides = [1, 1]} : vector<8x48xf32> to vector<8x16xf32>
    %129 = vector.extract_strided_slice %110 {offsets = [0, 32], sizes = [8, 16], strides = [1, 1]} : vector<8x48xf32> to vector<8x16xf32>
    %130 = vector.broadcast %6 : vector<1x16xf32> to vector<8x16xf32>
    %131 = arith.addf %129, %130 : vector<8x16xf32>
    %132 = arith.mulf %119, %131 : vector<8x16xf32>
    %133 = arith.addf %128, %132 : vector<8x16xf32>
    %134 = math.tanh %133 : vector<8x16xf32>
    %135 = arith.subf %80, %134 : vector<8x16xf32>
    %136 = arith.mulf %127, %135 : vector<8x16xf32>
    %137 = arith.addf %134, %136 : vector<8x16xf32>
    %138 = vector.extract_strided_slice %109 {offsets = [0, 0], sizes = [8, 16], strides = [1, 1]} : vector<8x48xf32> to vector<8x16xf32>
    %139 = vector.extract_strided_slice %111 {offsets = [0, 0], sizes = [8, 16], strides = [1, 1]} : vector<8x48xf32> to vector<8x16xf32>
    %140 = arith.addf %138, %139 : vector<8x16xf32>
    %141 = arith.negf %140 : vector<8x16xf32>
    %142 = math.exp %141 : vector<8x16xf32>
    %cst_40 = arith.constant 1.000000e+00 : f32
    %143 = vector.broadcast %cst_40 : f32 to vector<8x16xf32>
    %144 = arith.addf %143, %142 : vector<8x16xf32>
    %145 = arith.divf %143, %144 : vector<8x16xf32>
    %146 = vector.extract_strided_slice %109 {offsets = [0, 16], sizes = [8, 16], strides = [1, 1]} : vector<8x48xf32> to vector<8x16xf32>
    %147 = vector.extract_strided_slice %111 {offsets = [0, 16], sizes = [8, 16], strides = [1, 1]} : vector<8x48xf32> to vector<8x16xf32>
    %148 = arith.addf %146, %147 : vector<8x16xf32>
    %149 = arith.negf %148 : vector<8x16xf32>
    %150 = math.exp %149 : vector<8x16xf32>
    %cst_41 = arith.constant 1.000000e+00 : f32
    %151 = vector.broadcast %cst_41 : f32 to vector<8x16xf32>
    %152 = arith.addf %151, %150 : vector<8x16xf32>
    %153 = arith.divf %151, %152 : vector<8x16xf32>
    %154 = vector.extract_strided_slice %109 {offsets = [0, 32], sizes = [8, 16], strides = [1, 1]} : vector<8x48xf32> to vector<8x16xf32>
    %155 = vector.extract_strided_slice %111 {offsets = [0, 32], sizes = [8, 16], strides = [1, 1]} : vector<8x48xf32> to vector<8x16xf32>
    %156 = vector.broadcast %7 : vector<1x16xf32> to vector<8x16xf32>
    %157 = arith.addf %155, %156 : vector<8x16xf32>
    %158 = arith.mulf %145, %157 : vector<8x16xf32>
    %159 = arith.addf %154, %158 : vector<8x16xf32>
    %160 = math.tanh %159 : vector<8x16xf32>
    %161 = arith.subf %83, %160 : vector<8x16xf32>
    %162 = arith.mulf %153, %161 : vector<8x16xf32>
    %163 = arith.addf %160, %162 : vector<8x16xf32>
    %164 = vector.broadcast %101 : i32 to vector<8x1xi32>
    %165 = arith.cmpi sgt, %3, %164 : vector<8x1xi32>
    %166 = vector.broadcast %102 : i32 to vector<8x1xi32>
    %167 = arith.cmpi sgt, %3, %166 : vector<8x1xi32>
    %168 = vector.shape_cast %165 : vector<8x1xi1> to vector<8x1xi1>
    %169 = vector.broadcast %168 : vector<8x1xi1> to vector<8x16xi1>
    %170 = arith.select %169, %137, %80 : vector<8x16xi1>, vector<8x16xf32>
    %171 = vector.shape_cast %167 : vector<8x1xi1> to vector<8x1xi1>
    %172 = vector.broadcast %171 : vector<8x1xi1> to vector<8x16xi1>
    %173 = arith.select %172, %163, %83 : vector<8x16xi1>, vector<8x16xf32>
    %cst_42 = arith.constant 0.000000e+00 : f32
    %174 = vector.shape_cast %165 : vector<8x1xi1> to vector<8x1xi1>
    %175 = vector.broadcast %174 : vector<8x1xi1> to vector<8x16xi1>
    %176 = vector.broadcast %cst_42 : f32 to vector<8x16xf32>
    %177 = arith.select %175, %170, %176 : vector<8x16xi1>, vector<8x16xf32>
    %178 = arith.index_cast %c1_i32 : i32 to index
    %c0_43 = arith.constant 0 : index
    %c0_44 = arith.constant 0 : index
    %179 = vector.load %arg8[%178, %c0_43, %c0_44] : memref<3x8x16xf32, #tpu.memory_space<vmem>>, vector<1x8x16xf32>
    %180 = vector.shape_cast %179 : vector<1x8x16xf32> to vector<8x16xf32>
    %181 = vector.shape_cast %177 : vector<8x16xf32> to vector<1x8x16xf32>
    tpu.vector_store %arg8[%178, %c0_43, %c0_44], %181 {strides = array<i32>} : memref<3x8x16xf32, #tpu.memory_space<vmem>>, vector<1x8x16xf32>,
    %cst_45 = arith.constant 0.000000e+00 : f32
    %182 = vector.shape_cast %167 : vector<8x1xi1> to vector<8x1xi1>
    %183 = vector.broadcast %182 : vector<8x1xi1> to vector<8x16xi1>
    %184 = vector.broadcast %cst_45 : f32 to vector<8x16xf32>
    %185 = arith.select %183, %173, %184 : vector<8x16xi1>, vector<8x16xf32>
    %c2_i32_46 = arith.constant 2 : i32
    %186 = arith.subi %c2_i32_46, %c1_i32 : i32
    %187 = arith.index_cast %186 : i32 to index
    %c0_47 = arith.constant 0 : index
    %c0_48 = arith.constant 0 : index
    %188 = vector.load %arg9[%187, %c0_47, %c0_48] : memref<3x8x16xf32, #tpu.memory_space<vmem>>, vector<1x8x16xf32>
    %189 = vector.shape_cast %188 : vector<1x8x16xf32> to vector<8x16xf32>
    %190 = vector.shape_cast %185 : vector<8x16xf32> to vector<1x8x16xf32>
    tpu.vector_store %arg9[%187, %c0_47, %c0_48], %190 {strides = array<i32>} : memref<3x8x16xf32, #tpu.memory_space<vmem>>, vector<1x8x16xf32>,
    %c2_i32_49 = arith.constant 2 : i32
    %191 = arith.addi %8, %c2_i32_49 : i32
    %c8_i32_50 = arith.constant 8 : i32
    %192 = arith.subi %c8_i32_50, %191 : i32
    %193 = arith.index_cast %c2_i32_49 : i32 to index
    %c0_51 = arith.constant 0 : index
    %c0_52 = arith.constant 0 : index
    %194 = vector.load %arg3[%193, %c0_51, %c0_52] : memref<3x8x48xf32, #tpu.memory_space<vmem>>, vector<1x8x48xf32>
    %195 = vector.shape_cast %194 : vector<1x8x48xf32> to vector<8x48xf32>
    %c2_i32_53 = arith.constant 2 : i32
    %196 = arith.subi %c2_i32_53, %c2_i32_49 : i32
    %197 = arith.index_cast %196 : i32 to index
    %c0_54 = arith.constant 0 : index
    %c0_55 = arith.constant 0 : index
    %198 = vector.load %arg4[%197, %c0_54, %c0_55] : memref<3x8x48xf32, #tpu.memory_space<vmem>>, vector<1x8x48xf32>
    %199 = vector.shape_cast %198 : vector<1x8x48xf32> to vector<8x48xf32>
    %cst_56 = arith.constant dense<0.000000e+00> : vector<8x48xf32>
    %200 = tpu.matmul %170, %4, %cst_56 {dimension_numbers = #tpu.dot_dimension_numbers<[1], [0], [0], [1], [0, 0, 1, 1], [], []>, precision = #tpu.contract_precision<fp32>} : vector<8x16xf32>, vector<16x48xf32>, vector<8x48xf32> -> vector<8x48xf32>
    %cst_57 = arith.constant dense<0.000000e+00> : vector<8x48xf32>
    %201 = tpu.matmul %173, %5, %cst_57 {dimension_numbers = #tpu.dot_dimension_numbers<[1], [0], [0], [1], [0, 0, 1, 1], [], []>, precision = #tpu.contract_precision<fp32>} : vector<8x16xf32>, vector<16x48xf32>, vector<8x48xf32> -> vector<8x48xf32>
    %202 = vector.extract_strided_slice %195 {offsets = [0, 0], sizes = [8, 16], strides = [1, 1]} : vector<8x48xf32> to vector<8x16xf32>
    %203 = vector.extract_strided_slice %200 {offsets = [0, 0], sizes = [8, 16], strides = [1, 1]} : vector<8x48xf32> to vector<8x16xf32>
    %204 = arith.addf %202, %203 : vector<8x16xf32>
    %205 = arith.negf %204 : vector<8x16xf32>
    %206 = math.exp %205 : vector<8x16xf32>
    %cst_58 = arith.constant 1.000000e+00 : f32
    %207 = vector.broadcast %cst_58 : f32 to vector<8x16xf32>
    %208 = arith.addf %207, %206 : vector<8x16xf32>
    %209 = arith.divf %207, %208 : vector<8x16xf32>
    %210 = vector.extract_strided_slice %195 {offsets = [0, 16], sizes = [8, 16], strides = [1, 1]} : vector<8x48xf32> to vector<8x16xf32>
    %211 = vector.extract_strided_slice %200 {offsets = [0, 16], sizes = [8, 16], strides = [1, 1]} : vector<8x48xf32> to vector<8x16xf32>
    %212 = arith.addf %210, %211 : vector<8x16xf32>
    %213 = arith.negf %212 : vector<8x16xf32>
    %214 = math.exp %213 : vector<8x16xf32>
    %cst_59 = arith.constant 1.000000e+00 : f32
    %215 = vector.broadcast %cst_59 : f32 to vector<8x16xf32>
    %216 = arith.addf %215, %214 : vector<8x16xf32>
    %217 = arith.divf %215, %216 : vector<8x16xf32>
    %218 = vector.extract_strided_slice %195 {offsets = [0, 32], sizes = [8, 16], strides = [1, 1]} : vector<8x48xf32> to vector<8x16xf32>
    %219 = vector.extract_strided_slice %200 {offsets = [0, 32], sizes = [8, 16], strides = [1, 1]} : vector<8x48xf32> to vector<8x16xf32>
    %220 = vector.broadcast %6 : vector<1x16xf32> to vector<8x16xf32>
    %221 = arith.addf %219, %220 : vector<8x16xf32>
    %222 = arith.mulf %209, %221 : vector<8x16xf32>
    %223 = arith.addf %218, %222 : vector<8x16xf32>
    %224 = math.tanh %223 : vector<8x16xf32>
    %225 = arith.subf %170, %224 : vector<8x16xf32>
    %226 = arith.mulf %217, %225 : vector<8x16xf32>
    %227 = arith.addf %224, %226 : vector<8x16xf32>
    %228 = vector.extract_strided_slice %199 {offsets = [0, 0], sizes = [8, 16], strides = [1, 1]} : vector<8x48xf32> to vector<8x16xf32>
    %229 = vector.extract_strided_slice %201 {offsets = [0, 0], sizes = [8, 16], strides = [1, 1]} : vector<8x48xf32> to vector<8x16xf32>
    %230 = arith.addf %228, %229 : vector<8x16xf32>
    %231 = arith.negf %230 : vector<8x16xf32>
    %232 = math.exp %231 : vector<8x16xf32>
    %cst_60 = arith.constant 1.000000e+00 : f32
    %233 = vector.broadcast %cst_60 : f32 to vector<8x16xf32>
    %234 = arith.addf %233, %232 : vector<8x16xf32>
    %235 = arith.divf %233, %234 : vector<8x16xf32>
    %236 = vector.extract_strided_slice %199 {offsets = [0, 16], sizes = [8, 16], strides = [1, 1]} : vector<8x48xf32> to vector<8x16xf32>
    %237 = vector.extract_strided_slice %201 {offsets = [0, 16], sizes = [8, 16], strides = [1, 1]} : vector<8x48xf32> to vector<8x16xf32>
    %238 = arith.addf %236, %237 : vector<8x16xf32>
    %239 = arith.negf %238 : vector<8x16xf32>
    %240 = math.exp %239 : vector<8x16xf32>
    %cst_61 = arith.constant 1.000000e+00 : f32
    %241 = vector.broadcast %cst_61 : f32 to vector<8x16xf32>
    %242 = arith.addf %241, %240 : vector<8x16xf32>
    %243 = arith.divf %241, %242 : vector<8x16xf32>
    %244 = vector.extract_strided_slice %199 {offsets = [0, 32], sizes = [8, 16], strides = [1, 1]} : vector<8x48xf32> to vector<8x16xf32>
    %245 = vector.extract_strided_slice %201 {offsets = [0, 32], sizes = [8, 16], strides = [1, 1]} : vector<8x48xf32> to vector<8x16xf32>
    %246 = vector.broadcast %7 : vector<1x16xf32> to vector<8x16xf32>
    %247 = arith.addf %245, %246 : vector<8x16xf32>
    %248 = arith.mulf %235, %247 : vector<8x16xf32>
    %249 = arith.addf %244, %248 : vector<8x16xf32>
    %250 = math.tanh %249 : vector<8x16xf32>
    %251 = arith.subf %173, %250 : vector<8x16xf32>
    %252 = arith.mulf %243, %251 : vector<8x16xf32>
    %253 = arith.addf %250, %252 : vector<8x16xf32>
    %254 = vector.broadcast %191 : i32 to vector<8x1xi32>
    %255 = arith.cmpi sgt, %3, %254 : vector<8x1xi32>
    %256 = vector.broadcast %192 : i32 to vector<8x1xi32>
    %257 = arith.cmpi sgt, %3, %256 : vector<8x1xi32>
    %258 = vector.shape_cast %255 : vector<8x1xi1> to vector<8x1xi1>
    %259 = vector.broadcast %258 : vector<8x1xi1> to vector<8x16xi1>
    %260 = arith.select %259, %227, %170 : vector<8x16xi1>, vector<8x16xf32>
    %261 = vector.shape_cast %257 : vector<8x1xi1> to vector<8x1xi1>
    %262 = vector.broadcast %261 : vector<8x1xi1> to vector<8x16xi1>
    %263 = arith.select %262, %253, %173 : vector<8x16xi1>, vector<8x16xf32>
    %cst_62 = arith.constant 0.000000e+00 : f32
    %264 = vector.shape_cast %255 : vector<8x1xi1> to vector<8x1xi1>
    %265 = vector.broadcast %264 : vector<8x1xi1> to vector<8x16xi1>
    %266 = vector.broadcast %cst_62 : f32 to vector<8x16xf32>
    %267 = arith.select %265, %260, %266 : vector<8x16xi1>, vector<8x16xf32>
    %268 = arith.index_cast %c2_i32_49 : i32 to index
    %c0_63 = arith.constant 0 : index
    %c0_64 = arith.constant 0 : index
    %269 = vector.load %arg8[%268, %c0_63, %c0_64] : memref<3x8x16xf32, #tpu.memory_space<vmem>>, vector<1x8x16xf32>
    %270 = vector.shape_cast %269 : vector<1x8x16xf32> to vector<8x16xf32>
    %271 = vector.shape_cast %267 : vector<8x16xf32> to vector<1x8x16xf32>
    tpu.vector_store %arg8[%268, %c0_63, %c0_64], %271 {strides = array<i32>} : memref<3x8x16xf32, #tpu.memory_space<vmem>>, vector<1x8x16xf32>,
    %cst_65 = arith.constant 0.000000e+00 : f32
    %272 = vector.shape_cast %257 : vector<8x1xi1> to vector<8x1xi1>
    %273 = vector.broadcast %272 : vector<8x1xi1> to vector<8x16xi1>
    %274 = vector.broadcast %cst_65 : f32 to vector<8x16xf32>
    %275 = arith.select %273, %263, %274 : vector<8x16xi1>, vector<8x16xf32>
    %c2_i32_66 = arith.constant 2 : i32
    %276 = arith.subi %c2_i32_66, %c2_i32_49 : i32
    %277 = arith.index_cast %276 : i32 to index
    %c0_67 = arith.constant 0 : index
    %c0_68 = arith.constant 0 : index
    %278 = vector.load %arg9[%277, %c0_67, %c0_68] : memref<3x8x16xf32, #tpu.memory_space<vmem>>, vector<1x8x16xf32>
    %279 = vector.shape_cast %278 : vector<1x8x16xf32> to vector<8x16xf32>
    %280 = vector.shape_cast %275 : vector<8x16xf32> to vector<1x8x16xf32>
    tpu.vector_store %arg9[%277, %c0_67, %c0_68], %280 {strides = array<i32>} : memref<3x8x16xf32, #tpu.memory_space<vmem>>, vector<1x8x16xf32>,
    %c3_i32_69 = arith.constant 3 : i32
    %c0_70 = arith.constant 0 : index
    %c0_71 = arith.constant 0 : index
    %281 = vector.load %arg11[%c0_70, %c0_71] : memref<8x16xf32, #tpu.memory_space<vmem>>, vector<8x16xf32>
    tpu.vector_store %arg11[%c0_70, %c0_71], %260 {strides = array<i32>} : memref<8x16xf32, #tpu.memory_space<vmem>>, vector<8x16xf32>,
    %c0_72 = arith.constant 0 : index
    %c0_73 = arith.constant 0 : index
    %282 = vector.load %arg12[%c0_72, %c0_73] : memref<8x16xf32, #tpu.memory_space<vmem>>, vector<8x16xf32>
    tpu.vector_store %arg12[%c0_72, %c0_73], %263 {strides = array<i32>} : memref<8x16xf32, #tpu.memory_space<vmem>>, vector<8x16xf32>,
    %c2_i32_74 = arith.constant 2 : i32
    %283 = arith.cmpi eq, %arg1, %c2_i32_74 : i32
    %284 = arith.extui %283 : i1 to i32
    %c0_i32_75 = arith.constant 0 : i32
    %285 = arith.cmpi ne, %284, %c0_i32_75 : i32
    scf.if %285 {
      %c0_76 = arith.constant 0 : index
      %c0_77 = arith.constant 0 : index
      %c0_78 = arith.constant 0 : index
      %286 = vector.load %arg10[%c0_76, %c0_77, %c0_78] : memref<2x8x16xf32, #tpu.memory_space<vmem>>, vector<1x8x16xf32>
      %287 = vector.shape_cast %286 : vector<1x8x16xf32> to vector<8x16xf32>
      %288 = vector.shape_cast %260 : vector<8x16xf32> to vector<1x8x16xf32>
      tpu.vector_store %arg10[%c0_76, %c0_77, %c0_78], %288 {strides = array<i32>} : memref<2x8x16xf32, #tpu.memory_space<vmem>>, vector<1x8x16xf32>,
      %c1 = arith.constant 1 : index
      %c0_79 = arith.constant 0 : index
      %c0_80 = arith.constant 0 : index
      %289 = vector.load %arg10[%c1, %c0_79, %c0_80] : memref<2x8x16xf32, #tpu.memory_space<vmem>>, vector<1x8x16xf32>
      %290 = vector.shape_cast %289 : vector<1x8x16xf32> to vector<8x16xf32>
      %291 = vector.shape_cast %263 : vector<8x16xf32> to vector<1x8x16xf32>
      tpu.vector_store %arg10[%c1, %c0_79, %c0_80], %291 {strides = array<i32>} : memref<2x8x16xf32, #tpu.memory_space<vmem>>, vector<1x8x16xf32>,
    } else {
    }
    return
  }
  func.func @transform_0(%arg0: i32, %arg1: i32) -> (i32, i32) {
    %c0_i32 = arith.constant 0 : i32
    %c0_i32_0 = arith.constant 0 : i32
    return %arg0, %c0_i32 : i32, i32
  }
  func.func @transform_1(%arg0: i32, %arg1: i32) -> (i32, i32, i32) {
    %c0_i32 = arith.constant 0 : i32
    %c0_i32_0 = arith.constant 0 : i32
    return %arg1, %arg0, %c0_i32 : i32, i32, i32
  }
  func.func @transform_2(%arg0: i32, %arg1: i32) -> (i32, i32, i32) {
    %c2_i32 = arith.constant 2 : i32
    %0 = arith.subi %c2_i32, %arg1 : i32
    %c0_i32 = arith.constant 0 : i32
    %c0_i32_0 = arith.constant 0 : i32
    return %0, %arg0, %c0_i32 : i32, i32, i32
  }
  func.func @transform_3(%arg0: i32, %arg1: i32) -> (i32, i32) {
    %c0_i32 = arith.constant 0 : i32
    %c0_i32_0 = arith.constant 0 : i32
    %c0_i32_1 = arith.constant 0 : i32
    return %c0_i32, %c0_i32_0 : i32, i32
  }
  func.func @transform_4(%arg0: i32, %arg1: i32) -> (i32, i32) {
    %c0_i32 = arith.constant 0 : i32
    %c0_i32_0 = arith.constant 0 : i32
    %c0_i32_1 = arith.constant 0 : i32
    return %c0_i32, %c0_i32_0 : i32, i32
  }
  func.func @transform_5(%arg0: i32, %arg1: i32) -> (i32, i32) {
    %c0_i32 = arith.constant 0 : i32
    %c0_i32_0 = arith.constant 0 : i32
    %c0_i32_1 = arith.constant 0 : i32
    return %c0_i32, %c0_i32_0 : i32, i32
  }
  func.func @transform_6(%arg0: i32, %arg1: i32) -> (i32, i32, i32) {
    %c0_i32 = arith.constant 0 : i32
    %c0_i32_0 = arith.constant 0 : i32
    return %arg1, %arg0, %c0_i32 : i32, i32, i32
  }
  func.func @transform_7(%arg0: i32, %arg1: i32) -> (i32, i32, i32) {
    %c2_i32 = arith.constant 2 : i32
    %0 = arith.subi %c2_i32, %arg1 : i32
    %c0_i32 = arith.constant 0 : i32
    %c0_i32_0 = arith.constant 0 : i32
    return %0, %arg0, %c0_i32 : i32, i32, i32
  }
  func.func @transform_8(%arg0: i32, %arg1: i32) -> (i32, i32, i32) {
    %c0_i32 = arith.constant 0 : i32
    %c0_i32_0 = arith.constant 0 : i32
    %c0_i32_1 = arith.constant 0 : i32
    return %c0_i32, %arg0, %c0_i32_0 : i32, i32, i32
  }
}

</mosaic_0001>

<llo_original>
// kernel: tpu_custom_call.1
$region0: #{tpu_custom_call.1}
  #allocation0 [shape = 'u32[]', space=smem, size = 0x4, offset = 0x4, fixed_abs, tag = 'smem constant byte address 0x4 - core index']
  #allocation1 [shape = 'u32[144,128]{1,0:T(1,128)}', space=vmem, size = 0x12000, scoped, tag = 'internal scratch']
  #allocation2 [shape = 'f32[8,16]{1,0:T(8,128)}', space=vmem, size = 0x1000, scoped, tag = 'scratch operand']
  #allocation3 [shape = 'f32[8,16]{1,0:T(8,128)}', space=vmem, size = 0x1000, scoped, tag = 'scratch operand']
  %s0 = inlined_call_operand.vmem [shape: s32[8,1], index: 0, kind: input, shape index: {}]
  %s1 = inlined_call_operand.hbm [shape: f32[9,8,48], index: 1, kind: input, shape index: {}]
  %s2 = inlined_call_operand.hbm [shape: f32[9,8,48], index: 2, kind: input, shape index: {}]
  %s3 = inlined_call_operand.hbm [shape: f32[16,48], index: 3, kind: input, shape index: {}]
  %s4 = inlined_call_operand.vmem [shape: f32[16,48], index: 4, kind: input, shape index: {}]
  %s5 = inlined_call_operand.vmem [shape: f32[1,32], index: 5, kind: input, shape index: {}]
  %s6 = inlined_call_operand.hbm [shape: f32[9,8,16], index: 6, kind: output, shape index: {0}]
  %s7 = inlined_call_operand.hbm [shape: f32[9,8,16], index: 7, kind: output, shape index: {1}]
  %s8 = inlined_call_operand.hbm [shape: f32[2,8,16], index: 8, kind: output, shape index: {2}]
  %9 = xla_tuple %s6, %s7, %s8
  %s10 = sld [smem:[#allocation0]]
  $region93: #{tpu_custom_call.1} parent=0
    _
  %s12 = ssub.s32 1, %s10
  %s13 = scalar_select 0, %s12, %s10
  $region1: #{tpu_custom_call.1} parent=0
    #allocation4 [shape = 'u8[24576]{0}', space=vmem, size = 0x6000, scoped, tag = 'input window, operand 1']
    #allocation5 [shape = 's32[2]{0}', space=sflag, size = 0x8, scoped, tag = 'scoped memory for tpu_custom_call.1']
    #allocation6 [shape = 's32[2]{0}', space=sflag, size = 0x8, scoped, tag = 'scoped memory for tpu_custom_call.1']
    #allocation7 [shape = 'u8[24576]{0}', space=vmem, size = 0x6000, scoped, tag = 'input window, operand 2']
    #allocation8 [shape = 's32[2]{0}', space=sflag, size = 0x8, scoped, tag = 'scoped memory for tpu_custom_call.1']
    #allocation9 [shape = 'u8[8192]{0}', space=vmem, size = 0x2000, scoped, tag = 'input window, operand 3, single buffered']
    #allocation10 [shape = 'u8[24576]{0}', space=vmem, size = 0x6000, scoped, tag = 'output window, operand 0']
    #allocation11 [shape = 'u8[24576]{0}', space=vmem, size = 0x6000, scoped, tag = 'output window, operand 1']
    #allocation12 [shape = 's32[2]{0}', space=sflag, size = 0x8, scoped, tag = 'scoped memory for tpu_custom_call.1']
    #allocation13 [shape = 'u8[8192]{0}', space=vmem, size = 0x2000, scoped, tag = 'output window, operand 2, single buffered']
    %14 = vsyncpa [#allocation5], 0
    %s15 = scalar_lea.sflag [#allocation5], 1
    %16 = vsyncpa %s15, 0
    %17 = vsyncpa [#allocation8], 0
    %s18 = scalar_lea.sflag [#allocation8], 1
    %19 = vsyncpa %s18, 0
    %20 = vsyncpa [#allocation6], 0
    %s21 = scalar_lea.sflag [#allocation6], 1
    %22 = vsyncpa %s21, 0
    %23 = vsyncpa [#allocation12], 0
    %s24 = scalar_lea.sflag [#allocation12], 1
    %25 = vsyncpa %s24, 0
    loop: start=0, step=1, limit=5
    $region2: #{tpu_custom_call.1} parent=1 // loop_pre_header
      _
    $region3: #{tpu_custom_call.1} parent=1 // loop_header
      %s27 = sphi 0, %s31
      %p28 = scmp.ge.s32.totalorder %s27, 5
      %s34 = sphi 0, %s46
      %s35 = sphi 0, %s42
      %s36 = sphi 0, %s34
      %s37 = sphi 0, %s35
      %s38 = sphi 0, %s36
      %s39 = sphi 0, %s37
      %s49 = sphi 0, %s51
      %s52 = sphi 0, %s49
      %s53 = sphi 0, %s52
      %s69 = sphi 0, %s53
      %s77 = sphi 0, %s79
      %s80 = sphi 0, %s77
      %s81 = sphi 0, %s80
      %s97 = sphi 0, %s81
      %s107 = sphi 0, %s109
      %s110 = sphi 0, %s107
      %s111 = sphi 0, %s110
      %s127 = sphi 0, %s111
      %s131 = sphi 0, %s131
      %s133 = sphi 0, %s131
      %s134 = sphi 0, %s133
      %s148 = sphi 0, %s134
      %s152 = sphi 0, %s152
      %s154 = sphi 0, %s152
      %s155 = sphi 0, %s154
      %s169 = sphi 0, %s155
      %s173 = sphi 0, %s173
      %s175 = sphi 0, %s173
      %s176 = sphi 0, %s175
      %s190 = sphi 0, %s176
      %s198 = sphi 0, %s200
      %s201 = sphi 0, %s198
      %s202 = sphi 0, %s201
      %s218 = sphi 0, %s202
      %s228 = sphi 0, %s230
      %s231 = sphi 0, %s228
      %s232 = sphi 0, %s231
      %s248 = sphi 0, %s232
      %s254 = sphi 0, %s256
      %s257 = sphi 0, %s254
      %s258 = sphi 0, %s257
      %s274 = sphi 0, %s258
    $region4: #{tpu_custom_call.1} parent=1 // loop_header_branch
      %30 = sbr.rel (%p28) target = $region8
    $region5: #{tpu_custom_call.1} parent=1 // loop_body
      %s32 = ssub.s32 %s27, 1
      %s33 = ssub.s32 %s27, 2
      %s40 = sadd.s32 1, %s35
      %p41 = scmp.ge.s32.totalorder %s40, 3
      %s42 = scalar_select %p41, 0, %s40
      %s43 = sadd.s32 1, %s34
      %s44 = scalar_select %p41, %s43, %s34
      %p45 = scmp.ge.s32.totalorder %s44, 1
      %s46 = scalar_select %p45, 0, %s44
      %s47 = ssub.s32 %s34, %s46
      %p48 = scmp.eq.s32.totalorder %s47, 0
      %s50 = sadd.s32 %s49, 1
      %s51 = scalar_select %p48, %s49, %s50
      %p54 = pneg %p48
      %p55 = scmp.eq.s32.totalorder %s27, 2
      %p56 = por %p54, %p55
      %p57 = scmp.ne.s32.totalorder %s49, %s52
      %p58 = scmp.eq.s32.totalorder %s27, 0
      %p59 = por %p57, %p58
      %p60 = scmp.ne.s32.totalorder %s49, %s52
      %p61 = scmp.eq.s32.totalorder %s32, 2
      %p62 = por %p60, %p61
      %p63 = scmp.ne.s32.totalorder %s52, %s53
      %p64 = scmp.eq.s32.totalorder %s32, 0
      %p65 = por %p63, %p64
      %p66 = scmp.ne.s32.totalorder %s52, %s53
      %p67 = scmp.eq.s32.totalorder %s33, 2
      %p68 = por %p66, %p67
      %p70 = scmp.ne.s32.totalorder %s53, %s69
      %p71 = scmp.eq.s32.totalorder %s33, 0
      %p72 = por %p70, %p71
      %s73 = ssub.s32 %s35, %s42
      %s74 = ssub.s32 %s34, %s46
      %s75 = sor.u32 %s73, %s74
      %p76 = scmp.eq.s32.totalorder %s75, 0
      %s78 = sadd.s32 %s77, 1
      %s79 = scalar_select %p76, %s77, %s78
      %p82 = pneg %p76
      %p83 = scmp.eq.s32.totalorder %s27, 2
      %p84 = por %p82, %p83
      %p85 = scmp.ne.s32.totalorder %s77, %s80
      %p86 = scmp.eq.s32.totalorder %s27, 0
      %p87 = por %p85, %p86
      %p88 = scmp.ne.s32.totalorder %s77, %s80
      %p89 = scmp.eq.s32.totalorder %s32, 2
      %p90 = por %p88, %p89
      %p91 = scmp.ne.s32.totalorder %s80, %s81
      %p92 = scmp.eq.s32.totalorder %s32, 0
      %p93 = por %p91, %p92
      %p94 = scmp.ne.s32.totalorder %s80, %s81
      %p95 = scmp.eq.s32.totalorder %s33, 2
      %p96 = por %p94, %p95
      %p98 = scmp.ne.s32.totalorder %s81, %s97
      %p99 = scmp.eq.s32.totalorder %s33, 0
      %p100 = por %p98, %p99
      %s101 = ssub.s32 2, %s35
      %s102 = ssub.s32 2, %s42
      %s103 = ssub.s32 %s101, %s102
      %s104 = ssub.s32 %s34, %s46
      %s105 = sor.u32 %s103, %s104
      %p106 = scmp.eq.s32.totalorder %s105, 0
      %s108 = sadd.s32 %s107, 1
      %s109 = scalar_select %p106, %s107, %s108
      %p112 = pneg %p106
      %p113 = scmp.eq.s32.totalorder %s27, 2
      %p114 = por %p112, %p113
      %p115 = scmp.ne.s32.totalorder %s107, %s110
      %p116 = scmp.eq.s32.totalorder %s27, 0
      %p117 = por %p115, %p116
      %p118 = scmp.ne.s32.totalorder %s107, %s110
      %p119 = scmp.eq.s32.totalorder %s32, 2
      %p120 = por %p118, %p119
      %p121 = scmp.ne.s32.totalorder %s110, %s111
      %p122 = scmp.eq.s32.totalorder %s32, 0
      %p123 = por %p121, %p122
      %p124 = scmp.ne.s32.totalorder %s110, %s111
      %p125 = scmp.eq.s32.totalorder %s33, 2
      %p126 = por %p124, %p125
      %p128 = scmp.ne.s32.totalorder %s111, %s127
      %p129 = scmp.eq.s32.totalorder %s33, 0
      %p130 = por %p128, %p129
      %s132 = sadd.s32 %s131, 1
      %p135 = scmp.eq.s32.totalorder %s27, 2
      %p136 = scmp.ne.s32.totalorder %s131, %s133
      %p137 = scmp.eq.s32.totalorder %s27, 0
      %p138 = por %p136, %p137
      %p139 = scmp.ne.s32.totalorder %s131, %s133
      %p140 = scmp.eq.s32.totalorder %s32, 2
      %p141 = por %p139, %p140
      %p142 = scmp.ne.s32.totalorder %s133, %s134
      %p143 = scmp.eq.s32.totalorder %s32, 0
      %p144 = por %p142, %p143
      %p145 = scmp.ne.s32.totalorder %s133, %s134
      %p146 = scmp.eq.s32.totalorder %s33, 2
      %p147 = por %p145, %p146
      %p149 = scmp.ne.s32.totalorder %s134, %s148
      %p150 = scmp.eq.s32.totalorder %s33, 0
      %p151 = por %p149, %p150
      %s153 = sadd.s32 %s152, 1
      %p156 = scmp.eq.s32.totalorder %s27, 2
      %p157 = scmp.ne.s32.totalorder %s152, %s154
      %p158 = scmp.eq.s32.totalorder %s27, 0
      %p159 = por %p157, %p158
      %p160 = scmp.ne.s32.totalorder %s152, %s154
      %p161 = scmp.eq.s32.totalorder %s32, 2
      %p162 = por %p160, %p161
      %p163 = scmp.ne.s32.totalorder %s154, %s155
      %p164 = scmp.eq.s32.totalorder %s32, 0
      %p165 = por %p163, %p164
      %p166 = scmp.ne.s32.totalorder %s154, %s155
      %p167 = scmp.eq.s32.totalorder %s33, 2
      %p168 = por %p166, %p167
      %p170 = scmp.ne.s32.totalorder %s155, %s169
      %p171 = scmp.eq.s32.totalorder %s33, 0
      %p172 = por %p170, %p171
      %s174 = sadd.s32 %s173, 1
      %p177 = scmp.eq.s32.totalorder %s27, 2
      %p178 = scmp.ne.s32.totalorder %s173, %s175
      %p179 = scmp.eq.s32.totalorder %s27, 0
      %p180 = por %p178, %p179
      %p181 = scmp.ne.s32.totalorder %s173, %s175
      %p182 = scmp.eq.s32.totalorder %s32, 2
      %p183 = por %p181, %p182
      %p184 = scmp.ne.s32.totalorder %s175, %s176
      %p185 = scmp.eq.s32.totalorder %s32, 0
      %p186 = por %p184, %p185
      %p187 = scmp.ne.s32.totalorder %s175, %s176
      %p188 = scmp.eq.s32.totalorder %s33, 2
      %p189 = por %p187, %p188
      %p191 = scmp.ne.s32.totalorder %s176, %s190
      %p192 = scmp.eq.s32.totalorder %s33, 0
      %p193 = por %p191, %p192
      %s194 = ssub.s32 %s35, %s42
      %s195 = ssub.s32 %s34, %s46
      %s196 = sor.u32 %s194, %s195
      %p197 = scmp.eq.s32.totalorder %s196, 0
      %s199 = sadd.s32 %s198, 1
      %s200 = scalar_select %p197, %s198, %s199
      %p203 = pneg %p197
      %p204 = scmp.eq.s32.totalorder %s27, 2
      %p205 = por %p203, %p204
      %p206 = scmp.ne.s32.totalorder %s198, %s201
      %p207 = scmp.eq.s32.totalorder %s27, 0
      %p208 = por %p206, %p207
      %p209 = scmp.ne.s32.totalorder %s198, %s201
      %p210 = scmp.eq.s32.totalorder %s32, 2
      %p211 = por %p209, %p210
      %p212 = scmp.ne.s32.totalorder %s201, %s202
      %p213 = scmp.eq.s32.totalorder %s32, 0
      %p214 = por %p212, %p213
      %p215 = scmp.ne.s32.totalorder %s201, %s202
      %p216 = scmp.eq.s32.totalorder %s33, 2
      %p217 = por %p215, %p216
      %p219 = scmp.ne.s32.totalorder %s202, %s218
      %p220 = scmp.eq.s32.totalorder %s33, 0
      %p221 = por %p219, %p220
      %s222 = ssub.s32 2, %s35
      %s223 = ssub.s32 2, %s42
      %s224 = ssub.s32 %s222, %s223
      %s225 = ssub.s32 %s34, %s46
      %s226 = sor.u32 %s224, %s225
      %p227 = scmp.eq.s32.totalorder %s226, 0
      %s229 = sadd.s32 %s228, 1
      %s230 = scalar_select %p227, %s228, %s229
      %p233 = pneg %p227
      %p234 = scmp.eq.s32.totalorder %s27, 2
      %p235 = por %p233, %p234
      %p236 = scmp.ne.s32.totalorder %s228, %s231
      %p237 = scmp.eq.s32.totalorder %s27, 0
      %p238 = por %p236, %p237
      %p239 = scmp.ne.s32.totalorder %s228, %s231
      %p240 = scmp.eq.s32.totalorder %s32, 2
      %p241 = por %p239, %p240
      %p242 = scmp.ne.s32.totalorder %s231, %s232
      %p243 = scmp.eq.s32.totalorder %s32, 0
      %p244 = por %p242, %p243
      %p245 = scmp.ne.s32.totalorder %s231, %s232
      %p246 = scmp.eq.s32.totalorder %s33, 2
      %p247 = por %p245, %p246
      %p249 = scmp.ne.s32.totalorder %s232, %s248
      %p250 = scmp.eq.s32.totalorder %s33, 0
      %p251 = por %p249, %p250
      %s252 = ssub.s32 %s34, %s46
      %p253 = scmp.eq.s32.totalorder %s252, 0
      %s255 = sadd.s32 %s254, 1
      %s256 = scalar_select %p253, %s254, %s255
      %p259 = pneg %p253
      %p260 = scmp.eq.s32.totalorder %s27, 2
      %p261 = por %p259, %p260
      %p262 = scmp.ne.s32.totalorder %s254, %s257
      %p263 = scmp.eq.s32.totalorder %s27, 0
      %p264 = por %p262, %p263
      %p265 = scmp.ne.s32.totalorder %s254, %s257
      %p266 = scmp.eq.s32.totalorder %s32, 2
      %p267 = por %p265, %p266
      %p268 = scmp.ne.s32.totalorder %s257, %s258
      %p269 = scmp.eq.s32.totalorder %s32, 0
      %p270 = por %p268, %p269
      %p271 = scmp.ne.s32.totalorder %s257, %s258
      %p272 = scmp.eq.s32.totalorder %s33, 2
      %p273 = por %p271, %p272
      %p275 = scmp.ne.s32.totalorder %s258, %s274
      %p276 = scmp.eq.s32.totalorder %s33, 0
      %p277 = por %p275, %p276
      %p278 = scmp.le.s32.totalorder 1, %s27
      %p279 = scmp.lt.s32.totalorder %s27, 4
      %p280 = pnand %p278, %p279
      %p281 = pneg %p280
      // Predicated region
      $region9: #{tpu_custom_call.1} parent=5 // pred_check
        _
      $region10: #{tpu_custom_call.1} parent=5 // pred_check_branch
        %283 = sbr.rel (%p280) target = $region12
      $region11: #{tpu_custom_call.1} parent=5 // pred_region
        %s284 = ssub.s32 %s27, 1
        // Predicated region
        $region13: #{tpu_custom_call.1} parent=11 // pred_check
          %p285 = pneg %p65
        $region14: #{tpu_custom_call.1} parent=11 // pred_check_branch
          %287 = sbr.rel (%p285) target = $region16
        $region15: #{tpu_custom_call.1} parent=11 // pred_region
          %p288 = scmp.lt.s32.totalorder %s36, 0
          %s289 = scalar_select %p288, %s36, 0
          %s290 = smul.addr %s289, 8
          %s291 = scalar_lea.vmem %s0, %s290
        $region16: #{tpu_custom_call.1} parent=11 // pred_fallthru
          _
        // Predicated region
        $region17: #{tpu_custom_call.1} parent=11 // pred_check
          %p292 = pneg %p144
        $region18: #{tpu_custom_call.1} parent=11 // pred_check_branch
          %294 = sbr.rel (%p292) target = $region20
        $region19: #{tpu_custom_call.1} parent=11 // pred_region
          %s296 = ssub.s32 256, 256
          %297 = vsyncadd [#allocation8], %s296
          %s298 = sshll.u32 [#allocation9], 4
          %s299 = int_to_ptr.vmem [resolvable:$true] %s298
          %304 = dma.hbm_to_vmem [thread:$0]  %s3, 256, %s299, [#allocation8], 128, 128, 8
        $region20: #{tpu_custom_call.1} parent=11 // pred_fallthru
          _
        // Predicated region
        $region21: #{tpu_custom_call.1} parent=11 // pred_check
          %p305 = pneg %p165
        $region22: #{tpu_custom_call.1} parent=11 // pred_check_branch
          %307 = sbr.rel (%p305) target = $region24
        $region23: #{tpu_custom_call.1} parent=11 // pred_region
          _
        $region24: #{tpu_custom_call.1} parent=11 // pred_fallthru
          _
        // Predicated region
        $region25: #{tpu_custom_call.1} parent=11 // pred_check
          %p308 = pneg %p186
        $region26: #{tpu_custom_call.1} parent=11 // pred_check_branch
          %310 = sbr.rel (%p308) target = $region28
        $region27: #{tpu_custom_call.1} parent=11 // pred_region
          _
        $region28: #{tpu_custom_call.1} parent=11 // pred_fallthru
          _
      $region12: #{tpu_custom_call.1} parent=5 // pred_fallthru
        _
      %p311 = scmp.lt.s32.totalorder %s27, 3
      // Predicated region
      $region29: #{tpu_custom_call.1} parent=5 // pred_check
        %p312 = pneg %p311
      $region30: #{tpu_custom_call.1} parent=5 // pred_check_branch
        %314 = sbr.rel (%p312) target = $region32
      $region31: #{tpu_custom_call.1} parent=5 // pred_region
        // Predicated region
        $region33: #{tpu_custom_call.1} parent=31 // pred_check
          %p315 = pneg %p87
        $region34: #{tpu_custom_call.1} parent=31 // pred_check_branch
          %317 = sbr.rel (%p315) target = $region36
        $region35: #{tpu_custom_call.1} parent=31 // pred_region
          %s318 = sand.u32 %s77, 1
          %s319 = scalar_lea.sflag [#allocation5], %s318
          %s320 = sand.u32 %s77, 1
          %s321 = smul.addr %s320, 24
          %s322 = scalar_lea.vmem [#allocation4], %s321
          %s323 = smul.u32 3, %s35
          %s325 = ssub.s32 384, 384
          %326 = vsyncadd %s319, %s325
          %s327 = sadd.s32 %s34, %s323
          %s328 = smul.addr %s327, 128
          %s329 = scalar_lea.hbm %s1, %s328
          %s330 = sshll.u32 %s322, 4
          %s331 = int_to_ptr.vmem [resolvable:$true] %s330
          %336 = dma.hbm_to_vmem [thread:$0]  %s329, 384, %s331, %s319, 128, 128, 8
        $region36: #{tpu_custom_call.1} parent=31 // pred_fallthru
          _
        // Predicated region
        $region37: #{tpu_custom_call.1} parent=31 // pred_check
          %p337 = pneg %p117
        $region38: #{tpu_custom_call.1} parent=31 // pred_check_branch
          %339 = sbr.rel (%p337) target = $region40
        $region39: #{tpu_custom_call.1} parent=31 // pred_region
          %s340 = sand.u32 %s27, 1
          %s341 = scalar_lea.sflag [#allocation8], %s340
          %s342 = sand.u32 %s107, 1
          %s343 = smul.addr %s342, 24
          %s344 = scalar_lea.vmem [#allocation7], %s343
          %s345 = ssub.s32 2, %s35
          %s346 = smul.u32 3, %s345
          %s348 = ssub.s32 384, 384
          %349 = vsyncadd %s341, %s348
          %s350 = sadd.s32 %s34, %s346
          %s351 = smul.addr %s350, 128
          %s352 = scalar_lea.hbm %s2, %s351
          %s353 = sshll.u32 %s344, 4
          %s354 = int_to_ptr.vmem [resolvable:$true] %s353
          %359 = dma.hbm_to_vmem [thread:$0]  %s352, 384, %s354, %s341, 128, 128, 8
        $region40: #{tpu_custom_call.1} parent=31 // pred_fallthru
          _
      $region32: #{tpu_custom_call.1} parent=5 // pred_fallthru
        _
      %p360 = scmp.le.s32.totalorder 1, %s27
      %p361 = scmp.lt.s32.totalorder %s27, 4
      %p362 = pnand %p360, %p361
      %p363 = pneg %p362
      // Predicated region
      $region41: #{tpu_custom_call.1} parent=5 // pred_check
        _
      $region42: #{tpu_custom_call.1} parent=5 // pred_check_branch
        %365 = sbr.rel (%p362) target = $region44
      $region43: #{tpu_custom_call.1} parent=5 // pred_region
        %s366 = ssub.s32 %s27, 1
        %s367 = sand.u32 %s80, 1
        %s368 = scalar_lea.sflag [#allocation5], %s367
        %s369 = sand.u32 %s80, 1
        %s370 = smul.addr %s369, 24
        %s371 = scalar_lea.vmem [#allocation4], %s370
        // Predicated region
        $region45: #{tpu_custom_call.1} parent=43 // pred_check
          %p372 = pneg %p93
        $region46: #{tpu_custom_call.1} parent=43 // pred_check_branch
          %374 = sbr.rel (%p372) target = $region48
        $region47: #{tpu_custom_call.1} parent=43 // pred_region
          %375 = dma.done %s368, 384
        $region48: #{tpu_custom_call.1} parent=43 // pred_fallthru
          _
        %s376 = sand.u32 %s32, 1
        %s377 = scalar_lea.sflag [#allocation8], %s376
        %s378 = sand.u32 %s110, 1
        %s379 = smul.addr %s378, 24
        %s380 = scalar_lea.vmem [#allocation7], %s379
        // Predicated region
        $region49: #{tpu_custom_call.1} parent=43 // pred_check
          %p381 = pneg %p123
        $region50: #{tpu_custom_call.1} parent=43 // pred_check_branch
          %383 = sbr.rel (%p381) target = $region52
        $region51: #{tpu_custom_call.1} parent=43 // pred_region
          %384 = dma.done %s377, 384
        $region52: #{tpu_custom_call.1} parent=43 // pred_fallthru
          _
        // Predicated region
        $region53: #{tpu_custom_call.1} parent=43 // pred_check
          %p385 = pneg %p144
        $region54: #{tpu_custom_call.1} parent=43 // pred_check_branch
          %387 = sbr.rel (%p385) target = $region56
        $region55: #{tpu_custom_call.1} parent=43 // pred_region
          %388 = dma.done [#allocation8], 256
        $region56: #{tpu_custom_call.1} parent=43 // pred_fallthru
          _
        %p389 = scmp.lt.s32.totalorder %s36, 0
        %s390 = scalar_select %p389, %s36, 0
        %s391 = smul.addr %s390, 8
        %s392 = scalar_lea.vmem %s0, %s391
        %p393 = pneg %p65
        %p394 = pneg %p62
        %s395 = sand.u32 %s80, 1
        %s396 = scalar_lea.sflag [#allocation5], %s395
        %s397 = sand.u32 %s80, 1
        %s398 = smul.addr %s397, 24
        %s399 = scalar_lea.vmem [#allocation4], %s398
        %p400 = pneg %p93
        %p401 = pneg %p90
        %s402 = sand.u32 %s32, 1
        %s403 = scalar_lea.sflag [#allocation8], %s402
        %s404 = sand.u32 %s110, 1
        %s405 = smul.addr %s404, 24
        %s406 = scalar_lea.vmem [#allocation7], %s405
        %p407 = pneg %p123
        %p408 = pneg %p120
        %p409 = pneg %p144
        %p410 = pneg %p141
        %p411 = pneg %p165
        %p412 = pneg %p162
        %p413 = pneg %p186
        %p414 = pneg %p183
        %p415 = pneg %p214
        %p416 = pneg %p211
        %s417 = sand.u32 %s201, 1
        %s418 = scalar_lea.sflag [#allocation6], %s417
        %s419 = sand.u32 %s201, 1
        %s420 = smul.addr %s419, 24
        %s421 = scalar_lea.vmem [#allocation10], %s420
        %p422 = pneg %p244
        %p423 = pneg %p241
        %s424 = sand.u32 %s32, 1
        %s425 = scalar_lea.sflag [#allocation12], %s424
        %s426 = sand.u32 %s231, 1
        %s427 = smul.addr %s426, 24
        %s428 = scalar_lea.vmem [#allocation11], %s427
        %p429 = pneg %p270
        %p430 = pneg %p267
        %p431 = scmp.lt.s32.totalorder %s36, 0
        %s432 = scalar_select %p431, %s36, 0
        %s433 = smul.addr %s432, 8
        %s434 = scalar_lea.vmem %s0, %s433
        %s435 = smul.u32 3, %s37
        %s436 = ssub.s32 2, %s37
        %s437 = smul.u32 3, %s436
        %s438 = smul.u32 3, %s37
        %s439 = ssub.s32 2, %s37
        %s440 = smul.u32 3, %s439
        %p441 = scmp.eq.s32.totalorder %s37, 0
        // Predicated region
        $region57: #{tpu_custom_call.1} parent=43 // pred_check
          %p442 = pneg %p441
        $region58: #{tpu_custom_call.1} parent=43 // pred_check_branch
          %444 = sbr.rel (%p442) target = $region60
        $region59: #{tpu_custom_call.1} parent=43 // pred_region
          %vm445 = vcmask 130048
          %446 = vst.msk [vmem:[#allocation2] sm:$0xff] %vm445, 0.0
          %447 = vst.msk [vmem:[#allocation3] sm:$0xff] %vm445, 0.0
        $region60: #{tpu_custom_call.1} parent=43 // pred_fallthru
          _
        %v448 = vld [vmem:[%s434] sm:$0xff]
        %v449 = vld [vmem:[#allocation9] sm:$0xff]
        %v450 = vld [vmem:[#allocation9 + $0x8] sm:$0xff]
        %v451 = vld [vmem:[%s4] sm:$0xff]
        %v452 = vld [vmem:[%s4 + $0x8] sm:$0xff]
        %v453 = vld [vmem:[%s5] sm:$0x1]
        %s454 = smul.u32 %s37, 3
        %v455 = vld [vmem:[#allocation2] sm:$0xff]
        %v456 = vld [vmem:[#allocation3] sm:$0xff]
        %s457 = ssub.s32 8, %s454
        %v458 = vld [vmem:[%s371] sm:$0xff]
        %s459 = scalar_lea.vmem %s380, 16 [#allocation7]
        %v460 = vld [vmem:[%s459] sm:$0xff]
        %vm461 = vcmask 130048
        %v463 = vsel %vm461, %v455, 0
        %465 = vmatprep.subr.mxu0 0.0
        %466 = vmatpush1.msra.mxu0 0.0
        %467 = vmatprep.subr.mxu0 0.0
        %468 = vmatpush1.msra.mxu0 0.0
        %469 = vmatprep.subr.mxu0 0.0
        %470 = vmatpush1.msra.mxu0 0.0
        %471 = vmatprep.subr.mxu0 0.0
        %472 = vmatpush1.msra.mxu0 0.0
        %473 = vmatprep.subr.mxu0 0.0
        %474 = vmatpush1.msra.mxu0 0.0
        %475 = vmatprep.subr.mxu0 0.0
        %476 = vmatpush1.msra.mxu0 0.0
        %477 = vmatprep.subr.mxu0 0.0
        %478 = vmatpush1.msra.mxu0 0.0
        %479 = vmatprep.subr.mxu0 0.0
        %480 = vmatpush1.msra.mxu0 0.0
        %481 = vmatprep.subr.mxu0 0.0
        %482 = vmatpush1.msra.mxu0 0.0
        %483 = vmatprep.subr.mxu0 0.0
        %484 = vmatpush1.msra.mxu0 0.0
        %485 = vmatprep.subr.mxu0 0.0
        %486 = vmatpush1.msra.mxu0 0.0
        %487 = vmatprep.subr.mxu0 0.0
        %488 = vmatpush1.msra.mxu0 0.0
        %489 = vmatprep.subr.mxu0 0.0
        %490 = vmatpush1.msra.mxu0 0.0
        %491 = vmatprep.subr.mxu0 0.0
        %492 = vmatpush1.msra.mxu0 0.0
        %493 = vmatprep.subr.mxu0 0.0
        %v494 = vand.u32 %v450, 4294901760
        %495 = vmatpush1.msra.mxu0 %v494
        %496 = vmatprep.subr.mxu0 0.0
        %v497 = vand.u32 %v449, 4294901760
        %498 = vmatpush1.msra.mxu0 %v497
        %499 = vmatprep.subr.mxu0 0.0
        %500 = vmatpush2.msra.mxu0 0.0
        %501 = vmatprep.subr.mxu0 0.0
        %502 = vmatpush2.msra.mxu0 0.0
        %503 = vmatprep.subr.mxu0 0.0
        %504 = vmatpush2.msra.mxu0 0.0
        %505 = vmatprep.subr.mxu0 0.0
        %506 = vmatpush2.msra.mxu0 0.0
        %507 = vmatprep.subr.mxu0 0.0
        %508 = vmatpush2.msra.mxu0 0.0
        %509 = vmatprep.subr.mxu0 0.0
        %510 = vmatpush2.msra.mxu0 0.0
        %511 = vmatprep.subr.mxu0 0.0
        %512 = vmatpush2.msra.mxu0 0.0
        %513 = vmatprep.subr.mxu0 0.0
        %514 = vmatpush2.msra.mxu0 0.0
        %515 = vmatprep.subr.mxu0 0.0
        %516 = vmatpush2.msra.mxu0 0.0
        %517 = vmatprep.subr.mxu0 0.0
        %518 = vmatpush2.msra.mxu0 0.0
        %519 = vmatprep.subr.mxu0 0.0
        %520 = vmatpush2.msra.mxu0 0.0
        %521 = vmatprep.subr.mxu0 0.0
        %522 = vmatpush2.msra.mxu0 0.0
        %523 = vmatprep.subr.mxu0 0.0
        %524 = vmatpush2.msra.mxu0 0.0
        %525 = vmatprep.subr.mxu0 0.0
        %526 = vmatpush2.msra.mxu0 0.0
        %527 = vmatprep.subr.mxu0 0.0
        %528 = vmatpush2.msra.mxu0 0.0
        %529 = vmatprep.subr.mxu0 0.0
        %530 = vmatpush2.msra.mxu0 0.0
        %531 = vmatprep.mubr.f32.mxu0 0.0
        %v532 = vand.u32 %v463, 4294901760
        %v533 = vsub.f32 %v463, %v532
        %v534 = vand.u32 %v533, 4294901760
        %v535 = vsub.f32 %v533, %v534
        %v536 = vand.u32 %v535, 4294901760
        %537 = vmatmul.mubr.f32.gmra.mxu0 %v536
        %v538 = vpop.f32.mrf.mxu0
        %v539 = vadd.f32 0.0, %v538
        %v540 = vpop.f32.mrf.mxu0
        %541 = vdwg.mxu0
        %542 = vmatprep.subr.mxu0 0.0
        %543 = vmatpush1.msra.mxu0 0.0
        %544 = vmatprep.subr.mxu0 0.0
        %545 = vmatpush1.msra.mxu0 0.0
        %546 = vmatprep.subr.mxu0 0.0
        %547 = vmatpush1.msra.mxu0 0.0
        %548 = vmatprep.subr.mxu0 0.0
        %549 = vmatpush1.msra.mxu0 0.0
        %550 = vmatprep.subr.mxu0 0.0
        %551 = vmatpush1.msra.mxu0 0.0
        %552 = vmatprep.subr.mxu0 0.0
        %553 = vmatpush1.msra.mxu0 0.0
        %554 = vmatprep.subr.mxu0 0.0
        %555 = vmatpush1.msra.mxu0 0.0
        %556 = vmatprep.subr.mxu0 0.0
        %557 = vmatpush1.msra.mxu0 0.0
        %558 = vmatprep.subr.mxu0 0.0
        %559 = vmatpush1.msra.mxu0 0.0
        %560 = vmatprep.subr.mxu0 0.0
        %561 = vmatpush1.msra.mxu0 0.0
        %562 = vmatprep.subr.mxu0 0.0
        %563 = vmatpush1.msra.mxu0 0.0
        %564 = vmatprep.subr.mxu0 0.0
        %565 = vmatpush1.msra.mxu0 0.0
        %566 = vmatprep.subr.mxu0 0.0
        %567 = vmatpush1.msra.mxu0 0.0
        %568 = vmatprep.subr.mxu0 0.0
        %569 = vmatpush1.msra.mxu0 0.0
        %570 = vmatprep.subr.mxu0 0.0
        %v571 = vand.u32 %v450, 4294901760
        %v572 = vsub.f32 %v450, %v571
        %v573 = vand.u32 %v572, 4294901760
        %v574 = vsub.f32 %v572, %v573
        %v575 = vand.u32 %v574, 4294901760
        %576 = vmatpush1.msra.mxu0 %v575
        %577 = vmatprep.subr.mxu0 0.0
        %v578 = vand.u32 %v449, 4294901760
        %v579 = vsub.f32 %v449, %v578
        %v580 = vand.u32 %v579, 4294901760
        %v581 = vsub.f32 %v579, %v580
        %v582 = vand.u32 %v581, 4294901760
        %583 = vmatpush1.msra.mxu0 %v582
        %584 = vmatprep.subr.mxu0 0.0
        %585 = vmatpush2.msra.mxu0 0.0
        %586 = vmatprep.subr.mxu0 0.0
        %587 = vmatpush2.msra.mxu0 0.0
        %588 = vmatprep.subr.mxu0 0.0
        %589 = vmatpush2.msra.mxu0 0.0
        %590 = vmatprep.subr.mxu0 0.0
        %591 = vmatpush2.msra.mxu0 0.0
        %592 = vmatprep.subr.mxu0 0.0
        %593 = vmatpush2.msra.mxu0 0.0
        %594 = vmatprep.subr.mxu0 0.0
        %595 = vmatpush2.msra.mxu0 0.0
        %596 = vmatprep.subr.mxu0 0.0
        %597 = vmatpush2.msra.mxu0 0.0
        %598 = vmatprep.subr.mxu0 0.0
        %599 = vmatpush2.msra.mxu0 0.0
        %600 = vmatprep.subr.mxu0 0.0
        %601 = vmatpush2.msra.mxu0 0.0
        %602 = vmatprep.subr.mxu0 0.0
        %603 = vmatpush2.msra.mxu0 0.0
        %604 = vmatprep.subr.mxu0 0.0
        %605 = vmatpush2.msra.mxu0 0.0
        %606 = vmatprep.subr.mxu0 0.0
        %607 = vmatpush2.msra.mxu0 0.0
        %608 = vmatprep.subr.mxu0 0.0
        %609 = vmatpush2.msra.mxu0 0.0
        %610 = vmatprep.subr.mxu0 0.0
        %611 = vmatpush2.msra.mxu0 0.0
        %612 = vmatprep.subr.mxu0 0.0
        %613 = vmatpush2.msra.mxu0 0.0
        %614 = vmatprep.subr.mxu0 0.0
        %615 = vmatpush2.msra.mxu0 0.0
        %616 = vmatprep.mubr.f32.mxu0 0.0
        %v617 = vand.u32 %v463, 4294901760
        %618 = vmatmul.mubr.f32.gmra.mxu0 %v617
        %v619 = vpop.f32.mrf.mxu0
        %v620 = vadd.f32 %v539, %v619
        %v621 = vpop.f32.mrf.mxu0
        %622 = vdwg.mxu0
        %623 = vmatprep.subr.mxu0 0.0
        %624 = vmatpush1.msra.mxu0 0.0
        %625 = vmatprep.subr.mxu0 0.0
        %626 = vmatpush1.msra.mxu0 0.0
        %627 = vmatprep.subr.mxu0 0.0
        %628 = vmatpush1.msra.mxu0 0.0
        %629 = vmatprep.subr.mxu0 0.0
        %630 = vmatpush1.msra.mxu0 0.0
        %631 = vmatprep.subr.mxu0 0.0
        %632 = vmatpush1.msra.mxu0 0.0
        %633 = vmatprep.subr.mxu0 0.0
        %634 = vmatpush1.msra.mxu0 0.0
        %635 = vmatprep.subr.mxu0 0.0
        %636 = vmatpush1.msra.mxu0 0.0
        %637 = vmatprep.subr.mxu0 0.0
        %638 = vmatpush1.msra.mxu0 0.0
        %639 = vmatprep.subr.mxu0 0.0
        %640 = vmatpush1.msra.mxu0 0.0
        %641 = vmatprep.subr.mxu0 0.0
        %642 = vmatpush1.msra.mxu0 0.0
        %643 = vmatprep.subr.mxu0 0.0
        %644 = vmatpush1.msra.mxu0 0.0
        %645 = vmatprep.subr.mxu0 0.0
        %646 = vmatpush1.msra.mxu0 0.0
        %647 = vmatprep.subr.mxu0 0.0
        %648 = vmatpush1.msra.mxu0 0.0
        %649 = vmatprep.subr.mxu0 0.0
        %650 = vmatpush1.msra.mxu0 0.0
        %651 = vmatprep.subr.mxu0 0.0
        %v652 = vand.u32 %v450, 4294901760
        %v653 = vsub.f32 %v450, %v652
        %654 = vmatpush1.msra.mxu0 %v653
        %655 = vmatprep.subr.mxu0 0.0
        %v656 = vand.u32 %v449, 4294901760
        %v657 = vsub.f32 %v449, %v656
        %658 = vmatpush1.msra.mxu0 %v657
        %659 = vmatprep.subr.mxu0 0.0
        %660 = vmatpush2.msra.mxu0 0.0
        %661 = vmatprep.subr.mxu0 0.0
        %662 = vmatpush2.msra.mxu0 0.0
        %663 = vmatprep.subr.mxu0 0.0
        %664 = vmatpush2.msra.mxu0 0.0
        %665 = vmatprep.subr.mxu0 0.0
        %666 = vmatpush2.msra.mxu0 0.0
        %667 = vmatprep.subr.mxu0 0.0
        %668 = vmatpush2.msra.mxu0 0.0
        %669 = vmatprep.subr.mxu0 0.0
        %670 = vmatpush2.msra.mxu0 0.0
        %671 = vmatprep.subr.mxu0 0.0
        %672 = vmatpush2.msra.mxu0 0.0
        %673 = vmatprep.subr.mxu0 0.0
        %674 = vmatpush2.msra.mxu0 0.0
        %675 = vmatprep.subr.mxu0 0.0
        %676 = vmatpush2.msra.mxu0 0.0
        %677 = vmatprep.subr.mxu0 0.0
        %678 = vmatpush2.msra.mxu0 0.0
        %679 = vmatprep.subr.mxu0 0.0
        %680 = vmatpush2.msra.mxu0 0.0
        %681 = vmatprep.subr.mxu0 0.0
        %682 = vmatpush2.msra.mxu0 0.0
        %683 = vmatprep.subr.mxu0 0.0
        %684 = vmatpush2.msra.mxu0 0.0
        %685 = vmatprep.subr.mxu0 0.0
        %686 = vmatpush2.msra.mxu0 0.0
        %687 = vmatprep.subr.mxu0 0.0
        %688 = vmatpush2.msra.mxu0 0.0
        %689 = vmatprep.subr.mxu0 0.0
        %690 = vmatpush2.msra.mxu0 0.0
        %691 = vmatprep.mubr.f32.mxu0 0.0
        %v692 = vand.u32 %v463, 4294901760
        %v693 = vsub.f32 %v463, %v692
        %694 = vmatmul.mubr.f32.gmra.mxu0 %v693
        %v695 = vpop.f32.mrf.mxu0
        %v696 = vadd.f32 %v620, %v695
        %v697 = vpop.f32.mrf.mxu0
        %698 = vdwg.mxu0
        %699 = vmatprep.subr.mxu0 0.0
        %700 = vmatpush1.msra.mxu0 0.0
        %701 = vmatprep.subr.mxu0 0.0
        %702 = vmatpush1.msra.mxu0 0.0
        %703 = vmatprep.subr.mxu0 0.0
        %704 = vmatpush1.msra.mxu0 0.0
        %705 = vmatprep.subr.mxu0 0.0
        %706 = vmatpush1.msra.mxu0 0.0
        %707 = vmatprep.subr.mxu0 0.0
        %708 = vmatpush1.msra.mxu0 0.0
        %709 = vmatprep.subr.mxu0 0.0
        %710 = vmatpush1.msra.mxu0 0.0
        %711 = vmatprep.subr.mxu0 0.0
        %712 = vmatpush1.msra.mxu0 0.0
        %713 = vmatprep.subr.mxu0 0.0
        %714 = vmatpush1.msra.mxu0 0.0
        %715 = vmatprep.subr.mxu0 0.0
        %716 = vmatpush1.msra.mxu0 0.0
        %717 = vmatprep.subr.mxu0 0.0
        %718 = vmatpush1.msra.mxu0 0.0
        %719 = vmatprep.subr.mxu0 0.0
        %720 = vmatpush1.msra.mxu0 0.0
        %721 = vmatprep.subr.mxu0 0.0
        %722 = vmatpush1.msra.mxu0 0.0
        %723 = vmatprep.subr.mxu0 0.0
        %724 = vmatpush1.msra.mxu0 0.0
        %725 = vmatprep.subr.mxu0 0.0
        %726 = vmatpush1.msra.mxu0 0.0
        %727 = vmatprep.subr.mxu0 0.0
        %v728 = vand.u32 %v450, 4294901760
        %729 = vmatpush1.msra.mxu0 %v728
        %730 = vmatprep.subr.mxu0 0.0
        %v731 = vand.u32 %v449, 4294901760
        %732 = vmatpush1.msra.mxu0 %v731
        %733 = vmatprep.subr.mxu0 0.0
        %734 = vmatpush2.msra.mxu0 0.0
        %735 = vmatprep.subr.mxu0 0.0
        %736 = vmatpush2.msra.mxu0 0.0
        %737 = vmatprep.subr.mxu0 0.0
        %738 = vmatpush2.msra.mxu0 0.0
        %739 = vmatprep.subr.mxu0 0.0
        %740 = vmatpush2.msra.mxu0 0.0
        %741 = vmatprep.subr.mxu0 0.0
        %742 = vmatpush2.msra.mxu0 0.0
        %743 = vmatprep.subr.mxu0 0.0
        %744 = vmatpush2.msra.mxu0 0.0
        %745 = vmatprep.subr.mxu0 0.0
        %746 = vmatpush2.msra.mxu0 0.0
        %747 = vmatprep.subr.mxu0 0.0
        %748 = vmatpush2.msra.mxu0 0.0
        %749 = vmatprep.subr.mxu0 0.0
        %750 = vmatpush2.msra.mxu0 0.0
        %751 = vmatprep.subr.mxu0 0.0
        %752 = vmatpush2.msra.mxu0 0.0
        %753 = vmatprep.subr.mxu0 0.0
        %754 = vmatpush2.msra.mxu0 0.0
        %755 = vmatprep.subr.mxu0 0.0
        %756 = vmatpush2.msra.mxu0 0.0
        %757 = vmatprep.subr.mxu0 0.0
        %758 = vmatpush2.msra.mxu0 0.0
        %759 = vmatprep.subr.mxu0 0.0
        %760 = vmatpush2.msra.mxu0 0.0
        %761 = vmatprep.subr.mxu0 0.0
        %762 = vmatpush2.msra.mxu0 0.0
        %763 = vmatprep.subr.mxu0 0.0
        %764 = vmatpush2.msra.mxu0 0.0
        %765 = vmatprep.mubr.f32.mxu0 0.0
        %v766 = vand.u32 %v463, 4294901760
        %v767 = vsub.f32 %v463, %v766
        %v768 = vand.u32 %v767, 4294901760
        %769 = vmatmul.mubr.f32.gmra.mxu0 %v768
        %v770 = vpop.f32.mrf.mxu0
        %v771 = vadd.f32 %v696, %v770
        %v772 = vpop.f32.mrf.mxu0
        %773 = vdwg.mxu0
        %774 = vmatprep.subr.mxu0 0.0
        %775 = vmatpush1.msra.mxu0 0.0
        %776 = vmatprep.subr.mxu0 0.0
        %777 = vmatpush1.msra.mxu0 0.0
        %778 = vmatprep.subr.mxu0 0.0
        %779 = vmatpush1.msra.mxu0 0.0
        %780 = vmatprep.subr.mxu0 0.0
        %781 = vmatpush1.msra.mxu0 0.0
        %782 = vmatprep.subr.mxu0 0.0
        %783 = vmatpush1.msra.mxu0 0.0
        %784 = vmatprep.subr.mxu0 0.0
        %785 = vmatpush1.msra.mxu0 0.0
        %786 = vmatprep.subr.mxu0 0.0
        %787 = vmatpush1.msra.mxu0 0.0
        %788 = vmatprep.subr.mxu0 0.0
        %789 = vmatpush1.msra.mxu0 0.0
        %790 = vmatprep.subr.mxu0 0.0
        %791 = vmatpush1.msra.mxu0 0.0
        %792 = vmatprep.subr.mxu0 0.0
        %793 = vmatpush1.msra.mxu0 0.0
        %794 = vmatprep.subr.mxu0 0.0
        %795 = vmatpush1.msra.mxu0 0.0
        %796 = vmatprep.subr.mxu0 0.0
        %797 = vmatpush1.msra.mxu0 0.0
        %798 = vmatprep.subr.mxu0 0.0
        %799 = vmatpush1.msra.mxu0 0.0
        %800 = vmatprep.subr.mxu0 0.0
        %801 = vmatpush1.msra.mxu0 0.0
        %802 = vmatprep.subr.mxu0 0.0
        %v803 = vand.u32 %v450, 4294901760
        %v804 = vsub.f32 %v450, %v803
        %v805 = vand.u32 %v804, 4294901760
        %806 = vmatpush1.msra.mxu0 %v805
        %807 = vmatprep.subr.mxu0 0.0
        %v808 = vand.u32 %v449, 4294901760
        %v809 = vsub.f32 %v449, %v808
        %v810 = vand.u32 %v809, 4294901760
        %811 = vmatpush1.msra.mxu0 %v810
        %812 = vmatprep.subr.mxu0 0.0
        %813 = vmatpush2.msra.mxu0 0.0
        %814 = vmatprep.subr.mxu0 0.0
        %815 = vmatpush2.msra.mxu0 0.0
        %816 = vmatprep.subr.mxu0 0.0
        %817 = vmatpush2.msra.mxu0 0.0
        %818 = vmatprep.subr.mxu0 0.0
        %819 = vmatpush2.msra.mxu0 0.0
        %820 = vmatprep.subr.mxu0 0.0
        %821 = vmatpush2.msra.mxu0 0.0
        %822 = vmatprep.subr.mxu0 0.0
        %823 = vmatpush2.msra.mxu0 0.0
        %824 = vmatprep.subr.mxu0 0.0
        %825 = vmatpush2.msra.mxu0 0.0
        %826 = vmatprep.subr.mxu0 0.0
        %827 = vmatpush2.msra.mxu0 0.0
        %828 = vmatprep.subr.mxu0 0.0
        %829 = vmatpush2.msra.mxu0 0.0
        %830 = vmatprep.subr.mxu0 0.0
        %831 = vmatpush2.msra.mxu0 0.0
        %832 = vmatprep.subr.mxu0 0.0
        %833 = vmatpush2.msra.mxu0 0.0
        %834 = vmatprep.subr.mxu0 0.0
        %835 = vmatpush2.msra.mxu0 0.0
        %836 = vmatprep.subr.mxu0 0.0
        %837 = vmatpush2.msra.mxu0 0.0
        %838 = vmatprep.subr.mxu0 0.0
        %839 = vmatpush2.msra.mxu0 0.0
        %840 = vmatprep.subr.mxu0 0.0
        %841 = vmatpush2.msra.mxu0 0.0
        %842 = vmatprep.subr.mxu0 0.0
        %843 = vmatpush2.msra.mxu0 0.0
        %844 = vmatprep.mubr.f32.mxu0 0.0
        %v845 = vand.u32 %v463, 4294901760
        %846 = vmatmul.mubr.f32.gmra.mxu0 %v845
        %v847 = vpop.f32.mrf.mxu0
        %v848 = vadd.f32 %v771, %v847
        %v849 = vpop.f32.mrf.mxu0
        %850 = vdwg.mxu0
        %851 = vmatprep.subr.mxu0 0.0
        %852 = vmatpush1.msra.mxu0 0.0
        %853 = vmatprep.subr.mxu0 0.0
        %854 = vmatpush1.msra.mxu0 0.0
        %855 = vmatprep.subr.mxu0 0.0
        %856 = vmatpush1.msra.mxu0 0.0
        %857 = vmatprep.subr.mxu0 0.0
        %858 = vmatpush1.msra.mxu0 0.0
        %859 = vmatprep.subr.mxu0 0.0
        %860 = vmatpush1.msra.mxu0 0.0
        %861 = vmatprep.subr.mxu0 0.0
        %862 = vmatpush1.msra.mxu0 0.0
        %863 = vmatprep.subr.mxu0 0.0
        %864 = vmatpush1.msra.mxu0 0.0
        %865 = vmatprep.subr.mxu0 0.0
        %866 = vmatpush1.msra.mxu0 0.0
        %867 = vmatprep.subr.mxu0 0.0
        %868 = vmatpush1.msra.mxu0 0.0
        %869 = vmatprep.subr.mxu0 0.0
        %870 = vmatpush1.msra.mxu0 0.0
        %871 = vmatprep.subr.mxu0 0.0
        %872 = vmatpush1.msra.mxu0 0.0
        %873 = vmatprep.subr.mxu0 0.0
        %874 = vmatpush1.msra.mxu0 0.0
        %875 = vmatprep.subr.mxu0 0.0
        %876 = vmatpush1.msra.mxu0 0.0
        %877 = vmatprep.subr.mxu0 0.0
        %878 = vmatpush1.msra.mxu0 0.0
        %879 = vmatprep.subr.mxu0 0.0
        %v880 = vand.u32 %v450, 4294901760
        %881 = vmatpush1.msra.mxu0 %v880
        %882 = vmatprep.subr.mxu0 0.0
        %v883 = vand.u32 %v449, 4294901760
        %884 = vmatpush1.msra.mxu0 %v883
        %885 = vmatprep.subr.mxu0 0.0
        %886 = vmatpush2.msra.mxu0 0.0
        %887 = vmatprep.subr.mxu0 0.0
        %888 = vmatpush2.msra.mxu0 0.0
        %889 = vmatprep.subr.mxu0 0.0
        %890 = vmatpush2.msra.mxu0 0.0
        %891 = vmatprep.subr.mxu0 0.0
        %892 = vmatpush2.msra.mxu0 0.0
        %893 = vmatprep.subr.mxu0 0.0
        %894 = vmatpush2.msra.mxu0 0.0
        %895 = vmatprep.subr.mxu0 0.0
        %896 = vmatpush2.msra.mxu0 0.0
        %897 = vmatprep.subr.mxu0 0.0
        %898 = vmatpush2.msra.mxu0 0.0
        %899 = vmatprep.subr.mxu0 0.0
        %900 = vmatpush2.msra.mxu0 0.0
        %901 = vmatprep.subr.mxu0 0.0
        %902 = vmatpush2.msra.mxu0 0.0
        %903 = vmatprep.subr.mxu0 0.0
        %904 = vmatpush2.msra.mxu0 0.0
        %905 = vmatprep.subr.mxu0 0.0
        %906 = vmatpush2.msra.mxu0 0.0
        %907 = vmatprep.subr.mxu0 0.0
        %908 = vmatpush2.msra.mxu0 0.0
        %909 = vmatprep.subr.mxu0 0.0
        %910 = vmatpush2.msra.mxu0 0.0
        %911 = vmatprep.subr.mxu0 0.0
        %912 = vmatpush2.msra.mxu0 0.0
        %913 = vmatprep.subr.mxu0 0.0
        %914 = vmatpush2.msra.mxu0 0.0
        %915 = vmatprep.subr.mxu0 0.0
        %916 = vmatpush2.msra.mxu0 0.0
        %917 = vmatprep.mubr.f32.mxu0 0.0
        %v918 = vand.u32 %v463, 4294901760
        %919 = vmatmul.mubr.f32.gmra.mxu0 %v918
        %v920 = vpop.f32.mrf.mxu0
        %v921 = vadd.f32 %v848, %v920
        %v922 = vpop.f32.mrf.mxu0
        %923 = vdwg.mxu0
        %v925 = vsel %vm461, %v456, 0
        %927 = vmatprep.subr.mxu0 0.0
        %928 = vmatpush1.msra.mxu0 0.0
        %929 = vmatprep.subr.mxu0 0.0
        %930 = vmatpush1.msra.mxu0 0.0
        %931 = vmatprep.subr.mxu0 0.0
        %932 = vmatpush1.msra.mxu0 0.0
        %933 = vmatprep.subr.mxu0 0.0
        %934 = vmatpush1.msra.mxu0 0.0
        %935 = vmatprep.subr.mxu0 0.0
        %936 = vmatpush1.msra.mxu0 0.0
        %937 = vmatprep.subr.mxu0 0.0
        %938 = vmatpush1.msra.mxu0 0.0
        %939 = vmatprep.subr.mxu0 0.0
        %940 = vmatpush1.msra.mxu0 0.0
        %941 = vmatprep.subr.mxu0 0.0
        %942 = vmatpush1.msra.mxu0 0.0
        %943 = vmatprep.subr.mxu0 0.0
        %944 = vmatpush1.msra.mxu0 0.0
        %945 = vmatprep.subr.mxu0 0.0
        %946 = vmatpush1.msra.mxu0 0.0
        %947 = vmatprep.subr.mxu0 0.0
        %948 = vmatpush1.msra.mxu0 0.0
        %949 = vmatprep.subr.mxu0 0.0
        %950 = vmatpush1.msra.mxu0 0.0
        %951 = vmatprep.subr.mxu0 0.0
        %952 = vmatpush1.msra.mxu0 0.0
        %953 = vmatprep.subr.mxu0 0.0
        %954 = vmatpush1.msra.mxu0 0.0
        %955 = vmatprep.subr.mxu0 0.0
        %v956 = vand.u32 %v452, 4294901760
        %957 = vmatpush1.msra.mxu0 %v956
        %958 = vmatprep.subr.mxu0 0.0
        %v959 = vand.u32 %v451, 4294901760
        %960 = vmatpush1.msra.mxu0 %v959
        %961 = vmatprep.subr.mxu0 0.0
        %962 = vmatpush2.msra.mxu0 0.0
        %963 = vmatprep.subr.mxu0 0.0
        %964 = vmatpush2.msra.mxu0 0.0
        %965 = vmatprep.subr.mxu0 0.0
        %966 = vmatpush2.msra.mxu0 0.0
        %967 = vmatprep.subr.mxu0 0.0
        %968 = vmatpush2.msra.mxu0 0.0
        %969 = vmatprep.subr.mxu0 0.0
        %970 = vmatpush2.msra.mxu0 0.0
        %971 = vmatprep.subr.mxu0 0.0
        %972 = vmatpush2.msra.mxu0 0.0
        %973 = vmatprep.subr.mxu0 0.0
        %974 = vmatpush2.msra.mxu0 0.0
        %975 = vmatprep.subr.mxu0 0.0
        %976 = vmatpush2.msra.mxu0 0.0
        %977 = vmatprep.subr.mxu0 0.0
        %978 = vmatpush2.msra.mxu0 0.0
        %979 = vmatprep.subr.mxu0 0.0
        %980 = vmatpush2.msra.mxu0 0.0
        %981 = vmatprep.subr.mxu0 0.0
        %982 = vmatpush2.msra.mxu0 0.0
        %983 = vmatprep.subr.mxu0 0.0
        %984 = vmatpush2.msra.mxu0 0.0
        %985 = vmatprep.subr.mxu0 0.0
        %986 = vmatpush2.msra.mxu0 0.0
        %987 = vmatprep.subr.mxu0 0.0
        %988 = vmatpush2.msra.mxu0 0.0
        %989 = vmatprep.subr.mxu0 0.0
        %990 = vmatpush2.msra.mxu0 0.0
        %991 = vmatprep.subr.mxu0 0.0
        %992 = vmatpush2.msra.mxu0 0.0
        %993 = vmatprep.mubr.f32.mxu0 0.0
        %v994 = vand.u32 %v925, 4294901760
        %v995 = vsub.f32 %v925, %v994
        %v996 = vand.u32 %v995, 4294901760
        %v997 = vsub.f32 %v995, %v996
        %v998 = vand.u32 %v997, 4294901760
        %999 = vmatmul.mubr.f32.gmra.mxu0 %v998
        %v1000 = vpop.f32.mrf.mxu0
        %v1001 = vadd.f32 0.0, %v1000
        %v1002 = vpop.f32.mrf.mxu0
        %1003 = vdwg.mxu0
        %1004 = vmatprep.subr.mxu0 0.0
        %1005 = vmatpush1.msra.mxu0 0.0
        %1006 = vmatprep.subr.mxu0 0.0
        %1007 = vmatpush1.msra.mxu0 0.0
        %1008 = vmatprep.subr.mxu0 0.0
        %1009 = vmatpush1.msra.mxu0 0.0
        %1010 = vmatprep.subr.mxu0 0.0
        %1011 = vmatpush1.msra.mxu0 0.0
        %1012 = vmatprep.subr.mxu0 0.0
        %1013 = vmatpush1.msra.mxu0 0.0
        %1014 = vmatprep.subr.mxu0 0.0
        %1015 = vmatpush1.msra.mxu0 0.0
        %1016 = vmatprep.subr.mxu0 0.0
        %1017 = vmatpush1.msra.mxu0 0.0
        %1018 = vmatprep.subr.mxu0 0.0
        %1019 = vmatpush1.msra.mxu0 0.0
        %1020 = vmatprep.subr.mxu0 0.0
        %1021 = vmatpush1.msra.mxu0 0.0
        %1022 = vmatprep.subr.mxu0 0.0
        %1023 = vmatpush1.msra.mxu0 0.0
        %1024 = vmatprep.subr.mxu0 0.0
        %1025 = vmatpush1.msra.mxu0 0.0
        %1026 = vmatprep.subr.mxu0 0.0
        %1027 = vmatpush1.msra.mxu0 0.0
        %1028 = vmatprep.subr.mxu0 0.0
        %1029 = vmatpush1.msra.mxu0 0.0
        %1030 = vmatprep.subr.mxu0 0.0
        %1031 = vmatpush1.msra.mxu0 0.0
        %1032 = vmatprep.subr.mxu0 0.0
        %v1033 = vand.u32 %v452, 4294901760
        %v1034 = vsub.f32 %v452, %v1033
        %v1035 = vand.u32 %v1034, 4294901760
        %v1036 = vsub.f32 %v1034, %v1035
        %v1037 = vand.u32 %v1036, 4294901760
        %1038 = vmatpush1.msra.mxu0 %v1037
        %1039 = vmatprep.subr.mxu0 0.0
        %v1040 = vand.u32 %v451, 4294901760
        %v1041 = vsub.f32 %v451, %v1040
        %v1042 = vand.u32 %v1041, 4294901760
        %v1043 = vsub.f32 %v1041, %v1042
        %v1044 = vand.u32 %v1043, 4294901760
        %1045 = vmatpush1.msra.mxu0 %v1044
        %1046 = vmatprep.subr.mxu0 0.0
        %1047 = vmatpush2.msra.mxu0 0.0
        %1048 = vmatprep.subr.mxu0 0.0
        %1049 = vmatpush2.msra.mxu0 0.0
        %1050 = vmatprep.subr.mxu0 0.0
        %1051 = vmatpush2.msra.mxu0 0.0
        %1052 = vmatprep.subr.mxu0 0.0
        %1053 = vmatpush2.msra.mxu0 0.0
        %1054 = vmatprep.subr.mxu0 0.0
        %1055 = vmatpush2.msra.mxu0 0.0
        %1056 = vmatprep.subr.mxu0 0.0
        %1057 = vmatpush2.msra.mxu0 0.0
        %1058 = vmatprep.subr.mxu0 0.0
        %1059 = vmatpush2.msra.mxu0 0.0
        %1060 = vmatprep.subr.mxu0 0.0
        %1061 = vmatpush2.msra.mxu0 0.0
        %1062 = vmatprep.subr.mxu0 0.0
        %1063 = vmatpush2.msra.mxu0 0.0
        %1064 = vmatprep.subr.mxu0 0.0
        %1065 = vmatpush2.msra.mxu0 0.0
        %1066 = vmatprep.subr.mxu0 0.0
        %1067 = vmatpush2.msra.mxu0 0.0
        %1068 = vmatprep.subr.mxu0 0.0
        %1069 = vmatpush2.msra.mxu0 0.0
        %1070 = vmatprep.subr.mxu0 0.0
        %1071 = vmatpush2.msra.mxu0 0.0
        %1072 = vmatprep.subr.mxu0 0.0
        %1073 = vmatpush2.msra.mxu0 0.0
        %1074 = vmatprep.subr.mxu0 0.0
        %1075 = vmatpush2.msra.mxu0 0.0
        %1076 = vmatprep.subr.mxu0 0.0
        %1077 = vmatpush2.msra.mxu0 0.0
        %1078 = vmatprep.mubr.f32.mxu0 0.0
        %v1079 = vand.u32 %v925, 4294901760
        %1080 = vmatmul.mubr.f32.gmra.mxu0 %v1079
        %v1081 = vpop.f32.mrf.mxu0
        %v1082 = vadd.f32 %v1001, %v1081
        %v1083 = vpop.f32.mrf.mxu0
        %1084 = vdwg.mxu0
        %1085 = vmatprep.subr.mxu0 0.0
        %1086 = vmatpush1.msra.mxu0 0.0
        %1087 = vmatprep.subr.mxu0 0.0
        %1088 = vmatpush1.msra.mxu0 0.0
        %1089 = vmatprep.subr.mxu0 0.0
        %1090 = vmatpush1.msra.mxu0 0.0
        %1091 = vmatprep.subr.mxu0 0.0
        %1092 = vmatpush1.msra.mxu0 0.0
        %1093 = vmatprep.subr.mxu0 0.0
        %1094 = vmatpush1.msra.mxu0 0.0
        %1095 = vmatprep.subr.mxu0 0.0
        %1096 = vmatpush1.msra.mxu0 0.0
        %1097 = vmatprep.subr.mxu0 0.0
        %1098 = vmatpush1.msra.mxu0 0.0
        %1099 = vmatprep.subr.mxu0 0.0
        %1100 = vmatpush1.msra.mxu0 0.0
        %1101 = vmatprep.subr.mxu0 0.0
        %1102 = vmatpush1.msra.mxu0 0.0
        %1103 = vmatprep.subr.mxu0 0.0
        %1104 = vmatpush1.msra.mxu0 0.0
        %1105 = vmatprep.subr.mxu0 0.0
        %1106 = vmatpush1.msra.mxu0 0.0
        %1107 = vmatprep.subr.mxu0 0.0
        %1108 = vmatpush1.msra.mxu0 0.0
        %1109 = vmatprep.subr.mxu0 0.0
        %1110 = vmatpush1.msra.mxu0 0.0
        %1111 = vmatprep.subr.mxu0 0.0
        %1112 = vmatpush1.msra.mxu0 0.0
        %1113 = vmatprep.subr.mxu0 0.0
        %v1114 = vand.u32 %v452, 4294901760
        %v1115 = vsub.f32 %v452, %v1114
        %1116 = vmatpush1.msra.mxu0 %v1115
        %1117 = vmatprep.subr.mxu0 0.0
        %v1118 = vand.u32 %v451, 4294901760
        %v1119 = vsub.f32 %v451, %v1118
        %1120 = vmatpush1.msra.mxu0 %v1119
        %1121 = vmatprep.subr.mxu0 0.0
        %1122 = vmatpush2.msra.mxu0 0.0
        %1123 = vmatprep.subr.mxu0 0.0
        %1124 = vmatpush2.msra.mxu0 0.0
        %1125 = vmatprep.subr.mxu0 0.0
        %1126 = vmatpush2.msra.mxu0 0.0
        %1127 = vmatprep.subr.mxu0 0.0
        %1128 = vmatpush2.msra.mxu0 0.0
        %1129 = vmatprep.subr.mxu0 0.0
        %1130 = vmatpush2.msra.mxu0 0.0
        %1131 = vmatprep.subr.mxu0 0.0
        %1132 = vmatpush2.msra.mxu0 0.0
        %1133 = vmatprep.subr.mxu0 0.0
        %1134 = vmatpush2.msra.mxu0 0.0
        %1135 = vmatprep.subr.mxu0 0.0
        %1136 = vmatpush2.msra.mxu0 0.0
        %1137 = vmatprep.subr.mxu0 0.0
        %1138 = vmatpush2.msra.mxu0 0.0
        %1139 = vmatprep.subr.mxu0 0.0
        %1140 = vmatpush2.msra.mxu0 0.0
        %1141 = vmatprep.subr.mxu0 0.0
        %1142 = vmatpush2.msra.mxu0 0.0
        %1143 = vmatprep.subr.mxu0 0.0
        %1144 = vmatpush2.msra.mxu0 0.0
        %1145 = vmatprep.subr.mxu0 0.0
        %1146 = vmatpush2.msra.mxu0 0.0
        %1147 = vmatprep.subr.mxu0 0.0
        %1148 = vmatpush2.msra.mxu0 0.0
        %1149 = vmatprep.subr.mxu0 0.0
        %1150 = vmatpush2.msra.mxu0 0.0
        %1151 = vmatprep.subr.mxu0 0.0
        %1152 = vmatpush2.msra.mxu0 0.0
        %1153 = vmatprep.mubr.f32.mxu0 0.0
        %v1154 = vand.u32 %v925, 4294901760
        %v1155 = vsub.f32 %v925, %v1154
        %1156 = vmatmul.mubr.f32.gmra.mxu0 %v1155
        %v1157 = vpop.f32.mrf.mxu0
        %v1158 = vadd.f32 %v1082, %v1157
        %v1159 = vpop.f32.mrf.mxu0
        %1160 = vdwg.mxu0
        %1161 = vmatprep.subr.mxu0 0.0
        %1162 = vmatpush1.msra.mxu0 0.0
        %1163 = vmatprep.subr.mxu0 0.0
        %1164 = vmatpush1.msra.mxu0 0.0
        %1165 = vmatprep.subr.mxu0 0.0
        %1166 = vmatpush1.msra.mxu0 0.0
        %1167 = vmatprep.subr.mxu0 0.0
        %1168 = vmatpush1.msra.mxu0 0.0
        %1169 = vmatprep.subr.mxu0 0.0
        %1170 = vmatpush1.msra.mxu0 0.0
        %1171 = vmatprep.subr.mxu0 0.0
        %1172 = vmatpush1.msra.mxu0 0.0
        %1173 = vmatprep.subr.mxu0 0.0
        %1174 = vmatpush1.msra.mxu0 0.0
        %1175 = vmatprep.subr.mxu0 0.0
        %1176 = vmatpush1.msra.mxu0 0.0
        %1177 = vmatprep.subr.mxu0 0.0
        %1178 = vmatpush1.msra.mxu0 0.0
        %1179 = vmatprep.subr.mxu0 0.0
        %1180 = vmatpush1.msra.mxu0 0.0
        %1181 = vmatprep.subr.mxu0 0.0
        %1182 = vmatpush1.msra.mxu0 0.0
        %1183 = vmatprep.subr.mxu0 0.0
        %1184 = vmatpush1.msra.mxu0 0.0
        %1185 = vmatprep.subr.mxu0 0.0
        %1186 = vmatpush1.msra.mxu0 0.0
        %1187 = vmatprep.subr.mxu0 0.0
        %1188 = vmatpush1.msra.mxu0 0.0
        %1189 = vmatprep.subr.mxu0 0.0
        %v1190 = vand.u32 %v452, 4294901760
        %1191 = vmatpush1.msra.mxu0 %v1190
        %1192 = vmatprep.subr.mxu0 0.0
        %v1193 = vand.u32 %v451, 4294901760
        %1194 = vmatpush1.msra.mxu0 %v1193
        %1195 = vmatprep.subr.mxu0 0.0
        %1196 = vmatpush2.msra.mxu0 0.0
        %1197 = vmatprep.subr.mxu0 0.0
        %1198 = vmatpush2.msra.mxu0 0.0
        %1199 = vmatprep.subr.mxu0 0.0
        %1200 = vmatpush2.msra.mxu0 0.0
        %1201 = vmatprep.subr.mxu0 0.0
        %1202 = vmatpush2.msra.mxu0 0.0
        %1203 = vmatprep.subr.mxu0 0.0
        %1204 = vmatpush2.msra.mxu0 0.0
        %1205 = vmatprep.subr.mxu0 0.0
        %1206 = vmatpush2.msra.mxu0 0.0
        %1207 = vmatprep.subr.mxu0 0.0
        %1208 = vmatpush2.msra.mxu0 0.0
        %1209 = vmatprep.subr.mxu0 0.0
        %1210 = vmatpush2.msra.mxu0 0.0
        %1211 = vmatprep.subr.mxu0 0.0
        %1212 = vmatpush2.msra.mxu0 0.0
        %1213 = vmatprep.subr.mxu0 0.0
        %1214 = vmatpush2.msra.mxu0 0.0
        %1215 = vmatprep.subr.mxu0 0.0
        %1216 = vmatpush2.msra.mxu0 0.0
        %1217 = vmatprep.subr.mxu0 0.0
        %1218 = vmatpush2.msra.mxu0 0.0
        %1219 = vmatprep.subr.mxu0 0.0
        %1220 = vmatpush2.msra.mxu0 0.0
        %1221 = vmatprep.subr.mxu0 0.0
        %1222 = vmatpush2.msra.mxu0 0.0
        %1223 = vmatprep.subr.mxu0 0.0
        %1224 = vmatpush2.msra.mxu0 0.0
        %1225 = vmatprep.subr.mxu0 0.0
        %1226 = vmatpush2.msra.mxu0 0.0
        %1227 = vmatprep.mubr.f32.mxu0 0.0
        %v1228 = vand.u32 %v925, 4294901760
        %v1229 = vsub.f32 %v925, %v1228
        %v1230 = vand.u32 %v1229, 4294901760
        %1231 = vmatmul.mubr.f32.gmra.mxu0 %v1230
        %v1232 = vpop.f32.mrf.mxu0
        %v1233 = vadd.f32 %v1158, %v1232
        %v1234 = vpop.f32.mrf.mxu0
        %1235 = vdwg.mxu0
        %1236 = vmatprep.subr.mxu0 0.0
        %1237 = vmatpush1.msra.mxu0 0.0
        %1238 = vmatprep.subr.mxu0 0.0
        %1239 = vmatpush1.msra.mxu0 0.0
        %1240 = vmatprep.subr.mxu0 0.0
        %1241 = vmatpush1.msra.mxu0 0.0
        %1242 = vmatprep.subr.mxu0 0.0
        %1243 = vmatpush1.msra.mxu0 0.0
        %1244 = vmatprep.subr.mxu0 0.0
        %1245 = vmatpush1.msra.mxu0 0.0
        %1246 = vmatprep.subr.mxu0 0.0
        %1247 = vmatpush1.msra.mxu0 0.0
        %1248 = vmatprep.subr.mxu0 0.0
        %1249 = vmatpush1.msra.mxu0 0.0
        %1250 = vmatprep.subr.mxu0 0.0
        %1251 = vmatpush1.msra.mxu0 0.0
        %1252 = vmatprep.subr.mxu0 0.0
        %1253 = vmatpush1.msra.mxu0 0.0
        %1254 = vmatprep.subr.mxu0 0.0
        %1255 = vmatpush1.msra.mxu0 0.0
        %1256 = vmatprep.subr.mxu0 0.0
        %1257 = vmatpush1.msra.mxu0 0.0
        %1258 = vmatprep.subr.mxu0 0.0
        %1259 = vmatpush1.msra.mxu0 0.0
        %1260 = vmatprep.subr.mxu0 0.0
        %1261 = vmatpush1.msra.mxu0 0.0
        %1262 = vmatprep.subr.mxu0 0.0
        %1263 = vmatpush1.msra.mxu0 0.0
        %1264 = vmatprep.subr.mxu0 0.0
        %v1265 = vand.u32 %v452, 4294901760
        %v1266 = vsub.f32 %v452, %v1265
        %v1267 = vand.u32 %v1266, 4294901760
        %1268 = vmatpush1.msra.mxu0 %v1267
        %1269 = vmatprep.subr.mxu0 0.0
        %v1270 = vand.u32 %v451, 4294901760
        %v1271 = vsub.f32 %v451, %v1270
        %v1272 = vand.u32 %v1271, 4294901760
        %1273 = vmatpush1.msra.mxu0 %v1272
        %1274 = vmatprep.subr.mxu0 0.0
        %1275 = vmatpush2.msra.mxu0 0.0
        %1276 = vmatprep.subr.mxu0 0.0
        %1277 = vmatpush2.msra.mxu0 0.0
        %1278 = vmatprep.subr.mxu0 0.0
        %1279 = vmatpush2.msra.mxu0 0.0
        %1280 = vmatprep.subr.mxu0 0.0
        %1281 = vmatpush2.msra.mxu0 0.0
        %1282 = vmatprep.subr.mxu0 0.0
        %1283 = vmatpush2.msra.mxu0 0.0
        %1284 = vmatprep.subr.mxu0 0.0
        %1285 = vmatpush2.msra.mxu0 0.0
        %1286 = vmatprep.subr.mxu0 0.0
        %1287 = vmatpush2.msra.mxu0 0.0
        %1288 = vmatprep.subr.mxu0 0.0
        %1289 = vmatpush2.msra.mxu0 0.0
        %1290 = vmatprep.subr.mxu0 0.0
        %1291 = vmatpush2.msra.mxu0 0.0
        %1292 = vmatprep.subr.mxu0 0.0
        %1293 = vmatpush2.msra.mxu0 0.0
        %1294 = vmatprep.subr.mxu0 0.0
        %1295 = vmatpush2.msra.mxu0 0.0
        %1296 = vmatprep.subr.mxu0 0.0
        %1297 = vmatpush2.msra.mxu0 0.0
        %1298 = vmatprep.subr.mxu0 0.0
        %1299 = vmatpush2.msra.mxu0 0.0
        %1300 = vmatprep.subr.mxu0 0.0
        %1301 = vmatpush2.msra.mxu0 0.0
        %1302 = vmatprep.subr.mxu0 0.0
        %1303 = vmatpush2.msra.mxu0 0.0
        %1304 = vmatprep.subr.mxu0 0.0
        %1305 = vmatpush2.msra.mxu0 0.0
        %1306 = vmatprep.mubr.f32.mxu0 0.0
        %v1307 = vand.u32 %v925, 4294901760
        %1308 = vmatmul.mubr.f32.gmra.mxu0 %v1307
        %v1309 = vpop.f32.mrf.mxu0
        %v1310 = vadd.f32 %v1233, %v1309
        %v1311 = vpop.f32.mrf.mxu0
        %1312 = vdwg.mxu0
        %1313 = vmatprep.subr.mxu0 0.0
        %1314 = vmatpush1.msra.mxu0 0.0
        %1315 = vmatprep.subr.mxu0 0.0
        %1316 = vmatpush1.msra.mxu0 0.0
        %1317 = vmatprep.subr.mxu0 0.0
        %1318 = vmatpush1.msra.mxu0 0.0
        %1319 = vmatprep.subr.mxu0 0.0
        %1320 = vmatpush1.msra.mxu0 0.0
        %1321 = vmatprep.subr.mxu0 0.0
        %1322 = vmatpush1.msra.mxu0 0.0
        %1323 = vmatprep.subr.mxu0 0.0
        %1324 = vmatpush1.msra.mxu0 0.0
        %1325 = vmatprep.subr.mxu0 0.0
        %1326 = vmatpush1.msra.mxu0 0.0
        %1327 = vmatprep.subr.mxu0 0.0
        %1328 = vmatpush1.msra.mxu0 0.0
        %1329 = vmatprep.subr.mxu0 0.0
        %1330 = vmatpush1.msra.mxu0 0.0
        %1331 = vmatprep.subr.mxu0 0.0
        %1332 = vmatpush1.msra.mxu0 0.0
        %1333 = vmatprep.subr.mxu0 0.0
        %1334 = vmatpush1.msra.mxu0 0.0
        %1335 = vmatprep.subr.mxu0 0.0
        %1336 = vmatpush1.msra.mxu0 0.0
        %1337 = vmatprep.subr.mxu0 0.0
        %1338 = vmatpush1.msra.mxu0 0.0
        %1339 = vmatprep.subr.mxu0 0.0
        %1340 = vmatpush1.msra.mxu0 0.0
        %1341 = vmatprep.subr.mxu0 0.0
        %v1342 = vand.u32 %v452, 4294901760
        %1343 = vmatpush1.msra.mxu0 %v1342
        %1344 = vmatprep.subr.mxu0 0.0
        %v1345 = vand.u32 %v451, 4294901760
        %1346 = vmatpush1.msra.mxu0 %v1345
        %1347 = vmatprep.subr.mxu0 0.0
        %1348 = vmatpush2.msra.mxu0 0.0
        %1349 = vmatprep.subr.mxu0 0.0
        %1350 = vmatpush2.msra.mxu0 0.0
        %1351 = vmatprep.subr.mxu0 0.0
        %1352 = vmatpush2.msra.mxu0 0.0
        %1353 = vmatprep.subr.mxu0 0.0
        %1354 = vmatpush2.msra.mxu0 0.0
        %1355 = vmatprep.subr.mxu0 0.0
        %1356 = vmatpush2.msra.mxu0 0.0
        %1357 = vmatprep.subr.mxu0 0.0
        %1358 = vmatpush2.msra.mxu0 0.0
        %1359 = vmatprep.subr.mxu0 0.0
        %1360 = vmatpush2.msra.mxu0 0.0
        %1361 = vmatprep.subr.mxu0 0.0
        %1362 = vmatpush2.msra.mxu0 0.0
        %1363 = vmatprep.subr.mxu0 0.0
        %1364 = vmatpush2.msra.mxu0 0.0
        %1365 = vmatprep.subr.mxu0 0.0
        %1366 = vmatpush2.msra.mxu0 0.0
        %1367 = vmatprep.subr.mxu0 0.0
        %1368 = vmatpush2.msra.mxu0 0.0
        %1369 = vmatprep.subr.mxu0 0.0
        %1370 = vmatpush2.msra.mxu0 0.0
        %1371 = vmatprep.subr.mxu0 0.0
        %1372 = vmatpush2.msra.mxu0 0.0
        %1373 = vmatprep.subr.mxu0 0.0
        %1374 = vmatpush2.msra.mxu0 0.0
        %1375 = vmatprep.subr.mxu0 0.0
        %1376 = vmatpush2.msra.mxu0 0.0
        %1377 = vmatprep.subr.mxu0 0.0
        %1378 = vmatpush2.msra.mxu0 0.0
        %1379 = vmatprep.mubr.f32.mxu0 0.0
        %v1380 = vand.u32 %v925, 4294901760
        %1381 = vmatmul.mubr.f32.gmra.mxu0 %v1380
        %v1382 = vpop.f32.mrf.mxu0
        %v1383 = vadd.f32 %v1310, %v1382
        %v1384 = vpop.f32.mrf.mxu0
        %1385 = vdwg.mxu0
        %v1386 = vadd.f32 %v458, %v921
        %v1387 = vxor.u32 %v1386, 2147483648
        %v1388 = vmul.f32 %v1387, 1.442695
        %v1389 = vpow.pop %v1388
        %v1390 = vadd.f32 %v1389, 1.0
        %v1391 = vrcp.pop %v1390
        %v1392 = vmul.f32 1.0, %v1391
        %v1394 = vlaneseq
        %v1395 = vshrl.u32 %v1394, 7
        %v1396 = vsub.s32 0, %v1395
        %v1397 = vrot.slane %v453, %v1396
        %1398 = vrot.lane.b32.xlu0 %v1397, 32
        %v1399 = vpop.permute.xlu0 %1398
        %v1401 = vadd.f32 %v921, %v1399
        %1403 = vrot.lane.b32.xlu0 %v1401, 96
        %v1404 = vpop.permute.xlu0 %1403
        %v1406 = vmul.f32 %v1392, %v1404
        %1408 = vrot.lane.b32.xlu0 %v1406, 32
        %v1409 = vpop.permute.xlu0 %1408
        %v1411 = vadd.f32 %v458, %v1409
        %v1412 = vtanh.pop %v1411
        %1414 = vrot.lane.b32.xlu0 %v1412, 96
        %v1415 = vpop.permute.xlu0 %1414
        %v1417 = vsub.f32 %v455, %v1415
        %1419 = vrot.lane.b32.xlu0 %v1417, 16
        %v1420 = vpop.permute.xlu0 %1419
        %v1422 = vmul.f32 %v1392, %v1420
        %1424 = vrot.lane.b32.xlu0 %v1422, 16
        %v1425 = vpop.permute.xlu0 %1424
        %v1427 = vadd.f32 %v1412, %v1425
        %v1428 = vadd.f32 %v460, %v1383
        %v1429 = vxor.u32 %v1428, 2147483648
        %v1430 = vmul.f32 %v1429, 1.442695
        %v1431 = vpow.pop %v1430
        %v1432 = vadd.f32 %v1431, 1.0
        %v1433 = vrcp.pop %v1432
        %v1434 = vmul.f32 1.0, %v1433
        %1435 = vrot.lane.b32.xlu0 %v1397, 16
        %v1436 = vpop.permute.xlu0 %1435
        %v1438 = vadd.f32 %v1383, %v1436
        %1440 = vrot.lane.b32.xlu0 %v1438, 96
        %v1441 = vpop.permute.xlu0 %1440
        %v1443 = vmul.f32 %v1434, %v1441
        %1445 = vrot.lane.b32.xlu0 %v1443, 32
        %v1446 = vpop.permute.xlu0 %1445
        %v1448 = vadd.f32 %v460, %v1446
        %v1449 = vtanh.pop %v1448
        %1451 = vrot.lane.b32.xlu0 %v1449, 96
        %v1452 = vpop.permute.xlu0 %1451
        %v1454 = vsub.f32 %v456, %v1452
        %1456 = vrot.lane.b32.xlu0 %v1454, 16
        %v1457 = vpop.permute.xlu0 %1456
        %v1459 = vmul.f32 %v1434, %v1457
        %1461 = vrot.lane.b32.xlu0 %v1459, 16
        %v1462 = vpop.permute.xlu0 %1461
        %v1464 = vadd.f32 %v1449, %v1462
        %v1465 = vstv %s454
        %vm1466 = vcmp.gt.s32.totalorder %v448, %v1465
        %v1467 = vstv %s457
        %vm1468 = vcmp.gt.s32.totalorder %v448, %v1467
        %v1469 = vsel %vm1466, 1, 0
        %1470 = vset.pattern.permute.xlu0 0
        %1471 = vperm.xlu0 %1470, %v1469
        %v1472 = vpop.permute.xlu0 %1471
        %vm1473 = vcmp.eq.s32.totalorder %v1472, 1
        %1474 = vrot.lane.b32.xlu0 %v455, 32
        %v1475 = vpop.permute.xlu0 %1474
        %v1477 = vsel %vm1473, %v1427, %v1475
        %v1478 = vsel %vm1468, 1, 0
        %1479 = vset.pattern.permute.xlu0 0
        %1480 = vperm.xlu0 %1479, %v1478
        %v1481 = vpop.permute.xlu0 %1480
        %vm1482 = vcmp.eq.s32.totalorder %v1481, 1
        %1483 = vrot.lane.b32.xlu0 %v456, 32
        %v1484 = vpop.permute.xlu0 %1483
        %v1486 = vsel %vm1482, %v1464, %v1484
        %v1487 = vsel %vm1473, %v1427, 0.0
        %1489 = vrot.lane.b32.xlu0 %v1487, 96
        %v1490 = vpop.permute.xlu0 %1489
        %1492 = vst.msk [vmem:[%s421] sm:$0xff] %vm461, %v1490
        %v1493 = vsel %vm1482, %v1464, 0.0
        %1495 = vrot.lane.b32.xlu0 %v1493, 96
        %v1496 = vpop.permute.xlu0 %1495
        %s1498 = scalar_lea.vmem %s428, 16 [#allocation11]
        %1499 = vst.msk [vmem:[%s1498] sm:$0xff] %vm461, %v1496
        %s1500 = sadd.s32 %s454, 1
        %s1501 = ssub.s32 7, %s454
        %s1502 = scalar_lea.vmem %s371, 8 [#allocation4]
        %v1503 = vld [vmem:[%s1502] sm:$0xff]
        %s1504 = scalar_lea.vmem %s380, 8 [#allocation7]
        %v1505 = vld [vmem:[%s1504] sm:$0xff]
        %1507 = vrot.lane.b32.xlu0 %v1477, 96
        %v1508 = vpop.permute.xlu0 %1507
        %v1509 = vsel %vm461, %v1508, 0
        %1511 = vmatprep.subr.mxu0 0.0
        %1512 = vmatpush1.msra.mxu0 0.0
        %1513 = vmatprep.subr.mxu0 0.0
        %1514 = vmatpush1.msra.mxu0 0.0
        %1515 = vmatprep.subr.mxu0 0.0
        %1516 = vmatpush1.msra.mxu0 0.0
        %1517 = vmatprep.subr.mxu0 0.0
        %1518 = vmatpush1.msra.mxu0 0.0
        %1519 = vmatprep.subr.mxu0 0.0
        %1520 = vmatpush1.msra.mxu0 0.0
        %1521 = vmatprep.subr.mxu0 0.0
        %1522 = vmatpush1.msra.mxu0 0.0
        %1523 = vmatprep.subr.mxu0 0.0
        %1524 = vmatpush1.msra.mxu0 0.0
        %1525 = vmatprep.subr.mxu0 0.0
        %1526 = vmatpush1.msra.mxu0 0.0
        %1527 = vmatprep.subr.mxu0 0.0
        %1528 = vmatpush1.msra.mxu0 0.0
        %1529 = vmatprep.subr.mxu0 0.0
        %1530 = vmatpush1.msra.mxu0 0.0
        %1531 = vmatprep.subr.mxu0 0.0
        %1532 = vmatpush1.msra.mxu0 0.0
        %1533 = vmatprep.subr.mxu0 0.0
        %1534 = vmatpush1.msra.mxu0 0.0
        %1535 = vmatprep.subr.mxu0 0.0
        %1536 = vmatpush1.msra.mxu0 0.0
        %1537 = vmatprep.subr.mxu0 0.0
        %1538 = vmatpush1.msra.mxu0 0.0
        %1539 = vmatprep.subr.mxu0 0.0
        %v1540 = vand.u32 %v450, 4294901760
        %1541 = vmatpush1.msra.mxu0 %v1540
        %1542 = vmatprep.subr.mxu0 0.0
        %v1543 = vand.u32 %v449, 4294901760
        %1544 = vmatpush1.msra.mxu0 %v1543
        %1545 = vmatprep.subr.mxu0 0.0
        %1546 = vmatpush2.msra.mxu0 0.0
        %1547 = vmatprep.subr.mxu0 0.0
        %1548 = vmatpush2.msra.mxu0 0.0
        %1549 = vmatprep.subr.mxu0 0.0
        %1550 = vmatpush2.msra.mxu0 0.0
        %1551 = vmatprep.subr.mxu0 0.0
        %1552 = vmatpush2.msra.mxu0 0.0
        %1553 = vmatprep.subr.mxu0 0.0
        %1554 = vmatpush2.msra.mxu0 0.0
        %1555 = vmatprep.subr.mxu0 0.0
        %1556 = vmatpush2.msra.mxu0 0.0
        %1557 = vmatprep.subr.mxu0 0.0
        %1558 = vmatpush2.msra.mxu0 0.0
        %1559 = vmatprep.subr.mxu0 0.0
        %1560 = vmatpush2.msra.mxu0 0.0
        %1561 = vmatprep.subr.mxu0 0.0
        %1562 = vmatpush2.msra.mxu0 0.0
        %1563 = vmatprep.subr.mxu0 0.0
        %1564 = vmatpush2.msra.mxu0 0.0
        %1565 = vmatprep.subr.mxu0 0.0
        %1566 = vmatpush2.msra.mxu0 0.0
        %1567 = vmatprep.subr.mxu0 0.0
        %1568 = vmatpush2.msra.mxu0 0.0
        %1569 = vmatprep.subr.mxu0 0.0
        %1570 = vmatpush2.msra.mxu0 0.0
        %1571 = vmatprep.subr.mxu0 0.0
        %1572 = vmatpush2.msra.mxu0 0.0
        %1573 = vmatprep.subr.mxu0 0.0
        %1574 = vmatpush2.msra.mxu0 0.0
        %1575 = vmatprep.subr.mxu0 0.0
        %1576 = vmatpush2.msra.mxu0 0.0
        %1577 = vmatprep.mubr.f32.mxu0 0.0
        %v1578 = vand.u32 %v1509, 4294901760
        %v1579 = vsub.f32 %v1509, %v1578
        %v1580 = vand.u32 %v1579, 4294901760
        %v1581 = vsub.f32 %v1579, %v1580
        %v1582 = vand.u32 %v1581, 4294901760
        %1583 = vmatmul.mubr.f32.gmra.mxu0 %v1582
        %v1584 = vpop.f32.mrf.mxu0
        %v1585 = vadd.f32 0.0, %v1584
        %v1586 = vpop.f32.mrf.mxu0
        %1587 = vdwg.mxu0
        %1588 = vmatprep.subr.mxu0 0.0
        %1589 = vmatpush1.msra.mxu0 0.0
        %1590 = vmatprep.subr.mxu0 0.0
        %1591 = vmatpush1.msra.mxu0 0.0
        %1592 = vmatprep.subr.mxu0 0.0
        %1593 = vmatpush1.msra.mxu0 0.0
        %1594 = vmatprep.subr.mxu0 0.0
        %1595 = vmatpush1.msra.mxu0 0.0
        %1596 = vmatprep.subr.mxu0 0.0
        %1597 = vmatpush1.msra.mxu0 0.0
        %1598 = vmatprep.subr.mxu0 0.0
        %1599 = vmatpush1.msra.mxu0 0.0
        %1600 = vmatprep.subr.mxu0 0.0
        %1601 = vmatpush1.msra.mxu0 0.0
        %1602 = vmatprep.subr.mxu0 0.0
        %1603 = vmatpush1.msra.mxu0 0.0
        %1604 = vmatprep.subr.mxu0 0.0
        %1605 = vmatpush1.msra.mxu0 0.0
        %1606 = vmatprep.subr.mxu0 0.0
        %1607 = vmatpush1.msra.mxu0 0.0
        %1608 = vmatprep.subr.mxu0 0.0
        %1609 = vmatpush1.msra.mxu0 0.0
        %1610 = vmatprep.subr.mxu0 0.0
        %1611 = vmatpush1.msra.mxu0 0.0
        %1612 = vmatprep.subr.mxu0 0.0
        %1613 = vmatpush1.msra.mxu0 0.0
        %1614 = vmatprep.subr.mxu0 0.0
        %1615 = vmatpush1.msra.mxu0 0.0
        %1616 = vmatprep.subr.mxu0 0.0
        %v1617 = vand.u32 %v450, 4294901760
        %v1618 = vsub.f32 %v450, %v1617
        %v1619 = vand.u32 %v1618, 4294901760
        %v1620 = vsub.f32 %v1618, %v1619
        %v1621 = vand.u32 %v1620, 4294901760
        %1622 = vmatpush1.msra.mxu0 %v1621
        %1623 = vmatprep.subr.mxu0 0.0
        %v1624 = vand.u32 %v449, 4294901760
        %v1625 = vsub.f32 %v449, %v1624
        %v1626 = vand.u32 %v1625, 4294901760
        %v1627 = vsub.f32 %v1625, %v1626
        %v1628 = vand.u32 %v1627, 4294901760
        %1629 = vmatpush1.msra.mxu0 %v1628
        %1630 = vmatprep.subr.mxu0 0.0
        %1631 = vmatpush2.msra.mxu0 0.0
        %1632 = vmatprep.subr.mxu0 0.0
        %1633 = vmatpush2.msra.mxu0 0.0
        %1634 = vmatprep.subr.mxu0 0.0
        %1635 = vmatpush2.msra.mxu0 0.0
        %1636 = vmatprep.subr.mxu0 0.0
        %1637 = vmatpush2.msra.mxu0 0.0
        %1638 = vmatprep.subr.mxu0 0.0
        %1639 = vmatpush2.msra.mxu0 0.0
        %1640 = vmatprep.subr.mxu0 0.0
        %1641 = vmatpush2.msra.mxu0 0.0
        %1642 = vmatprep.subr.mxu0 0.0
        %1643 = vmatpush2.msra.mxu0 0.0
        %1644 = vmatprep.subr.mxu0 0.0
        %1645 = vmatpush2.msra.mxu0 0.0
        %1646 = vmatprep.subr.mxu0 0.0
        %1647 = vmatpush2.msra.mxu0 0.0
        %1648 = vmatprep.subr.mxu0 0.0
        %1649 = vmatpush2.msra.mxu0 0.0
        %1650 = vmatprep.subr.mxu0 0.0
        %1651 = vmatpush2.msra.mxu0 0.0
        %1652 = vmatprep.subr.mxu0 0.0
        %1653 = vmatpush2.msra.mxu0 0.0
        %1654 = vmatprep.subr.mxu0 0.0
        %1655 = vmatpush2.msra.mxu0 0.0
        %1656 = vmatprep.subr.mxu0 0.0
        %1657 = vmatpush2.msra.mxu0 0.0
        %1658 = vmatprep.subr.mxu0 0.0
        %1659 = vmatpush2.msra.mxu0 0.0
        %1660 = vmatprep.subr.mxu0 0.0
        %1661 = vmatpush2.msra.mxu0 0.0
        %1662 = vmatprep.mubr.f32.mxu0 0.0
        %v1663 = vand.u32 %v1509, 4294901760
        %1664 = vmatmul.mubr.f32.gmra.mxu0 %v1663
        %v1665 = vpop.f32.mrf.mxu0
        %v1666 = vadd.f32 %v1585, %v1665
        %v1667 = vpop.f32.mrf.mxu0
        %1668 = vdwg.mxu0
        %1669 = vmatprep.subr.mxu0 0.0
        %1670 = vmatpush1.msra.mxu0 0.0
        %1671 = vmatprep.subr.mxu0 0.0
        %1672 = vmatpush1.msra.mxu0 0.0
        %1673 = vmatprep.subr.mxu0 0.0
        %1674 = vmatpush1.msra.mxu0 0.0
        %1675 = vmatprep.subr.mxu0 0.0
        %1676 = vmatpush1.msra.mxu0 0.0
        %1677 = vmatprep.subr.mxu0 0.0
        %1678 = vmatpush1.msra.mxu0 0.0
        %1679 = vmatprep.subr.mxu0 0.0
        %1680 = vmatpush1.msra.mxu0 0.0
        %1681 = vmatprep.subr.mxu0 0.0
        %1682 = vmatpush1.msra.mxu0 0.0
        %1683 = vmatprep.subr.mxu0 0.0
        %1684 = vmatpush1.msra.mxu0 0.0
        %1685 = vmatprep.subr.mxu0 0.0
        %1686 = vmatpush1.msra.mxu0 0.0
        %1687 = vmatprep.subr.mxu0 0.0
        %1688 = vmatpush1.msra.mxu0 0.0
        %1689 = vmatprep.subr.mxu0 0.0
        %1690 = vmatpush1.msra.mxu0 0.0
        %1691 = vmatprep.subr.mxu0 0.0
        %1692 = vmatpush1.msra.mxu0 0.0
        %1693 = vmatprep.subr.mxu0 0.0
        %1694 = vmatpush1.msra.mxu0 0.0
        %1695 = vmatprep.subr.mxu0 0.0
        %1696 = vmatpush1.msra.mxu0 0.0
        %1697 = vmatprep.subr.mxu0 0.0
        %v1698 = vand.u32 %v450, 4294901760
        %v1699 = vsub.f32 %v450, %v1698
        %1700 = vmatpush1.msra.mxu0 %v1699
        %1701 = vmatprep.subr.mxu0 0.0
        %v1702 = vand.u32 %v449, 4294901760
        %v1703 = vsub.f32 %v449, %v1702
        %1704 = vmatpush1.msra.mxu0 %v1703
        %1705 = vmatprep.subr.mxu0 0.0
        %1706 = vmatpush2.msra.mxu0 0.0
        %1707 = vmatprep.subr.mxu0 0.0
        %1708 = vmatpush2.msra.mxu0 0.0
        %1709 = vmatprep.subr.mxu0 0.0
        %1710 = vmatpush2.msra.mxu0 0.0
        %1711 = vmatprep.subr.mxu0 0.0
        %1712 = vmatpush2.msra.mxu0 0.0
        %1713 = vmatprep.subr.mxu0 0.0
        %1714 = vmatpush2.msra.mxu0 0.0
        %1715 = vmatprep.subr.mxu0 0.0
        %1716 = vmatpush2.msra.mxu0 0.0
        %1717 = vmatprep.subr.mxu0 0.0
        %1718 = vmatpush2.msra.mxu0 0.0
        %1719 = vmatprep.subr.mxu0 0.0
        %1720 = vmatpush2.msra.mxu0 0.0
        %1721 = vmatprep.subr.mxu0 0.0
        %1722 = vmatpush2.msra.mxu0 0.0
        %1723 = vmatprep.subr.mxu0 0.0
        %1724 = vmatpush2.msra.mxu0 0.0
        %1725 = vmatprep.subr.mxu0 0.0
        %1726 = vmatpush2.msra.mxu0 0.0
        %1727 = vmatprep.subr.mxu0 0.0
        %1728 = vmatpush2.msra.mxu0 0.0
        %1729 = vmatprep.subr.mxu0 0.0
        %1730 = vmatpush2.msra.mxu0 0.0
        %1731 = vmatprep.subr.mxu0 0.0
        %1732 = vmatpush2.msra.mxu0 0.0
        %1733 = vmatprep.subr.mxu0 0.0
        %1734 = vmatpush2.msra.mxu0 0.0
        %1735 = vmatprep.subr.mxu0 0.0
        %1736 = vmatpush2.msra.mxu0 0.0
        %1737 = vmatprep.mubr.f32.mxu0 0.0
        %v1738 = vand.u32 %v1509, 4294901760
        %v1739 = vsub.f32 %v1509, %v1738
        %1740 = vmatmul.mubr.f32.gmra.mxu0 %v1739
        %v1741 = vpop.f32.mrf.mxu0
        %v1742 = vadd.f32 %v1666, %v1741
        %v1743 = vpop.f32.mrf.mxu0
        %1744 = vdwg.mxu0
        %1745 = vmatprep.subr.mxu0 0.0
        %1746 = vmatpush1.msra.mxu0 0.0
        %1747 = vmatprep.subr.mxu0 0.0
        %1748 = vmatpush1.msra.mxu0 0.0
        %1749 = vmatprep.subr.mxu0 0.0
        %1750 = vmatpush1.msra.mxu0 0.0
        %1751 = vmatprep.subr.mxu0 0.0
        %1752 = vmatpush1.msra.mxu0 0.0
        %1753 = vmatprep.subr.mxu0 0.0
        %1754 = vmatpush1.msra.mxu0 0.0
        %1755 = vmatprep.subr.mxu0 0.0
        %1756 = vmatpush1.msra.mxu0 0.0
        %1757 = vmatprep.subr.mxu0 0.0
        %1758 = vmatpush1.msra.mxu0 0.0
        %1759 = vmatprep.subr.mxu0 0.0
        %1760 = vmatpush1.msra.mxu0 0.0
        %1761 = vmatprep.subr.mxu0 0.0
        %1762 = vmatpush1.msra.mxu0 0.0
        %1763 = vmatprep.subr.mxu0 0.0
        %1764 = vmatpush1.msra.mxu0 0.0
        %1765 = vmatprep.subr.mxu0 0.0
        %1766 = vmatpush1.msra.mxu0 0.0
        %1767 = vmatprep.subr.mxu0 0.0
        %1768 = vmatpush1.msra.mxu0 0.0
        %1769 = vmatprep.subr.mxu0 0.0
        %1770 = vmatpush1.msra.mxu0 0.0
        %1771 = vmatprep.subr.mxu0 0.0
        %1772 = vmatpush1.msra.mxu0 0.0
        %1773 = vmatprep.subr.mxu0 0.0
        %v1774 = vand.u32 %v450, 4294901760
        %1775 = vmatpush1.msra.mxu0 %v1774
        %1776 = vmatprep.subr.mxu0 0.0
        %v1777 = vand.u32 %v449, 4294901760
        %1778 = vmatpush1.msra.mxu0 %v1777
        %1779 = vmatprep.subr.mxu0 0.0
        %1780 = vmatpush2.msra.mxu0 0.0
        %1781 = vmatprep.subr.mxu0 0.0
        %1782 = vmatpush2.msra.mxu0 0.0
        %1783 = vmatprep.subr.mxu0 0.0
        %1784 = vmatpush2.msra.mxu0 0.0
        %1785 = vmatprep.subr.mxu0 0.0
        %1786 = vmatpush2.msra.mxu0 0.0
        %1787 = vmatprep.subr.mxu0 0.0
        %1788 = vmatpush2.msra.mxu0 0.0
        %1789 = vmatprep.subr.mxu0 0.0
        %1790 = vmatpush2.msra.mxu0 0.0
        %1791 = vmatprep.subr.mxu0 0.0
        %1792 = vmatpush2.msra.mxu0 0.0
        %1793 = vmatprep.subr.mxu0 0.0
        %1794 = vmatpush2.msra.mxu0 0.0
        %1795 = vmatprep.subr.mxu0 0.0
        %1796 = vmatpush2.msra.mxu0 0.0
        %1797 = vmatprep.subr.mxu0 0.0
        %1798 = vmatpush2.msra.mxu0 0.0
        %1799 = vmatprep.subr.mxu0 0.0
        %1800 = vmatpush2.msra.mxu0 0.0
        %1801 = vmatprep.subr.mxu0 0.0
        %1802 = vmatpush2.msra.mxu0 0.0
        %1803 = vmatprep.subr.mxu0 0.0
        %1804 = vmatpush2.msra.mxu0 0.0
        %1805 = vmatprep.subr.mxu0 0.0
        %1806 = vmatpush2.msra.mxu0 0.0
        %1807 = vmatprep.subr.mxu0 0.0
        %1808 = vmatpush2.msra.mxu0 0.0
        %1809 = vmatprep.subr.mxu0 0.0
        %1810 = vmatpush2.msra.mxu0 0.0
        %1811 = vmatprep.mubr.f32.mxu0 0.0
        %v1812 = vand.u32 %v1509, 4294901760
        %v1813 = vsub.f32 %v1509, %v1812
        %v1814 = vand.u32 %v1813, 4294901760
        %1815 = vmatmul.mubr.f32.gmra.mxu0 %v1814
        %v1816 = vpop.f32.mrf.mxu0
        %v1817 = vadd.f32 %v1742, %v1816
        %v1818 = vpop.f32.mrf.mxu0
        %1819 = vdwg.mxu0
        %1820 = vmatprep.subr.mxu0 0.0
        %1821 = vmatpush1.msra.mxu0 0.0
        %1822 = vmatprep.subr.mxu0 0.0
        %1823 = vmatpush1.msra.mxu0 0.0
        %1824 = vmatprep.subr.mxu0 0.0
        %1825 = vmatpush1.msra.mxu0 0.0
        %1826 = vmatprep.subr.mxu0 0.0
        %1827 = vmatpush1.msra.mxu0 0.0
        %1828 = vmatprep.subr.mxu0 0.0
        %1829 = vmatpush1.msra.mxu0 0.0
        %1830 = vmatprep.subr.mxu0 0.0
        %1831 = vmatpush1.msra.mxu0 0.0
        %1832 = vmatprep.subr.mxu0 0.0
        %1833 = vmatpush1.msra.mxu0 0.0
        %1834 = vmatprep.subr.mxu0 0.0
        %1835 = vmatpush1.msra.mxu0 0.0
        %1836 = vmatprep.subr.mxu0 0.0
        %1837 = vmatpush1.msra.mxu0 0.0
        %1838 = vmatprep.subr.mxu0 0.0
        %1839 = vmatpush1.msra.mxu0 0.0
        %1840 = vmatprep.subr.mxu0 0.0
        %1841 = vmatpush1.msra.mxu0 0.0
        %1842 = vmatprep.subr.mxu0 0.0
        %1843 = vmatpush1.msra.mxu0 0.0
        %1844 = vmatprep.subr.mxu0 0.0
        %1845 = vmatpush1.msra.mxu0 0.0
        %1846 = vmatprep.subr.mxu0 0.0
        %1847 = vmatpush1.msra.mxu0 0.0
        %1848 = vmatprep.subr.mxu0 0.0
        %v1849 = vand.u32 %v450, 4294901760
        %v1850 = vsub.f32 %v450, %v1849
        %v1851 = vand.u32 %v1850, 4294901760
        %1852 = vmatpush1.msra.mxu0 %v1851
        %1853 = vmatprep.subr.mxu0 0.0
        %v1854 = vand.u32 %v449, 4294901760
        %v1855 = vsub.f32 %v449, %v1854
        %v1856 = vand.u32 %v1855, 4294901760
        %1857 = vmatpush1.msra.mxu0 %v1856
        %1858 = vmatprep.subr.mxu0 0.0
        %1859 = vmatpush2.msra.mxu0 0.0
        %1860 = vmatprep.subr.mxu0 0.0
        %1861 = vmatpush2.msra.mxu0 0.0
        %1862 = vmatprep.subr.mxu0 0.0
        %1863 = vmatpush2.msra.mxu0 0.0
        %1864 = vmatprep.subr.mxu0 0.0
        %1865 = vmatpush2.msra.mxu0 0.0
        %1866 = vmatprep.subr.mxu0 0.0
        %1867 = vmatpush2.msra.mxu0 0.0
        %1868 = vmatprep.subr.mxu0 0.0
        %1869 = vmatpush2.msra.mxu0 0.0
        %1870 = vmatprep.subr.mxu0 0.0
        %1871 = vmatpush2.msra.mxu0 0.0
        %1872 = vmatprep.subr.mxu0 0.0
        %1873 = vmatpush2.msra.mxu0 0.0
        %1874 = vmatprep.subr.mxu0 0.0
        %1875 = vmatpush2.msra.mxu0 0.0
        %1876 = vmatprep.subr.mxu0 0.0
        %1877 = vmatpush2.msra.mxu0 0.0
        %1878 = vmatprep.subr.mxu0 0.0
        %1879 = vmatpush2.msra.mxu0 0.0
        %1880 = vmatprep.subr.mxu0 0.0
        %1881 = vmatpush2.msra.mxu0 0.0
        %1882 = vmatprep.subr.mxu0 0.0
        %1883 = vmatpush2.msra.mxu0 0.0
        %1884 = vmatprep.subr.mxu0 0.0
        %1885 = vmatpush2.msra.mxu0 0.0
        %1886 = vmatprep.subr.mxu0 0.0
        %1887 = vmatpush2.msra.mxu0 0.0
        %1888 = vmatprep.subr.mxu0 0.0
        %1889 = vmatpush2.msra.mxu0 0.0
        %1890 = vmatprep.mubr.f32.mxu0 0.0
        %v1891 = vand.u32 %v1509, 4294901760
        %1892 = vmatmul.mubr.f32.gmra.mxu0 %v1891
        %v1893 = vpop.f32.mrf.mxu0
        %v1894 = vadd.f32 %v1817, %v1893
        %v1895 = vpop.f32.mrf.mxu0
        %1896 = vdwg.mxu0
        %1897 = vmatprep.subr.mxu0 0.0
        %1898 = vmatpush1.msra.mxu0 0.0
        %1899 = vmatprep.subr.mxu0 0.0
        %1900 = vmatpush1.msra.mxu0 0.0
        %1901 = vmatprep.subr.mxu0 0.0
        %1902 = vmatpush1.msra.mxu0 0.0
        %1903 = vmatprep.subr.mxu0 0.0
        %1904 = vmatpush1.msra.mxu0 0.0
        %1905 = vmatprep.subr.mxu0 0.0
        %1906 = vmatpush1.msra.mxu0 0.0
        %1907 = vmatprep.subr.mxu0 0.0
        %1908 = vmatpush1.msra.mxu0 0.0
        %1909 = vmatprep.subr.mxu0 0.0
        %1910 = vmatpush1.msra.mxu0 0.0
        %1911 = vmatprep.subr.mxu0 0.0
        %1912 = vmatpush1.msra.mxu0 0.0
        %1913 = vmatprep.subr.mxu0 0.0
        %1914 = vmatpush1.msra.mxu0 0.0
        %1915 = vmatprep.subr.mxu0 0.0
        %1916 = vmatpush1.msra.mxu0 0.0
        %1917 = vmatprep.subr.mxu0 0.0
        %1918 = vmatpush1.msra.mxu0 0.0
        %1919 = vmatprep.subr.mxu0 0.0
        %1920 = vmatpush1.msra.mxu0 0.0
        %1921 = vmatprep.subr.mxu0 0.0
        %1922 = vmatpush1.msra.mxu0 0.0
        %1923 = vmatprep.subr.mxu0 0.0
        %1924 = vmatpush1.msra.mxu0 0.0
        %1925 = vmatprep.subr.mxu0 0.0
        %v1926 = vand.u32 %v450, 4294901760
        %1927 = vmatpush1.msra.mxu0 %v1926
        %1928 = vmatprep.subr.mxu0 0.0
        %v1929 = vand.u32 %v449, 4294901760
        %1930 = vmatpush1.msra.mxu0 %v1929
        %1931 = vmatprep.subr.mxu0 0.0
        %1932 = vmatpush2.msra.mxu0 0.0
        %1933 = vmatprep.subr.mxu0 0.0
        %1934 = vmatpush2.msra.mxu0 0.0
        %1935 = vmatprep.subr.mxu0 0.0
        %1936 = vmatpush2.msra.mxu0 0.0
        %1937 = vmatprep.subr.mxu0 0.0
        %1938 = vmatpush2.msra.mxu0 0.0
        %1939 = vmatprep.subr.mxu0 0.0
        %1940 = vmatpush2.msra.mxu0 0.0
        %1941 = vmatprep.subr.mxu0 0.0
        %1942 = vmatpush2.msra.mxu0 0.0
        %1943 = vmatprep.subr.mxu0 0.0
        %1944 = vmatpush2.msra.mxu0 0.0
        %1945 = vmatprep.subr.mxu0 0.0
        %1946 = vmatpush2.msra.mxu0 0.0
        %1947 = vmatprep.subr.mxu0 0.0
        %1948 = vmatpush2.msra.mxu0 0.0
        %1949 = vmatprep.subr.mxu0 0.0
        %1950 = vmatpush2.msra.mxu0 0.0
        %1951 = vmatprep.subr.mxu0 0.0
        %1952 = vmatpush2.msra.mxu0 0.0
        %1953 = vmatprep.subr.mxu0 0.0
        %1954 = vmatpush2.msra.mxu0 0.0
        %1955 = vmatprep.subr.mxu0 0.0
        %1956 = vmatpush2.msra.mxu0 0.0
        %1957 = vmatprep.subr.mxu0 0.0
        %1958 = vmatpush2.msra.mxu0 0.0
        %1959 = vmatprep.subr.mxu0 0.0
        %1960 = vmatpush2.msra.mxu0 0.0
        %1961 = vmatprep.subr.mxu0 0.0
        %1962 = vmatpush2.msra.mxu0 0.0
        %1963 = vmatprep.mubr.f32.mxu0 0.0
        %v1964 = vand.u32 %v1509, 4294901760
        %1965 = vmatmul.mubr.f32.gmra.mxu0 %v1964
        %v1966 = vpop.f32.mrf.mxu0
        %v1967 = vadd.f32 %v1894, %v1966
        %v1968 = vpop.f32.mrf.mxu0
        %1969 = vdwg.mxu0
        %1971 = vrot.lane.b32.xlu0 %v1486, 96
        %v1972 = vpop.permute.xlu0 %1971
        %v1973 = vsel %vm461, %v1972, 0
        %1975 = vmatprep.subr.mxu0 0.0
        %1976 = vmatpush1.msra.mxu0 0.0
        %1977 = vmatprep.subr.mxu0 0.0
        %1978 = vmatpush1.msra.mxu0 0.0
        %1979 = vmatprep.subr.mxu0 0.0
        %1980 = vmatpush1.msra.mxu0 0.0
        %1981 = vmatprep.subr.mxu0 0.0
        %1982 = vmatpush1.msra.mxu0 0.0
        %1983 = vmatprep.subr.mxu0 0.0
        %1984 = vmatpush1.msra.mxu0 0.0
        %1985 = vmatprep.subr.mxu0 0.0
        %1986 = vmatpush1.msra.mxu0 0.0
        %1987 = vmatprep.subr.mxu0 0.0
        %1988 = vmatpush1.msra.mxu0 0.0
        %1989 = vmatprep.subr.mxu0 0.0
        %1990 = vmatpush1.msra.mxu0 0.0
        %1991 = vmatprep.subr.mxu0 0.0
        %1992 = vmatpush1.msra.mxu0 0.0
        %1993 = vmatprep.subr.mxu0 0.0
        %1994 = vmatpush1.msra.mxu0 0.0
        %1995 = vmatprep.subr.mxu0 0.0
        %1996 = vmatpush1.msra.mxu0 0.0
        %1997 = vmatprep.subr.mxu0 0.0
        %1998 = vmatpush1.msra.mxu0 0.0
        %1999 = vmatprep.subr.mxu0 0.0
        %2000 = vmatpush1.msra.mxu0 0.0
        %2001 = vmatprep.subr.mxu0 0.0
        %2002 = vmatpush1.msra.mxu0 0.0
        %2003 = vmatprep.subr.mxu0 0.0
        %v2004 = vand.u32 %v452, 4294901760
        %2005 = vmatpush1.msra.mxu0 %v2004
        %2006 = vmatprep.subr.mxu0 0.0
        %v2007 = vand.u32 %v451, 4294901760
        %2008 = vmatpush1.msra.mxu0 %v2007
        %2009 = vmatprep.subr.mxu0 0.0
        %2010 = vmatpush2.msra.mxu0 0.0
        %2011 = vmatprep.subr.mxu0 0.0
        %2012 = vmatpush2.msra.mxu0 0.0
        %2013 = vmatprep.subr.mxu0 0.0
        %2014 = vmatpush2.msra.mxu0 0.0
        %2015 = vmatprep.subr.mxu0 0.0
        %2016 = vmatpush2.msra.mxu0 0.0
        %2017 = vmatprep.subr.mxu0 0.0
        %2018 = vmatpush2.msra.mxu0 0.0
        %2019 = vmatprep.subr.mxu0 0.0
        %2020 = vmatpush2.msra.mxu0 0.0
        %2021 = vmatprep.subr.mxu0 0.0
        %2022 = vmatpush2.msra.mxu0 0.0
        %2023 = vmatprep.subr.mxu0 0.0
        %2024 = vmatpush2.msra.mxu0 0.0
        %2025 = vmatprep.subr.mxu0 0.0
        %2026 = vmatpush2.msra.mxu0 0.0
        %2027 = vmatprep.subr.mxu0 0.0
        %2028 = vmatpush2.msra.mxu0 0.0
        %2029 = vmatprep.subr.mxu0 0.0
        %2030 = vmatpush2.msra.mxu0 0.0
        %2031 = vmatprep.subr.mxu0 0.0
        %2032 = vmatpush2.msra.mxu0 0.0
        %2033 = vmatprep.subr.mxu0 0.0
        %2034 = vmatpush2.msra.mxu0 0.0
        %2035 = vmatprep.subr.mxu0 0.0
        %2036 = vmatpush2.msra.mxu0 0.0
        %2037 = vmatprep.subr.mxu0 0.0
        %2038 = vmatpush2.msra.mxu0 0.0
        %2039 = vmatprep.subr.mxu0 0.0
        %2040 = vmatpush2.msra.mxu0 0.0
        %2041 = vmatprep.mubr.f32.mxu0 0.0
        %v2042 = vand.u32 %v1973, 4294901760
        %v2043 = vsub.f32 %v1973, %v2042
        %v2044 = vand.u32 %v2043, 4294901760
        %v2045 = vsub.f32 %v2043, %v2044
        %v2046 = vand.u32 %v2045, 4294901760
        %2047 = vmatmul.mubr.f32.gmra.mxu0 %v2046
        %v2048 = vpop.f32.mrf.mxu0
        %v2049 = vadd.f32 0.0, %v2048
        %v2050 = vpop.f32.mrf.mxu0
        %2051 = vdwg.mxu0
        %2052 = vmatprep.subr.mxu0 0.0
        %2053 = vmatpush1.msra.mxu0 0.0
        %2054 = vmatprep.subr.mxu0 0.0
        %2055 = vmatpush1.msra.mxu0 0.0
        %2056 = vmatprep.subr.mxu0 0.0
        %2057 = vmatpush1.msra.mxu0 0.0
        %2058 = vmatprep.subr.mxu0 0.0
        %2059 = vmatpush1.msra.mxu0 0.0
        %2060 = vmatprep.subr.mxu0 0.0
        %2061 = vmatpush1.msra.mxu0 0.0
        %2062 = vmatprep.subr.mxu0 0.0
        %2063 = vmatpush1.msra.mxu0 0.0
        %2064 = vmatprep.subr.mxu0 0.0
        %2065 = vmatpush1.msra.mxu0 0.0
        %2066 = vmatprep.subr.mxu0 0.0
        %2067 = vmatpush1.msra.mxu0 0.0
        %2068 = vmatprep.subr.mxu0 0.0
        %2069 = vmatpush1.msra.mxu0 0.0
        %2070 = vmatprep.subr.mxu0 0.0
        %2071 = vmatpush1.msra.mxu0 0.0
        %2072 = vmatprep.subr.mxu0 0.0
        %2073 = vmatpush1.msra.mxu0 0.0
        %2074 = vmatprep.subr.mxu0 0.0
        %2075 = vmatpush1.msra.mxu0 0.0
        %2076 = vmatprep.subr.mxu0 0.0
        %2077 = vmatpush1.msra.mxu0 0.0
        %2078 = vmatprep.subr.mxu0 0.0
        %2079 = vmatpush1.msra.mxu0 0.0
        %2080 = vmatprep.subr.mxu0 0.0
        %v2081 = vand.u32 %v452, 4294901760
        %v2082 = vsub.f32 %v452, %v2081
        %v2083 = vand.u32 %v2082, 4294901760
        %v2084 = vsub.f32 %v2082, %v2083
        %v2085 = vand.u32 %v2084, 4294901760
        %2086 = vmatpush1.msra.mxu0 %v2085
        %2087 = vmatprep.subr.mxu0 0.0
        %v2088 = vand.u32 %v451, 4294901760
        %v2089 = vsub.f32 %v451, %v2088
        %v2090 = vand.u32 %v2089, 4294901760
        %v2091 = vsub.f32 %v2089, %v2090
        %v2092 = vand.u32 %v2091, 4294901760
        %2093 = vmatpush1.msra.mxu0 %v2092
        %2094 = vmatprep.subr.mxu0 0.0
        %2095 = vmatpush2.msra.mxu0 0.0
        %2096 = vmatprep.subr.mxu0 0.0
        %2097 = vmatpush2.msra.mxu0 0.0
        %2098 = vmatprep.subr.mxu0 0.0
        %2099 = vmatpush2.msra.mxu0 0.0
        %2100 = vmatprep.subr.mxu0 0.0
        %2101 = vmatpush2.msra.mxu0 0.0
        %2102 = vmatprep.subr.mxu0 0.0
        %2103 = vmatpush2.msra.mxu0 0.0
        %2104 = vmatprep.subr.mxu0 0.0
        %2105 = vmatpush2.msra.mxu0 0.0
        %2106 = vmatprep.subr.mxu0 0.0
        %2107 = vmatpush2.msra.mxu0 0.0
        %2108 = vmatprep.subr.mxu0 0.0
        %2109 = vmatpush2.msra.mxu0 0.0
        %2110 = vmatprep.subr.mxu0 0.0
        %2111 = vmatpush2.msra.mxu0 0.0
        %2112 = vmatprep.subr.mxu0 0.0
        %2113 = vmatpush2.msra.mxu0 0.0
        %2114 = vmatprep.subr.mxu0 0.0
        %2115 = vmatpush2.msra.mxu0 0.0
        %2116 = vmatprep.subr.mxu0 0.0
        %2117 = vmatpush2.msra.mxu0 0.0
        %2118 = vmatprep.subr.mxu0 0.0
        %2119 = vmatpush2.msra.mxu0 0.0
        %2120 = vmatprep.subr.mxu0 0.0
        %2121 = vmatpush2.msra.mxu0 0.0
        %2122 = vmatprep.subr.mxu0 0.0
        %2123 = vmatpush2.msra.mxu0 0.0
        %2124 = vmatprep.subr.mxu0 0.0
        %2125 = vmatpush2.msra.mxu0 0.0
        %2126 = vmatprep.mubr.f32.mxu0 0.0
        %v2127 = vand.u32 %v1973, 4294901760
        %2128 = vmatmul.mubr.f32.gmra.mxu0 %v2127
        %v2129 = vpop.f32.mrf.mxu0
        %v2130 = vadd.f32 %v2049, %v2129
        %v2131 = vpop.f32.mrf.mxu0
        %2132 = vdwg.mxu0
        %2133 = vmatprep.subr.mxu0 0.0
        %2134 = vmatpush1.msra.mxu0 0.0
        %2135 = vmatprep.subr.mxu0 0.0
        %2136 = vmatpush1.msra.mxu0 0.0
        %2137 = vmatprep.subr.mxu0 0.0
        %2138 = vmatpush1.msra.mxu0 0.0
        %2139 = vmatprep.subr.mxu0 0.0
        %2140 = vmatpush1.msra.mxu0 0.0
        %2141 = vmatprep.subr.mxu0 0.0
        %2142 = vmatpush1.msra.mxu0 0.0
        %2143 = vmatprep.subr.mxu0 0.0
        %2144 = vmatpush1.msra.mxu0 0.0
        %2145 = vmatprep.subr.mxu0 0.0
        %2146 = vmatpush1.msra.mxu0 0.0
        %2147 = vmatprep.subr.mxu0 0.0
        %2148 = vmatpush1.msra.mxu0 0.0
        %2149 = vmatprep.subr.mxu0 0.0
        %2150 = vmatpush1.msra.mxu0 0.0
        %2151 = vmatprep.subr.mxu0 0.0
        %2152 = vmatpush1.msra.mxu0 0.0
        %2153 = vmatprep.subr.mxu0 0.0
        %2154 = vmatpush1.msra.mxu0 0.0
        %2155 = vmatprep.subr.mxu0 0.0
        %2156 = vmatpush1.msra.mxu0 0.0
        %2157 = vmatprep.subr.mxu0 0.0
        %2158 = vmatpush1.msra.mxu0 0.0
        %2159 = vmatprep.subr.mxu0 0.0
        %2160 = vmatpush1.msra.mxu0 0.0
        %2161 = vmatprep.subr.mxu0 0.0
        %v2162 = vand.u32 %v452, 4294901760
        %v2163 = vsub.f32 %v452, %v2162
        %2164 = vmatpush1.msra.mxu0 %v2163
        %2165 = vmatprep.subr.mxu0 0.0
        %v2166 = vand.u32 %v451, 4294901760
        %v2167 = vsub.f32 %v451, %v2166
        %2168 = vmatpush1.msra.mxu0 %v2167
        %2169 = vmatprep.subr.mxu0 0.0
        %2170 = vmatpush2.msra.mxu0 0.0
        %2171 = vmatprep.subr.mxu0 0.0
        %2172 = vmatpush2.msra.mxu0 0.0
        %2173 = vmatprep.subr.mxu0 0.0
        %2174 = vmatpush2.msra.mxu0 0.0
        %2175 = vmatprep.subr.mxu0 0.0
        %2176 = vmatpush2.msra.mxu0 0.0
        %2177 = vmatprep.subr.mxu0 0.0
        %2178 = vmatpush2.msra.mxu0 0.0
        %2179 = vmatprep.subr.mxu0 0.0
        %2180 = vmatpush2.msra.mxu0 0.0
        %2181 = vmatprep.subr.mxu0 0.0
        %2182 = vmatpush2.msra.mxu0 0.0
        %2183 = vmatprep.subr.mxu0 0.0
        %2184 = vmatpush2.msra.mxu0 0.0
        %2185 = vmatprep.subr.mxu0 0.0
        %2186 = vmatpush2.msra.mxu0 0.0
        %2187 = vmatprep.subr.mxu0 0.0
        %2188 = vmatpush2.msra.mxu0 0.0
        %2189 = vmatprep.subr.mxu0 0.0
        %2190 = vmatpush2.msra.mxu0 0.0
        %2191 = vmatprep.subr.mxu0 0.0
        %2192 = vmatpush2.msra.mxu0 0.0
        %2193 = vmatprep.subr.mxu0 0.0
        %2194 = vmatpush2.msra.mxu0 0.0
        %2195 = vmatprep.subr.mxu0 0.0
        %2196 = vmatpush2.msra.mxu0 0.0
        %2197 = vmatprep.subr.mxu0 0.0
        %2198 = vmatpush2.msra.mxu0 0.0
        %2199 = vmatprep.subr.mxu0 0.0
        %2200 = vmatpush2.msra.mxu0 0.0
        %2201 = vmatprep.mubr.f32.mxu0 0.0
        %v2202 = vand.u32 %v1973, 4294901760
        %v2203 = vsub.f32 %v1973, %v2202
        %2204 = vmatmul.mubr.f32.gmra.mxu0 %v2203
        %v2205 = vpop.f32.mrf.mxu0
        %v2206 = vadd.f32 %v2130, %v2205
        %v2207 = vpop.f32.mrf.mxu0
        %2208 = vdwg.mxu0
        %2209 = vmatprep.subr.mxu0 0.0
        %2210 = vmatpush1.msra.mxu0 0.0
        %2211 = vmatprep.subr.mxu0 0.0
        %2212 = vmatpush1.msra.mxu0 0.0
        %2213 = vmatprep.subr.mxu0 0.0
        %2214 = vmatpush1.msra.mxu0 0.0
        %2215 = vmatprep.subr.mxu0 0.0
        %2216 = vmatpush1.msra.mxu0 0.0
        %2217 = vmatprep.subr.mxu0 0.0
        %2218 = vmatpush1.msra.mxu0 0.0
        %2219 = vmatprep.subr.mxu0 0.0
        %2220 = vmatpush1.msra.mxu0 0.0
        %2221 = vmatprep.subr.mxu0 0.0
        %2222 = vmatpush1.msra.mxu0 0.0
        %2223 = vmatprep.subr.mxu0 0.0
        %2224 = vmatpush1.msra.mxu0 0.0
        %2225 = vmatprep.subr.mxu0 0.0
        %2226 = vmatpush1.msra.mxu0 0.0
        %2227 = vmatprep.subr.mxu0 0.0
        %2228 = vmatpush1.msra.mxu0 0.0
        %2229 = vmatprep.subr.mxu0 0.0
        %2230 = vmatpush1.msra.mxu0 0.0
        %2231 = vmatprep.subr.mxu0 0.0
        %2232 = vmatpush1.msra.mxu0 0.0
        %2233 = vmatprep.subr.mxu0 0.0
        %2234 = vmatpush1.msra.mxu0 0.0
        %2235 = vmatprep.subr.mxu0 0.0
        %2236 = vmatpush1.msra.mxu0 0.0
        %2237 = vmatprep.subr.mxu0 0.0
        %v2238 = vand.u32 %v452, 4294901760
        %2239 = vmatpush1.msra.mxu0 %v2238
        %2240 = vmatprep.subr.mxu0 0.0
        %v2241 = vand.u32 %v451, 4294901760
        %2242 = vmatpush1.msra.mxu0 %v2241
        %2243 = vmatprep.subr.mxu0 0.0
        %2244 = vmatpush2.msra.mxu0 0.0
        %2245 = vmatprep.subr.mxu0 0.0
        %2246 = vmatpush2.msra.mxu0 0.0
        %2247 = vmatprep.subr.mxu0 0.0
        %2248 = vmatpush2.msra.mxu0 0.0
        %2249 = vmatprep.subr.mxu0 0.0
        %2250 = vmatpush2.msra.mxu0 0.0
        %2251 = vmatprep.subr.mxu0 0.0
        %2252 = vmatpush2.msra.mxu0 0.0
        %2253 = vmatprep.subr.mxu0 0.0
        %2254 = vmatpush2.msra.mxu0 0.0
        %2255 = vmatprep.subr.mxu0 0.0
        %2256 = vmatpush2.msra.mxu0 0.0
        %2257 = vmatprep.subr.mxu0 0.0
        %2258 = vmatpush2.msra.mxu0 0.0
        %2259 = vmatprep.subr.mxu0 0.0
        %2260 = vmatpush2.msra.mxu0 0.0
        %2261 = vmatprep.subr.mxu0 0.0
        %2262 = vmatpush2.msra.mxu0 0.0
        %2263 = vmatprep.subr.mxu0 0.0
        %2264 = vmatpush2.msra.mxu0 0.0
        %2265 = vmatprep.subr.mxu0 0.0
        %2266 = vmatpush2.msra.mxu0 0.0
        %2267 = vmatprep.subr.mxu0 0.0
        %2268 = vmatpush2.msra.mxu0 0.0
        %2269 = vmatprep.subr.mxu0 0.0
        %2270 = vmatpush2.msra.mxu0 0.0
        %2271 = vmatprep.subr.mxu0 0.0
        %2272 = vmatpush2.msra.mxu0 0.0
        %2273 = vmatprep.subr.mxu0 0.0
        %2274 = vmatpush2.msra.mxu0 0.0
        %2275 = vmatprep.mubr.f32.mxu0 0.0
        %v2276 = vand.u32 %v1973, 4294901760
        %v2277 = vsub.f32 %v1973, %v2276
        %v2278 = vand.u32 %v2277, 4294901760
        %2279 = vmatmul.mubr.f32.gmra.mxu0 %v2278
        %v2280 = vpop.f32.mrf.mxu0
        %v2281 = vadd.f32 %v2206, %v2280
        %v2282 = vpop.f32.mrf.mxu0
        %2283 = vdwg.mxu0
        %2284 = vmatprep.subr.mxu0 0.0
        %2285 = vmatpush1.msra.mxu0 0.0
        %2286 = vmatprep.subr.mxu0 0.0
        %2287 = vmatpush1.msra.mxu0 0.0
        %2288 = vmatprep.subr.mxu0 0.0
        %2289 = vmatpush1.msra.mxu0 0.0
        %2290 = vmatprep.subr.mxu0 0.0
        %2291 = vmatpush1.msra.mxu0 0.0
        %2292 = vmatprep.subr.mxu0 0.0
        %2293 = vmatpush1.msra.mxu0 0.0
        %2294 = vmatprep.subr.mxu0 0.0
        %2295 = vmatpush1.msra.mxu0 0.0
        %2296 = vmatprep.subr.mxu0 0.0
        %2297 = vmatpush1.msra.mxu0 0.0
        %2298 = vmatprep.subr.mxu0 0.0
        %2299 = vmatpush1.msra.mxu0 0.0
        %2300 = vmatprep.subr.mxu0 0.0
        %2301 = vmatpush1.msra.mxu0 0.0
        %2302 = vmatprep.subr.mxu0 0.0
        %2303 = vmatpush1.msra.mxu0 0.0
        %2304 = vmatprep.subr.mxu0 0.0
        %2305 = vmatpush1.msra.mxu0 0.0
        %2306 = vmatprep.subr.mxu0 0.0
        %2307 = vmatpush1.msra.mxu0 0.0
        %2308 = vmatprep.subr.mxu0 0.0
        %2309 = vmatpush1.msra.mxu0 0.0
        %2310 = vmatprep.subr.mxu0 0.0
        %2311 = vmatpush1.msra.mxu0 0.0
        %2312 = vmatprep.subr.mxu0 0.0
        %v2313 = vand.u32 %v452, 4294901760
        %v2314 = vsub.f32 %v452, %v2313
        %v2315 = vand.u32 %v2314, 4294901760
        %2316 = vmatpush1.msra.mxu0 %v2315
        %2317 = vmatprep.subr.mxu0 0.0
        %v2318 = vand.u32 %v451, 4294901760
        %v2319 = vsub.f32 %v451, %v2318
        %v2320 = vand.u32 %v2319, 4294901760
        %2321 = vmatpush1.msra.mxu0 %v2320
        %2322 = vmatprep.subr.mxu0 0.0
        %2323 = vmatpush2.msra.mxu0 0.0
        %2324 = vmatprep.subr.mxu0 0.0
        %2325 = vmatpush2.msra.mxu0 0.0
        %2326 = vmatprep.subr.mxu0 0.0
        %2327 = vmatpush2.msra.mxu0 0.0
        %2328 = vmatprep.subr.mxu0 0.0
        %2329 = vmatpush2.msra.mxu0 0.0
        %2330 = vmatprep.subr.mxu0 0.0
        %2331 = vmatpush2.msra.mxu0 0.0
        %2332 = vmatprep.subr.mxu0 0.0
        %2333 = vmatpush2.msra.mxu0 0.0
        %2334 = vmatprep.subr.mxu0 0.0
        %2335 = vmatpush2.msra.mxu0 0.0
        %2336 = vmatprep.subr.mxu0 0.0
        %2337 = vmatpush2.msra.mxu0 0.0
        %2338 = vmatprep.subr.mxu0 0.0
        %2339 = vmatpush2.msra.mxu0 0.0
        %2340 = vmatprep.subr.mxu0 0.0
        %2341 = vmatpush2.msra.mxu0 0.0
        %2342 = vmatprep.subr.mxu0 0.0
        %2343 = vmatpush2.msra.mxu0 0.0
        %2344 = vmatprep.subr.mxu0 0.0
        %2345 = vmatpush2.msra.mxu0 0.0
        %2346 = vmatprep.subr.mxu0 0.0
        %2347 = vmatpush2.msra.mxu0 0.0
        %2348 = vmatprep.subr.mxu0 0.0
        %2349 = vmatpush2.msra.mxu0 0.0
        %2350 = vmatprep.subr.mxu0 0.0
        %2351 = vmatpush2.msra.mxu0 0.0
        %2352 = vmatprep.subr.mxu0 0.0
        %2353 = vmatpush2.msra.mxu0 0.0
        %2354 = vmatprep.mubr.f32.mxu0 0.0
        %v2355 = vand.u32 %v1973, 4294901760
        %2356 = vmatmul.mubr.f32.gmra.mxu0 %v2355
        %v2357 = vpop.f32.mrf.mxu0
        %v2358 = vadd.f32 %v2281, %v2357
        %v2359 = vpop.f32.mrf.mxu0
        %2360 = vdwg.mxu0
        %2361 = vmatprep.subr.mxu0 0.0
        %2362 = vmatpush1.msra.mxu0 0.0
        %2363 = vmatprep.subr.mxu0 0.0
        %2364 = vmatpush1.msra.mxu0 0.0
        %2365 = vmatprep.subr.mxu0 0.0
        %2366 = vmatpush1.msra.mxu0 0.0
        %2367 = vmatprep.subr.mxu0 0.0
        %2368 = vmatpush1.msra.mxu0 0.0
        %2369 = vmatprep.subr.mxu0 0.0
        %2370 = vmatpush1.msra.mxu0 0.0
        %2371 = vmatprep.subr.mxu0 0.0
        %2372 = vmatpush1.msra.mxu0 0.0
        %2373 = vmatprep.subr.mxu0 0.0
        %2374 = vmatpush1.msra.mxu0 0.0
        %2375 = vmatprep.subr.mxu0 0.0
        %2376 = vmatpush1.msra.mxu0 0.0
        %2377 = vmatprep.subr.mxu0 0.0
        %2378 = vmatpush1.msra.mxu0 0.0
        %2379 = vmatprep.subr.mxu0 0.0
        %2380 = vmatpush1.msra.mxu0 0.0
        %2381 = vmatprep.subr.mxu0 0.0
        %2382 = vmatpush1.msra.mxu0 0.0
        %2383 = vmatprep.subr.mxu0 0.0
        %2384 = vmatpush1.msra.mxu0 0.0
        %2385 = vmatprep.subr.mxu0 0.0
        %2386 = vmatpush1.msra.mxu0 0.0
        %2387 = vmatprep.subr.mxu0 0.0
        %2388 = vmatpush1.msra.mxu0 0.0
        %2389 = vmatprep.subr.mxu0 0.0
        %v2390 = vand.u32 %v452, 4294901760
        %2391 = vmatpush1.msra.mxu0 %v2390
        %2392 = vmatprep.subr.mxu0 0.0
        %v2393 = vand.u32 %v451, 4294901760
        %2394 = vmatpush1.msra.mxu0 %v2393
        %2395 = vmatprep.subr.mxu0 0.0
        %2396 = vmatpush2.msra.mxu0 0.0
        %2397 = vmatprep.subr.mxu0 0.0
        %2398 = vmatpush2.msra.mxu0 0.0
        %2399 = vmatprep.subr.mxu0 0.0
        %2400 = vmatpush2.msra.mxu0 0.0
        %2401 = vmatprep.subr.mxu0 0.0
        %2402 = vmatpush2.msra.mxu0 0.0
        %2403 = vmatprep.subr.mxu0 0.0
        %2404 = vmatpush2.msra.mxu0 0.0
        %2405 = vmatprep.subr.mxu0 0.0
        %2406 = vmatpush2.msra.mxu0 0.0
        %2407 = vmatprep.subr.mxu0 0.0
        %2408 = vmatpush2.msra.mxu0 0.0
        %2409 = vmatprep.subr.mxu0 0.0
        %2410 = vmatpush2.msra.mxu0 0.0
        %2411 = vmatprep.subr.mxu0 0.0
        %2412 = vmatpush2.msra.mxu0 0.0
        %2413 = vmatprep.subr.mxu0 0.0
        %2414 = vmatpush2.msra.mxu0 0.0
        %2415 = vmatprep.subr.mxu0 0.0
        %2416 = vmatpush2.msra.mxu0 0.0
        %2417 = vmatprep.subr.mxu0 0.0
        %2418 = vmatpush2.msra.mxu0 0.0
        %2419 = vmatprep.subr.mxu0 0.0
        %2420 = vmatpush2.msra.mxu0 0.0
        %2421 = vmatprep.subr.mxu0 0.0
        %2422 = vmatpush2.msra.mxu0 0.0
        %2423 = vmatprep.subr.mxu0 0.0
        %2424 = vmatpush2.msra.mxu0 0.0
        %2425 = vmatprep.subr.mxu0 0.0
        %2426 = vmatpush2.msra.mxu0 0.0
        %2427 = vmatprep.mubr.f32.mxu0 0.0
        %v2428 = vand.u32 %v1973, 4294901760
        %2429 = vmatmul.mubr.f32.gmra.mxu0 %v2428
        %v2430 = vpop.f32.mrf.mxu0
        %v2431 = vadd.f32 %v2358, %v2430
        %v2432 = vpop.f32.mrf.mxu0
        %2433 = vdwg.mxu0
        %v2434 = vadd.f32 %v1503, %v1967
        %v2435 = vxor.u32 %v2434, 2147483648
        %v2436 = vmul.f32 %v2435, 1.442695
        %v2437 = vpow.pop %v2436
        %v2438 = vadd.f32 %v2437, 1.0
        %v2439 = vrcp.pop %v2438
        %v2440 = vmul.f32 1.0, %v2439
        %v2441 = vadd.f32 %v1967, %v1399
        %2443 = vrot.lane.b32.xlu0 %v2441, 96
        %v2444 = vpop.permute.xlu0 %2443
        %v2446 = vmul.f32 %v2440, %v2444
        %2448 = vrot.lane.b32.xlu0 %v2446, 32
        %v2449 = vpop.permute.xlu0 %2448
        %v2451 = vadd.f32 %v1503, %v2449
        %v2452 = vtanh.pop %v2451
        %v2453 = vsub.f32 %v1477, %v2452
        %2455 = vrot.lane.b32.xlu0 %v2453, 112
        %v2456 = vpop.permute.xlu0 %2455
        %v2458 = vmul.f32 %v2440, %v2456
        %2460 = vrot.lane.b32.xlu0 %v2458, 16
        %v2461 = vpop.permute.xlu0 %2460
        %v2463 = vadd.f32 %v2452, %v2461
        %v2464 = vadd.f32 %v1505, %v2431
        %v2465 = vxor.u32 %v2464, 2147483648
        %v2466 = vmul.f32 %v2465, 1.442695
        %v2467 = vpow.pop %v2466
        %v2468 = vadd.f32 %v2467, 1.0
        %v2469 = vrcp.pop %v2468
        %v2470 = vmul.f32 1.0, %v2469
        %v2471 = vadd.f32 %v2431, %v1436
        %2473 = vrot.lane.b32.xlu0 %v2471, 96
        %v2474 = vpop.permute.xlu0 %2473
        %v2476 = vmul.f32 %v2470, %v2474
        %2478 = vrot.lane.b32.xlu0 %v2476, 32
        %v2479 = vpop.permute.xlu0 %2478
        %v2481 = vadd.f32 %v1505, %v2479
        %v2482 = vtanh.pop %v2481
        %v2483 = vsub.f32 %v1486, %v2482
        %2485 = vrot.lane.b32.xlu0 %v2483, 112
        %v2486 = vpop.permute.xlu0 %2485
        %v2488 = vmul.f32 %v2470, %v2486
        %2490 = vrot.lane.b32.xlu0 %v2488, 16
        %v2491 = vpop.permute.xlu0 %2490
        %v2493 = vadd.f32 %v2482, %v2491
        %v2494 = vstv %s1500
        %vm2495 = vcmp.gt.s32.totalorder %v448, %v2494
        %v2496 = vstv %s1501
        %vm2497 = vcmp.gt.s32.totalorder %v448, %v2496
        %v2498 = vsel %vm2495, 1, 0
        %2499 = vset.pattern.permute.xlu0 0
        %2500 = vperm.xlu0 %2499, %v2498
        %v2501 = vpop.permute.xlu0 %2500
        %vm2502 = vcmp.eq.s32.totalorder %v2501, 1
        %v2503 = vsel %vm2502, %v2463, %v1477
        %v2504 = vsel %vm2497, 1, 0
        %2505 = vset.pattern.permute.xlu0 0
        %2506 = vperm.xlu0 %2505, %v2504
        %v2507 = vpop.permute.xlu0 %2506
        %vm2508 = vcmp.eq.s32.totalorder %v2507, 1
        %v2509 = vsel %vm2508, %v2493, %v1486
        %v2510 = vsel %vm2502, %v2463, 0.0
        %2512 = vrot.lane.b32.xlu0 %v2510, 96
        %v2513 = vpop.permute.xlu0 %2512
        %s2515 = scalar_lea.vmem %s421, 8 [#allocation10]
        %2516 = vst.msk [vmem:[%s2515] sm:$0xff] %vm461, %v2513
        %v2517 = vsel %vm2508, %v2493, 0.0
        %2519 = vrot.lane.b32.xlu0 %v2517, 96
        %v2520 = vpop.permute.xlu0 %2519
        %s2522 = scalar_lea.vmem %s428, 8 [#allocation11]
        %2523 = vst.msk [vmem:[%s2522] sm:$0xff] %vm461, %v2520
        %s2524 = sadd.s32 %s454, 2
        %s2525 = ssub.s32 6, %s454
        %s2526 = scalar_lea.vmem %s371, 16 [#allocation4]
        %v2527 = vld [vmem:[%s2526] sm:$0xff]
        %v2528 = vld [vmem:[%s380] sm:$0xff]
        %2530 = vrot.lane.b32.xlu0 %v2503, 96
        %v2531 = vpop.permute.xlu0 %2530
        %v2532 = vsel %vm461, %v2531, 0
        %2534 = vmatprep.subr.mxu0 0.0
        %2535 = vmatpush1.msra.mxu0 0.0
        %2536 = vmatprep.subr.mxu0 0.0
        %2537 = vmatpush1.msra.mxu0 0.0
        %2538 = vmatprep.subr.mxu0 0.0
        %2539 = vmatpush1.msra.mxu0 0.0
        %2540 = vmatprep.subr.mxu0 0.0
        %2541 = vmatpush1.msra.mxu0 0.0
        %2542 = vmatprep.subr.mxu0 0.0
        %2543 = vmatpush1.msra.mxu0 0.0
        %2544 = vmatprep.subr.mxu0 0.0
        %2545 = vmatpush1.msra.mxu0 0.0
        %2546 = vmatprep.subr.mxu0 0.0
        %2547 = vmatpush1.msra.mxu0 0.0
        %2548 = vmatprep.subr.mxu0 0.0
        %2549 = vmatpush1.msra.mxu0 0.0
        %2550 = vmatprep.subr.mxu0 0.0
        %2551 = vmatpush1.msra.mxu0 0.0
        %2552 = vmatprep.subr.mxu0 0.0
        %2553 = vmatpush1.msra.mxu0 0.0
        %2554 = vmatprep.subr.mxu0 0.0
        %2555 = vmatpush1.msra.mxu0 0.0
        %2556 = vmatprep.subr.mxu0 0.0
        %2557 = vmatpush1.msra.mxu0 0.0
        %2558 = vmatprep.subr.mxu0 0.0
        %2559 = vmatpush1.msra.mxu0 0.0
        %2560 = vmatprep.subr.mxu0 0.0
        %2561 = vmatpush1.msra.mxu0 0.0
        %2562 = vmatprep.subr.mxu0 0.0
        %v2563 = vand.u32 %v450, 4294901760
        %2564 = vmatpush1.msra.mxu0 %v2563
        %2565 = vmatprep.subr.mxu0 0.0
        %v2566 = vand.u32 %v449, 4294901760
        %2567 = vmatpush1.msra.mxu0 %v2566
        %2568 = vmatprep.subr.mxu0 0.0
        %2569 = vmatpush2.msra.mxu0 0.0
        %2570 = vmatprep.subr.mxu0 0.0
        %2571 = vmatpush2.msra.mxu0 0.0
        %2572 = vmatprep.subr.mxu0 0.0
        %2573 = vmatpush2.msra.mxu0 0.0
        %2574 = vmatprep.subr.mxu0 0.0
        %2575 = vmatpush2.msra.mxu0 0.0
        %2576 = vmatprep.subr.mxu0 0.0
        %2577 = vmatpush2.msra.mxu0 0.0
        %2578 = vmatprep.subr.mxu0 0.0
        %2579 = vmatpush2.msra.mxu0 0.0
        %2580 = vmatprep.subr.mxu0 0.0
        %2581 = vmatpush2.msra.mxu0 0.0
        %2582 = vmatprep.subr.mxu0 0.0
        %2583 = vmatpush2.msra.mxu0 0.0
        %2584 = vmatprep.subr.mxu0 0.0
        %2585 = vmatpush2.msra.mxu0 0.0
        %2586 = vmatprep.subr.mxu0 0.0
        %2587 = vmatpush2.msra.mxu0 0.0
        %2588 = vmatprep.subr.mxu0 0.0
        %2589 = vmatpush2.msra.mxu0 0.0
        %2590 = vmatprep.subr.mxu0 0.0
        %2591 = vmatpush2.msra.mxu0 0.0
        %2592 = vmatprep.subr.mxu0 0.0
        %2593 = vmatpush2.msra.mxu0 0.0
        %2594 = vmatprep.subr.mxu0 0.0
        %2595 = vmatpush2.msra.mxu0 0.0
        %2596 = vmatprep.subr.mxu0 0.0
        %2597 = vmatpush2.msra.mxu0 0.0
        %2598 = vmatprep.subr.mxu0 0.0
        %2599 = vmatpush2.msra.mxu0 0.0
        %2600 = vmatprep.mubr.f32.mxu0 0.0
        %v2601 = vand.u32 %v2532, 4294901760
        %v2602 = vsub.f32 %v2532, %v2601
        %v2603 = vand.u32 %v2602, 4294901760
        %v2604 = vsub.f32 %v2602, %v2603
        %v2605 = vand.u32 %v2604, 4294901760
        %2606 = vmatmul.mubr.f32.gmra.mxu0 %v2605
        %v2607 = vpop.f32.mrf.mxu0
        %v2608 = vadd.f32 0.0, %v2607
        %v2609 = vpop.f32.mrf.mxu0
        %2610 = vdwg.mxu0
        %2611 = vmatprep.subr.mxu0 0.0
        %2612 = vmatpush1.msra.mxu0 0.0
        %2613 = vmatprep.subr.mxu0 0.0
        %2614 = vmatpush1.msra.mxu0 0.0
        %2615 = vmatprep.subr.mxu0 0.0
        %2616 = vmatpush1.msra.mxu0 0.0
        %2617 = vmatprep.subr.mxu0 0.0
        %2618 = vmatpush1.msra.mxu0 0.0
        %2619 = vmatprep.subr.mxu0 0.0
        %2620 = vmatpush1.msra.mxu0 0.0
        %2621 = vmatprep.subr.mxu0 0.0
        %2622 = vmatpush1.msra.mxu0 0.0
        %2623 = vmatprep.subr.mxu0 0.0
        %2624 = vmatpush1.msra.mxu0 0.0
        %2625 = vmatprep.subr.mxu0 0.0
        %2626 = vmatpush1.msra.mxu0 0.0
        %2627 = vmatprep.subr.mxu0 0.0
        %2628 = vmatpush1.msra.mxu0 0.0
        %2629 = vmatprep.subr.mxu0 0.0
        %2630 = vmatpush1.msra.mxu0 0.0
        %2631 = vmatprep.subr.mxu0 0.0
        %2632 = vmatpush1.msra.mxu0 0.0
        %2633 = vmatprep.subr.mxu0 0.0
        %2634 = vmatpush1.msra.mxu0 0.0
        %2635 = vmatprep.subr.mxu0 0.0
        %2636 = vmatpush1.msra.mxu0 0.0
        %2637 = vmatprep.subr.mxu0 0.0
        %2638 = vmatpush1.msra.mxu0 0.0
        %2639 = vmatprep.subr.mxu0 0.0
        %v2640 = vand.u32 %v450, 4294901760
        %v2641 = vsub.f32 %v450, %v2640
        %v2642 = vand.u32 %v2641, 4294901760
        %v2643 = vsub.f32 %v2641, %v2642
        %v2644 = vand.u32 %v2643, 4294901760
        %2645 = vmatpush1.msra.mxu0 %v2644
        %2646 = vmatprep.subr.mxu0 0.0
        %v2647 = vand.u32 %v449, 4294901760
        %v2648 = vsub.f32 %v449, %v2647
        %v2649 = vand.u32 %v2648, 4294901760
        %v2650 = vsub.f32 %v2648, %v2649
        %v2651 = vand.u32 %v2650, 4294901760
        %2652 = vmatpush1.msra.mxu0 %v2651
        %2653 = vmatprep.subr.mxu0 0.0
        %2654 = vmatpush2.msra.mxu0 0.0
        %2655 = vmatprep.subr.mxu0 0.0
        %2656 = vmatpush2.msra.mxu0 0.0
        %2657 = vmatprep.subr.mxu0 0.0
        %2658 = vmatpush2.msra.mxu0 0.0
        %2659 = vmatprep.subr.mxu0 0.0
        %2660 = vmatpush2.msra.mxu0 0.0
        %2661 = vmatprep.subr.mxu0 0.0
        %2662 = vmatpush2.msra.mxu0 0.0
        %2663 = vmatprep.subr.mxu0 0.0
        %2664 = vmatpush2.msra.mxu0 0.0
        %2665 = vmatprep.subr.mxu0 0.0
        %2666 = vmatpush2.msra.mxu0 0.0
        %2667 = vmatprep.subr.mxu0 0.0
        %2668 = vmatpush2.msra.mxu0 0.0
        %2669 = vmatprep.subr.mxu0 0.0
        %2670 = vmatpush2.msra.mxu0 0.0
        %2671 = vmatprep.subr.mxu0 0.0
        %2672 = vmatpush2.msra.mxu0 0.0
        %2673 = vmatprep.subr.mxu0 0.0
        %2674 = vmatpush2.msra.mxu0 0.0
        %2675 = vmatprep.subr.mxu0 0.0
        %2676 = vmatpush2.msra.mxu0 0.0
        %2677 = vmatprep.subr.mxu0 0.0
        %2678 = vmatpush2.msra.mxu0 0.0
        %2679 = vmatprep.subr.mxu0 0.0
        %2680 = vmatpush2.msra.mxu0 0.0
        %2681 = vmatprep.subr.mxu0 0.0
        %2682 = vmatpush2.msra.mxu0 0.0
        %2683 = vmatprep.subr.mxu0 0.0
        %2684 = vmatpush2.msra.mxu0 0.0
        %2685 = vmatprep.mubr.f32.mxu0 0.0
        %v2686 = vand.u32 %v2532, 4294901760
        %2687 = vmatmul.mubr.f32.gmra.mxu0 %v2686
        %v2688 = vpop.f32.mrf.mxu0
        %v2689 = vadd.f32 %v2608, %v2688
        %v2690 = vpop.f32.mrf.mxu0
        %2691 = vdwg.mxu0
        %2692 = vmatprep.subr.mxu0 0.0
        %2693 = vmatpush1.msra.mxu0 0.0
        %2694 = vmatprep.subr.mxu0 0.0
        %2695 = vmatpush1.msra.mxu0 0.0
        %2696 = vmatprep.subr.mxu0 0.0
        %2697 = vmatpush1.msra.mxu0 0.0
        %2698 = vmatprep.subr.mxu0 0.0
        %2699 = vmatpush1.msra.mxu0 0.0
        %2700 = vmatprep.subr.mxu0 0.0
        %2701 = vmatpush1.msra.mxu0 0.0
        %2702 = vmatprep.subr.mxu0 0.0
        %2703 = vmatpush1.msra.mxu0 0.0
        %2704 = vmatprep.subr.mxu0 0.0
        %2705 = vmatpush1.msra.mxu0 0.0
        %2706 = vmatprep.subr.mxu0 0.0
        %2707 = vmatpush1.msra.mxu0 0.0
        %2708 = vmatprep.subr.mxu0 0.0
        %2709 = vmatpush1.msra.mxu0 0.0
        %2710 = vmatprep.subr.mxu0 0.0
        %2711 = vmatpush1.msra.mxu0 0.0
        %2712 = vmatprep.subr.mxu0 0.0
        %2713 = vmatpush1.msra.mxu0 0.0
        %2714 = vmatprep.subr.mxu0 0.0
        %2715 = vmatpush1.msra.mxu0 0.0
        %2716 = vmatprep.subr.mxu0 0.0
        %2717 = vmatpush1.msra.mxu0 0.0
        %2718 = vmatprep.subr.mxu0 0.0
        %2719 = vmatpush1.msra.mxu0 0.0
        %2720 = vmatprep.subr.mxu0 0.0
        %v2721 = vand.u32 %v450, 4294901760
        %v2722 = vsub.f32 %v450, %v2721
        %2723 = vmatpush1.msra.mxu0 %v2722
        %2724 = vmatprep.subr.mxu0 0.0
        %v2725 = vand.u32 %v449, 4294901760
        %v2726 = vsub.f32 %v449, %v2725
        %2727 = vmatpush1.msra.mxu0 %v2726
        %2728 = vmatprep.subr.mxu0 0.0
        %2729 = vmatpush2.msra.mxu0 0.0
        %2730 = vmatprep.subr.mxu0 0.0
        %2731 = vmatpush2.msra.mxu0 0.0
        %2732 = vmatprep.subr.mxu0 0.0
        %2733 = vmatpush2.msra.mxu0 0.0
        %2734 = vmatprep.subr.mxu0 0.0
        %2735 = vmatpush2.msra.mxu0 0.0
        %2736 = vmatprep.subr.mxu0 0.0
        %2737 = vmatpush2.msra.mxu0 0.0
        %2738 = vmatprep.subr.mxu0 0.0
        %2739 = vmatpush2.msra.mxu0 0.0
        %2740 = vmatprep.subr.mxu0 0.0
        %2741 = vmatpush2.msra.mxu0 0.0
        %2742 = vmatprep.subr.mxu0 0.0
        %2743 = vmatpush2.msra.mxu0 0.0
        %2744 = vmatprep.subr.mxu0 0.0
        %2745 = vmatpush2.msra.mxu0 0.0
        %2746 = vmatprep.subr.mxu0 0.0
        %2747 = vmatpush2.msra.mxu0 0.0
        %2748 = vmatprep.subr.mxu0 0.0
        %2749 = vmatpush2.msra.mxu0 0.0
        %2750 = vmatprep.subr.mxu0 0.0
        %2751 = vmatpush2.msra.mxu0 0.0
        %2752 = vmatprep.subr.mxu0 0.0
        %2753 = vmatpush2.msra.mxu0 0.0
        %2754 = vmatprep.subr.mxu0 0.0
        %2755 = vmatpush2.msra.mxu0 0.0
        %2756 = vmatprep.subr.mxu0 0.0
        %2757 = vmatpush2.msra.mxu0 0.0
        %2758 = vmatprep.subr.mxu0 0.0
        %2759 = vmatpush2.msra.mxu0 0.0
        %2760 = vmatprep.mubr.f32.mxu0 0.0
        %v2761 = vand.u32 %v2532, 4294901760
        %v2762 = vsub.f32 %v2532, %v2761
        %2763 = vmatmul.mubr.f32.gmra.mxu0 %v2762
        %v2764 = vpop.f32.mrf.mxu0
        %v2765 = vadd.f32 %v2689, %v2764
        %v2766 = vpop.f32.mrf.mxu0
        %2767 = vdwg.mxu0
        %2768 = vmatprep.subr.mxu0 0.0
        %2769 = vmatpush1.msra.mxu0 0.0
        %2770 = vmatprep.subr.mxu0 0.0
        %2771 = vmatpush1.msra.mxu0 0.0
        %2772 = vmatprep.subr.mxu0 0.0
        %2773 = vmatpush1.msra.mxu0 0.0
        %2774 = vmatprep.subr.mxu0 0.0
        %2775 = vmatpush1.msra.mxu0 0.0
        %2776 = vmatprep.subr.mxu0 0.0
        %2777 = vmatpush1.msra.mxu0 0.0
        %2778 = vmatprep.subr.mxu0 0.0
        %2779 = vmatpush1.msra.mxu0 0.0
        %2780 = vmatprep.subr.mxu0 0.0
        %2781 = vmatpush1.msra.mxu0 0.0
        %2782 = vmatprep.subr.mxu0 0.0
        %2783 = vmatpush1.msra.mxu0 0.0
        %2784 = vmatprep.subr.mxu0 0.0
        %2785 = vmatpush1.msra.mxu0 0.0
        %2786 = vmatprep.subr.mxu0 0.0
        %2787 = vmatpush1.msra.mxu0 0.0
        %2788 = vmatprep.subr.mxu0 0.0
        %2789 = vmatpush1.msra.mxu0 0.0
        %2790 = vmatprep.subr.mxu0 0.0
        %2791 = vmatpush1.msra.mxu0 0.0
        %2792 = vmatprep.subr.mxu0 0.0
        %2793 = vmatpush1.msra.mxu0 0.0
        %2794 = vmatprep.subr.mxu0 0.0
        %2795 = vmatpush1.msra.mxu0 0.0
        %2796 = vmatprep.subr.mxu0 0.0
        %v2797 = vand.u32 %v450, 4294901760
        %2798 = vmatpush1.msra.mxu0 %v2797
        %2799 = vmatprep.subr.mxu0 0.0
        %v2800 = vand.u32 %v449, 4294901760
        %2801 = vmatpush1.msra.mxu0 %v2800
        %2802 = vmatprep.subr.mxu0 0.0
        %2803 = vmatpush2.msra.mxu0 0.0
        %2804 = vmatprep.subr.mxu0 0.0
        %2805 = vmatpush2.msra.mxu0 0.0
        %2806 = vmatprep.subr.mxu0 0.0
        %2807 = vmatpush2.msra.mxu0 0.0
        %2808 = vmatprep.subr.mxu0 0.0
        %2809 = vmatpush2.msra.mxu0 0.0
        %2810 = vmatprep.subr.mxu0 0.0
        %2811 = vmatpush2.msra.mxu0 0.0
        %2812 = vmatprep.subr.mxu0 0.0
        %2813 = vmatpush2.msra.mxu0 0.0
        %2814 = vmatprep.subr.mxu0 0.0
        %2815 = vmatpush2.msra.mxu0 0.0
        %2816 = vmatprep.subr.mxu0 0.0
        %2817 = vmatpush2.msra.mxu0 0.0
        %2818 = vmatprep.subr.mxu0 0.0
        %2819 = vmatpush2.msra.mxu0 0.0
        %2820 = vmatprep.subr.mxu0 0.0
        %2821 = vmatpush2.msra.mxu0 0.0
        %2822 = vmatprep.subr.mxu0 0.0
        %2823 = vmatpush2.msra.mxu0 0.0
        %2824 = vmatprep.subr.mxu0 0.0
        %2825 = vmatpush2.msra.mxu0 0.0
        %2826 = vmatprep.subr.mxu0 0.0
        %2827 = vmatpush2.msra.mxu0 0.0
        %2828 = vmatprep.subr.mxu0 0.0
        %2829 = vmatpush2.msra.mxu0 0.0
        %2830 = vmatprep.subr.mxu0 0.0
        %2831 = vmatpush2.msra.mxu0 0.0
        %2832 = vmatprep.subr.mxu0 0.0
        %2833 = vmatpush2.msra.mxu0 0.0
        %2834 = vmatprep.mubr.f32.mxu0 0.0
        %v2835 = vand.u32 %v2532, 4294901760
        %v2836 = vsub.f32 %v2532, %v2835
        %v2837 = vand.u32 %v2836, 4294901760
        %2838 = vmatmul.mubr.f32.gmra.mxu0 %v2837
        %v2839 = vpop.f32.mrf.mxu0
        %v2840 = vadd.f32 %v2765, %v2839
        %v2841 = vpop.f32.mrf.mxu0
        %2842 = vdwg.mxu0
        %2843 = vmatprep.subr.mxu0 0.0
        %2844 = vmatpush1.msra.mxu0 0.0
        %2845 = vmatprep.subr.mxu0 0.0
        %2846 = vmatpush1.msra.mxu0 0.0
        %2847 = vmatprep.subr.mxu0 0.0
        %2848 = vmatpush1.msra.mxu0 0.0
        %2849 = vmatprep.subr.mxu0 0.0
        %2850 = vmatpush1.msra.mxu0 0.0
        %2851 = vmatprep.subr.mxu0 0.0
        %2852 = vmatpush1.msra.mxu0 0.0
        %2853 = vmatprep.subr.mxu0 0.0
        %2854 = vmatpush1.msra.mxu0 0.0
        %2855 = vmatprep.subr.mxu0 0.0
        %2856 = vmatpush1.msra.mxu0 0.0
        %2857 = vmatprep.subr.mxu0 0.0
        %2858 = vmatpush1.msra.mxu0 0.0
        %2859 = vmatprep.subr.mxu0 0.0
        %2860 = vmatpush1.msra.mxu0 0.0
        %2861 = vmatprep.subr.mxu0 0.0
        %2862 = vmatpush1.msra.mxu0 0.0
        %2863 = vmatprep.subr.mxu0 0.0
        %2864 = vmatpush1.msra.mxu0 0.0
        %2865 = vmatprep.subr.mxu0 0.0
        %2866 = vmatpush1.msra.mxu0 0.0
        %2867 = vmatprep.subr.mxu0 0.0
        %2868 = vmatpush1.msra.mxu0 0.0
        %2869 = vmatprep.subr.mxu0 0.0
        %2870 = vmatpush1.msra.mxu0 0.0
        %2871 = vmatprep.subr.mxu0 0.0
        %v2872 = vand.u32 %v450, 4294901760
        %v2873 = vsub.f32 %v450, %v2872
        %v2874 = vand.u32 %v2873, 4294901760
        %2875 = vmatpush1.msra.mxu0 %v2874
        %2876 = vmatprep.subr.mxu0 0.0
        %v2877 = vand.u32 %v449, 4294901760
        %v2878 = vsub.f32 %v449, %v2877
        %v2879 = vand.u32 %v2878, 4294901760
        %2880 = vmatpush1.msra.mxu0 %v2879
        %2881 = vmatprep.subr.mxu0 0.0
        %2882 = vmatpush2.msra.mxu0 0.0
        %2883 = vmatprep.subr.mxu0 0.0
        %2884 = vmatpush2.msra.mxu0 0.0
        %2885 = vmatprep.subr.mxu0 0.0
        %2886 = vmatpush2.msra.mxu0 0.0
        %2887 = vmatprep.subr.mxu0 0.0
        %2888 = vmatpush2.msra.mxu0 0.0
        %2889 = vmatprep.subr.mxu0 0.0
        %2890 = vmatpush2.msra.mxu0 0.0
        %2891 = vmatprep.subr.mxu0 0.0
        %2892 = vmatpush2.msra.mxu0 0.0
        %2893 = vmatprep.subr.mxu0 0.0
        %2894 = vmatpush2.msra.mxu0 0.0
        %2895 = vmatprep.subr.mxu0 0.0
        %2896 = vmatpush2.msra.mxu0 0.0
        %2897 = vmatprep.subr.mxu0 0.0
        %2898 = vmatpush2.msra.mxu0 0.0
        %2899 = vmatprep.subr.mxu0 0.0
        %2900 = vmatpush2.msra.mxu0 0.0
        %2901 = vmatprep.subr.mxu0 0.0
        %2902 = vmatpush2.msra.mxu0 0.0
        %2903 = vmatprep.subr.mxu0 0.0
        %2904 = vmatpush2.msra.mxu0 0.0
        %2905 = vmatprep.subr.mxu0 0.0
        %2906 = vmatpush2.msra.mxu0 0.0
        %2907 = vmatprep.subr.mxu0 0.0
        %2908 = vmatpush2.msra.mxu0 0.0
        %2909 = vmatprep.subr.mxu0 0.0
        %2910 = vmatpush2.msra.mxu0 0.0
        %2911 = vmatprep.subr.mxu0 0.0
        %2912 = vmatpush2.msra.mxu0 0.0
        %2913 = vmatprep.mubr.f32.mxu0 0.0
        %v2914 = vand.u32 %v2532, 4294901760
        %2915 = vmatmul.mubr.f32.gmra.mxu0 %v2914
        %v2916 = vpop.f32.mrf.mxu0
        %v2917 = vadd.f32 %v2840, %v2916
        %v2918 = vpop.f32.mrf.mxu0
        %2919 = vdwg.mxu0
        %2920 = vmatprep.subr.mxu0 0.0
        %2921 = vmatpush1.msra.mxu0 0.0
        %2922 = vmatprep.subr.mxu0 0.0
        %2923 = vmatpush1.msra.mxu0 0.0
        %2924 = vmatprep.subr.mxu0 0.0
        %2925 = vmatpush1.msra.mxu0 0.0
        %2926 = vmatprep.subr.mxu0 0.0
        %2927 = vmatpush1.msra.mxu0 0.0
        %2928 = vmatprep.subr.mxu0 0.0
        %2929 = vmatpush1.msra.mxu0 0.0
        %2930 = vmatprep.subr.mxu0 0.0
        %2931 = vmatpush1.msra.mxu0 0.0
        %2932 = vmatprep.subr.mxu0 0.0
        %2933 = vmatpush1.msra.mxu0 0.0
        %2934 = vmatprep.subr.mxu0 0.0
        %2935 = vmatpush1.msra.mxu0 0.0
        %2936 = vmatprep.subr.mxu0 0.0
        %2937 = vmatpush1.msra.mxu0 0.0
        %2938 = vmatprep.subr.mxu0 0.0
        %2939 = vmatpush1.msra.mxu0 0.0
        %2940 = vmatprep.subr.mxu0 0.0
        %2941 = vmatpush1.msra.mxu0 0.0
        %2942 = vmatprep.subr.mxu0 0.0
        %2943 = vmatpush1.msra.mxu0 0.0
        %2944 = vmatprep.subr.mxu0 0.0
        %2945 = vmatpush1.msra.mxu0 0.0
        %2946 = vmatprep.subr.mxu0 0.0
        %2947 = vmatpush1.msra.mxu0 0.0
        %2948 = vmatprep.subr.mxu0 0.0
        %v2949 = vand.u32 %v450, 4294901760
        %2950 = vmatpush1.msra.mxu0 %v2949
        %2951 = vmatprep.subr.mxu0 0.0
        %v2952 = vand.u32 %v449, 4294901760
        %2953 = vmatpush1.msra.mxu0 %v2952
        %2954 = vmatprep.subr.mxu0 0.0
        %2955 = vmatpush2.msra.mxu0 0.0
        %2956 = vmatprep.subr.mxu0 0.0
        %2957 = vmatpush2.msra.mxu0 0.0
        %2958 = vmatprep.subr.mxu0 0.0
        %2959 = vmatpush2.msra.mxu0 0.0
        %2960 = vmatprep.subr.mxu0 0.0
        %2961 = vmatpush2.msra.mxu0 0.0
        %2962 = vmatprep.subr.mxu0 0.0
        %2963 = vmatpush2.msra.mxu0 0.0
        %2964 = vmatprep.subr.mxu0 0.0
        %2965 = vmatpush2.msra.mxu0 0.0
        %2966 = vmatprep.subr.mxu0 0.0
        %2967 = vmatpush2.msra.mxu0 0.0
        %2968 = vmatprep.subr.mxu0 0.0
        %2969 = vmatpush2.msra.mxu0 0.0
        %2970 = vmatprep.subr.mxu0 0.0
        %2971 = vmatpush2.msra.mxu0 0.0
        %2972 = vmatprep.subr.mxu0 0.0
        %2973 = vmatpush2.msra.mxu0 0.0
        %2974 = vmatprep.subr.mxu0 0.0
        %2975 = vmatpush2.msra.mxu0 0.0
        %2976 = vmatprep.subr.mxu0 0.0
        %2977 = vmatpush2.msra.mxu0 0.0
        %2978 = vmatprep.subr.mxu0 0.0
        %2979 = vmatpush2.msra.mxu0 0.0
        %2980 = vmatprep.subr.mxu0 0.0
        %2981 = vmatpush2.msra.mxu0 0.0
        %2982 = vmatprep.subr.mxu0 0.0
        %2983 = vmatpush2.msra.mxu0 0.0
        %2984 = vmatprep.subr.mxu0 0.0
        %2985 = vmatpush2.msra.mxu0 0.0
        %2986 = vmatprep.mubr.f32.mxu0 0.0
        %v2987 = vand.u32 %v2532, 4294901760
        %2988 = vmatmul.mubr.f32.gmra.mxu0 %v2987
        %v2989 = vpop.f32.mrf.mxu0
        %v2990 = vadd.f32 %v2917, %v2989
        %v2991 = vpop.f32.mrf.mxu0
        %2992 = vdwg.mxu0
        %2994 = vrot.lane.b32.xlu0 %v2509, 96
        %v2995 = vpop.permute.xlu0 %2994
        %v2996 = vsel %vm461, %v2995, 0
        %2998 = vmatprep.subr.mxu0 0.0
        %2999 = vmatpush1.msra.mxu0 0.0
        %3000 = vmatprep.subr.mxu0 0.0
        %3001 = vmatpush1.msra.mxu0 0.0
        %3002 = vmatprep.subr.mxu0 0.0
        %3003 = vmatpush1.msra.mxu0 0.0
        %3004 = vmatprep.subr.mxu0 0.0
        %3005 = vmatpush1.msra.mxu0 0.0
        %3006 = vmatprep.subr.mxu0 0.0
        %3007 = vmatpush1.msra.mxu0 0.0
        %3008 = vmatprep.subr.mxu0 0.0
        %3009 = vmatpush1.msra.mxu0 0.0
        %3010 = vmatprep.subr.mxu0 0.0
        %3011 = vmatpush1.msra.mxu0 0.0
        %3012 = vmatprep.subr.mxu0 0.0
        %3013 = vmatpush1.msra.mxu0 0.0
        %3014 = vmatprep.subr.mxu0 0.0
        %3015 = vmatpush1.msra.mxu0 0.0
        %3016 = vmatprep.subr.mxu0 0.0
        %3017 = vmatpush1.msra.mxu0 0.0
        %3018 = vmatprep.subr.mxu0 0.0
        %3019 = vmatpush1.msra.mxu0 0.0
        %3020 = vmatprep.subr.mxu0 0.0
        %3021 = vmatpush1.msra.mxu0 0.0
        %3022 = vmatprep.subr.mxu0 0.0
        %3023 = vmatpush1.msra.mxu0 0.0
        %3024 = vmatprep.subr.mxu0 0.0
        %3025 = vmatpush1.msra.mxu0 0.0
        %3026 = vmatprep.subr.mxu0 0.0
        %v3027 = vand.u32 %v452, 4294901760
        %3028 = vmatpush1.msra.mxu0 %v3027
        %3029 = vmatprep.subr.mxu0 0.0
        %v3030 = vand.u32 %v451, 4294901760
        %3031 = vmatpush1.msra.mxu0 %v3030
        %3032 = vmatprep.subr.mxu0 0.0
        %3033 = vmatpush2.msra.mxu0 0.0
        %3034 = vmatprep.subr.mxu0 0.0
        %3035 = vmatpush2.msra.mxu0 0.0
        %3036 = vmatprep.subr.mxu0 0.0
        %3037 = vmatpush2.msra.mxu0 0.0
        %3038 = vmatprep.subr.mxu0 0.0
        %3039 = vmatpush2.msra.mxu0 0.0
        %3040 = vmatprep.subr.mxu0 0.0
        %3041 = vmatpush2.msra.mxu0 0.0
        %3042 = vmatprep.subr.mxu0 0.0
        %3043 = vmatpush2.msra.mxu0 0.0
        %3044 = vmatprep.subr.mxu0 0.0
        %3045 = vmatpush2.msra.mxu0 0.0
        %3046 = vmatprep.subr.mxu0 0.0
        %3047 = vmatpush2.msra.mxu0 0.0
        %3048 = vmatprep.subr.mxu0 0.0
        %3049 = vmatpush2.msra.mxu0 0.0
        %3050 = vmatprep.subr.mxu0 0.0
        %3051 = vmatpush2.msra.mxu0 0.0
        %3052 = vmatprep.subr.mxu0 0.0
        %3053 = vmatpush2.msra.mxu0 0.0
        %3054 = vmatprep.subr.mxu0 0.0
        %3055 = vmatpush2.msra.mxu0 0.0
        %3056 = vmatprep.subr.mxu0 0.0
        %3057 = vmatpush2.msra.mxu0 0.0
        %3058 = vmatprep.subr.mxu0 0.0
        %3059 = vmatpush2.msra.mxu0 0.0
        %3060 = vmatprep.subr.mxu0 0.0
        %3061 = vmatpush2.msra.mxu0 0.0
        %3062 = vmatprep.subr.mxu0 0.0
        %3063 = vmatpush2.msra.mxu0 0.0
        %3064 = vmatprep.mubr.f32.mxu0 0.0
        %v3065 = vand.u32 %v2996, 4294901760
        %v3066 = vsub.f32 %v2996, %v3065
        %v3067 = vand.u32 %v3066, 4294901760
        %v3068 = vsub.f32 %v3066, %v3067
        %v3069 = vand.u32 %v3068, 4294901760
        %3070 = vmatmul.mubr.f32.gmra.mxu0 %v3069
        %v3071 = vpop.f32.mrf.mxu0
        %v3072 = vadd.f32 0.0, %v3071
        %v3073 = vpop.f32.mrf.mxu0
        %3074 = vdwg.mxu0
        %3075 = vmatprep.subr.mxu0 0.0
        %3076 = vmatpush1.msra.mxu0 0.0
        %3077 = vmatprep.subr.mxu0 0.0
        %3078 = vmatpush1.msra.mxu0 0.0
        %3079 = vmatprep.subr.mxu0 0.0
        %3080 = vmatpush1.msra.mxu0 0.0
        %3081 = vmatprep.subr.mxu0 0.0
        %3082 = vmatpush1.msra.mxu0 0.0
        %3083 = vmatprep.subr.mxu0 0.0
        %3084 = vmatpush1.msra.mxu0 0.0
        %3085 = vmatprep.subr.mxu0 0.0
        %3086 = vmatpush1.msra.mxu0 0.0
        %3087 = vmatprep.subr.mxu0 0.0
        %3088 = vmatpush1.msra.mxu0 0.0
        %3089 = vmatprep.subr.mxu0 0.0
        %3090 = vmatpush1.msra.mxu0 0.0
        %3091 = vmatprep.subr.mxu0 0.0
        %3092 = vmatpush1.msra.mxu0 0.0
        %3093 = vmatprep.subr.mxu0 0.0
        %3094 = vmatpush1.msra.mxu0 0.0
        %3095 = vmatprep.subr.mxu0 0.0
        %3096 = vmatpush1.msra.mxu0 0.0
        %3097 = vmatprep.subr.mxu0 0.0
        %3098 = vmatpush1.msra.mxu0 0.0
        %3099 = vmatprep.subr.mxu0 0.0
        %3100 = vmatpush1.msra.mxu0 0.0
        %3101 = vmatprep.subr.mxu0 0.0
        %3102 = vmatpush1.msra.mxu0 0.0
        %3103 = vmatprep.subr.mxu0 0.0
        %v3104 = vand.u32 %v452, 4294901760
        %v3105 = vsub.f32 %v452, %v3104
        %v3106 = vand.u32 %v3105, 4294901760
        %v3107 = vsub.f32 %v3105, %v3106
        %v3108 = vand.u32 %v3107, 4294901760
        %3109 = vmatpush1.msra.mxu0 %v3108
        %3110 = vmatprep.subr.mxu0 0.0
        %v3111 = vand.u32 %v451, 4294901760
        %v3112 = vsub.f32 %v451, %v3111
        %v3113 = vand.u32 %v3112, 4294901760
        %v3114 = vsub.f32 %v3112, %v3113
        %v3115 = vand.u32 %v3114, 4294901760
        %3116 = vmatpush1.msra.mxu0 %v3115
        %3117 = vmatprep.subr.mxu0 0.0
        %3118 = vmatpush2.msra.mxu0 0.0
        %3119 = vmatprep.subr.mxu0 0.0
        %3120 = vmatpush2.msra.mxu0 0.0
        %3121 = vmatprep.subr.mxu0 0.0
        %3122 = vmatpush2.msra.mxu0 0.0
        %3123 = vmatprep.subr.mxu0 0.0
        %3124 = vmatpush2.msra.mxu0 0.0
        %3125 = vmatprep.subr.mxu0 0.0
        %3126 = vmatpush2.msra.mxu0 0.0
        %3127 = vmatprep.subr.mxu0 0.0
        %3128 = vmatpush2.msra.mxu0 0.0
        %3129 = vmatprep.subr.mxu0 0.0
        %3130 = vmatpush2.msra.mxu0 0.0
        %3131 = vmatprep.subr.mxu0 0.0
        %3132 = vmatpush2.msra.mxu0 0.0
        %3133 = vmatprep.subr.mxu0 0.0
        %3134 = vmatpush2.msra.mxu0 0.0
        %3135 = vmatprep.subr.mxu0 0.0
        %3136 = vmatpush2.msra.mxu0 0.0
        %3137 = vmatprep.subr.mxu0 0.0
        %3138 = vmatpush2.msra.mxu0 0.0
        %3139 = vmatprep.subr.mxu0 0.0
        %3140 = vmatpush2.msra.mxu0 0.0
        %3141 = vmatprep.subr.mxu0 0.0
        %3142 = vmatpush2.msra.mxu0 0.0
        %3143 = vmatprep.subr.mxu0 0.0
        %3144 = vmatpush2.msra.mxu0 0.0
        %3145 = vmatprep.subr.mxu0 0.0
        %3146 = vmatpush2.msra.mxu0 0.0
        %3147 = vmatprep.subr.mxu0 0.0
        %3148 = vmatpush2.msra.mxu0 0.0
        %3149 = vmatprep.mubr.f32.mxu0 0.0
        %v3150 = vand.u32 %v2996, 4294901760
        %3151 = vmatmul.mubr.f32.gmra.mxu0 %v3150
        %v3152 = vpop.f32.mrf.mxu0
        %v3153 = vadd.f32 %v3072, %v3152
        %v3154 = vpop.f32.mrf.mxu0
        %3155 = vdwg.mxu0
        %3156 = vmatprep.subr.mxu0 0.0
        %3157 = vmatpush1.msra.mxu0 0.0
        %3158 = vmatprep.subr.mxu0 0.0
        %3159 = vmatpush1.msra.mxu0 0.0
        %3160 = vmatprep.subr.mxu0 0.0
        %3161 = vmatpush1.msra.mxu0 0.0
        %3162 = vmatprep.subr.mxu0 0.0
        %3163 = vmatpush1.msra.mxu0 0.0
        %3164 = vmatprep.subr.mxu0 0.0
        %3165 = vmatpush1.msra.mxu0 0.0
        %3166 = vmatprep.subr.mxu0 0.0
        %3167 = vmatpush1.msra.mxu0 0.0
        %3168 = vmatprep.subr.mxu0 0.0
        %3169 = vmatpush1.msra.mxu0 0.0
        %3170 = vmatprep.subr.mxu0 0.0
        %3171 = vmatpush1.msra.mxu0 0.0
        %3172 = vmatprep.subr.mxu0 0.0
        %3173 = vmatpush1.msra.mxu0 0.0
        %3174 = vmatprep.subr.mxu0 0.0
        %3175 = vmatpush1.msra.mxu0 0.0
        %3176 = vmatprep.subr.mxu0 0.0
        %3177 = vmatpush1.msra.mxu0 0.0
        %3178 = vmatprep.subr.mxu0 0.0
        %3179 = vmatpush1.msra.mxu0 0.0
        %3180 = vmatprep.subr.mxu0 0.0
        %3181 = vmatpush1.msra.mxu0 0.0
        %3182 = vmatprep.subr.mxu0 0.0
        %3183 = vmatpush1.msra.mxu0 0.0
        %3184 = vmatprep.subr.mxu0 0.0
        %v3185 = vand.u32 %v452, 4294901760
        %v3186 = vsub.f32 %v452, %v3185
        %3187 = vmatpush1.msra.mxu0 %v3186
        %3188 = vmatprep.subr.mxu0 0.0
        %v3189 = vand.u32 %v451, 4294901760
        %v3190 = vsub.f32 %v451, %v3189
        %3191 = vmatpush1.msra.mxu0 %v3190
        %3192 = vmatprep.subr.mxu0 0.0
        %3193 = vmatpush2.msra.mxu0 0.0
        %3194 = vmatprep.subr.mxu0 0.0
        %3195 = vmatpush2.msra.mxu0 0.0
        %3196 = vmatprep.subr.mxu0 0.0
        %3197 = vmatpush2.msra.mxu0 0.0
        %3198 = vmatprep.subr.mxu0 0.0
        %3199 = vmatpush2.msra.mxu0 0.0
        %3200 = vmatprep.subr.mxu0 0.0
        %3201 = vmatpush2.msra.mxu0 0.0
        %3202 = vmatprep.subr.mxu0 0.0
        %3203 = vmatpush2.msra.mxu0 0.0
        %3204 = vmatprep.subr.mxu0 0.0
        %3205 = vmatpush2.msra.mxu0 0.0
        %3206 = vmatprep.subr.mxu0 0.0
        %3207 = vmatpush2.msra.mxu0 0.0
        %3208 = vmatprep.subr.mxu0 0.0
        %3209 = vmatpush2.msra.mxu0 0.0
        %3210 = vmatprep.subr.mxu0 0.0
        %3211 = vmatpush2.msra.mxu0 0.0
        %3212 = vmatprep.subr.mxu0 0.0
        %3213 = vmatpush2.msra.mxu0 0.0
        %3214 = vmatprep.subr.mxu0 0.0
        %3215 = vmatpush2.msra.mxu0 0.0
        %3216 = vmatprep.subr.mxu0 0.0
        %3217 = vmatpush2.msra.mxu0 0.0
        %3218 = vmatprep.subr.mxu0 0.0
        %3219 = vmatpush2.msra.mxu0 0.0
        %3220 = vmatprep.subr.mxu0 0.0
        %3221 = vmatpush2.msra.mxu0 0.0
        %3222 = vmatprep.subr.mxu0 0.0
        %3223 = vmatpush2.msra.mxu0 0.0
        %3224 = vmatprep.mubr.f32.mxu0 0.0
        %v3225 = vand.u32 %v2996, 4294901760
        %v3226 = vsub.f32 %v2996, %v3225
        %3227 = vmatmul.mubr.f32.gmra.mxu0 %v3226
        %v3228 = vpop.f32.mrf.mxu0
        %v3229 = vadd.f32 %v3153, %v3228
        %v3230 = vpop.f32.mrf.mxu0
        %3231 = vdwg.mxu0
        %3232 = vmatprep.subr.mxu0 0.0
        %3233 = vmatpush1.msra.mxu0 0.0
        %3234 = vmatprep.subr.mxu0 0.0
        %3235 = vmatpush1.msra.mxu0 0.0
        %3236 = vmatprep.subr.mxu0 0.0
        %3237 = vmatpush1.msra.mxu0 0.0
        %3238 = vmatprep.subr.mxu0 0.0
        %3239 = vmatpush1.msra.mxu0 0.0
        %3240 = vmatprep.subr.mxu0 0.0
        %3241 = vmatpush1.msra.mxu0 0.0
        %3242 = vmatprep.subr.mxu0 0.0
        %3243 = vmatpush1.msra.mxu0 0.0
        %3244 = vmatprep.subr.mxu0 0.0
        %3245 = vmatpush1.msra.mxu0 0.0
        %3246 = vmatprep.subr.mxu0 0.0
        %3247 = vmatpush1.msra.mxu0 0.0
        %3248 = vmatprep.subr.mxu0 0.0
        %3249 = vmatpush1.msra.mxu0 0.0
        %3250 = vmatprep.subr.mxu0 0.0
        %3251 = vmatpush1.msra.mxu0 0.0
        %3252 = vmatprep.subr.mxu0 0.0
        %3253 = vmatpush1.msra.mxu0 0.0
        %3254 = vmatprep.subr.mxu0 0.0
        %3255 = vmatpush1.msra.mxu0 0.0
        %3256 = vmatprep.subr.mxu0 0.0
        %3257 = vmatpush1.msra.mxu0 0.0
        %3258 = vmatprep.subr.mxu0 0.0
        %3259 = vmatpush1.msra.mxu0 0.0
        %3260 = vmatprep.subr.mxu0 0.0
        %v3261 = vand.u32 %v452, 4294901760
        %3262 = vmatpush1.msra.mxu0 %v3261
        %3263 = vmatprep.subr.mxu0 0.0
        %v3264 = vand.u32 %v451, 4294901760
        %3265 = vmatpush1.msra.mxu0 %v3264
        %3266 = vmatprep.subr.mxu0 0.0
        %3267 = vmatpush2.msra.mxu0 0.0
        %3268 = vmatprep.subr.mxu0 0.0
        %3269 = vmatpush2.msra.mxu0 0.0
        %3270 = vmatprep.subr.mxu0 0.0
        %3271 = vmatpush2.msra.mxu0 0.0
        %3272 = vmatprep.subr.mxu0 0.0
        %3273 = vmatpush2.msra.mxu0 0.0
        %3274 = vmatprep.subr.mxu0 0.0
        %3275 = vmatpush2.msra.mxu0 0.0
        %3276 = vmatprep.subr.mxu0 0.0
        %3277 = vmatpush2.msra.mxu0 0.0
        %3278 = vmatprep.subr.mxu0 0.0
        %3279 = vmatpush2.msra.mxu0 0.0
        %3280 = vmatprep.subr.mxu0 0.0
        %3281 = vmatpush2.msra.mxu0 0.0
        %3282 = vmatprep.subr.mxu0 0.0
        %3283 = vmatpush2.msra.mxu0 0.0
        %3284 = vmatprep.subr.mxu0 0.0
        %3285 = vmatpush2.msra.mxu0 0.0
        %3286 = vmatprep.subr.mxu0 0.0
        %3287 = vmatpush2.msra.mxu0 0.0
        %3288 = vmatprep.subr.mxu0 0.0
        %3289 = vmatpush2.msra.mxu0 0.0
        %3290 = vmatprep.subr.mxu0 0.0
        %3291 = vmatpush2.msra.mxu0 0.0
        %3292 = vmatprep.subr.mxu0 0.0
        %3293 = vmatpush2.msra.mxu0 0.0
        %3294 = vmatprep.subr.mxu0 0.0
        %3295 = vmatpush2.msra.mxu0 0.0
        %3296 = vmatprep.subr.mxu0 0.0
        %3297 = vmatpush2.msra.mxu0 0.0
        %3298 = vmatprep.mubr.f32.mxu0 0.0
        %v3299 = vand.u32 %v2996, 4294901760
        %v3300 = vsub.f32 %v2996, %v3299
        %v3301 = vand.u32 %v3300, 4294901760
        %3302 = vmatmul.mubr.f32.gmra.mxu0 %v3301
        %v3303 = vpop.f32.mrf.mxu0
        %v3304 = vadd.f32 %v3229, %v3303
        %v3305 = vpop.f32.mrf.mxu0
        %3306 = vdwg.mxu0
        %3307 = vmatprep.subr.mxu0 0.0
        %3308 = vmatpush1.msra.mxu0 0.0
        %3309 = vmatprep.subr.mxu0 0.0
        %3310 = vmatpush1.msra.mxu0 0.0
        %3311 = vmatprep.subr.mxu0 0.0
        %3312 = vmatpush1.msra.mxu0 0.0
        %3313 = vmatprep.subr.mxu0 0.0
        %3314 = vmatpush1.msra.mxu0 0.0
        %3315 = vmatprep.subr.mxu0 0.0
        %3316 = vmatpush1.msra.mxu0 0.0
        %3317 = vmatprep.subr.mxu0 0.0
        %3318 = vmatpush1.msra.mxu0 0.0
        %3319 = vmatprep.subr.mxu0 0.0
        %3320 = vmatpush1.msra.mxu0 0.0
        %3321 = vmatprep.subr.mxu0 0.0
        %3322 = vmatpush1.msra.mxu0 0.0
        %3323 = vmatprep.subr.mxu0 0.0
        %3324 = vmatpush1.msra.mxu0 0.0
        %3325 = vmatprep.subr.mxu0 0.0
        %3326 = vmatpush1.msra.mxu0 0.0
        %3327 = vmatprep.subr.mxu0 0.0
        %3328 = vmatpush1.msra.mxu0 0.0
        %3329 = vmatprep.subr.mxu0 0.0
        %3330 = vmatpush1.msra.mxu0 0.0
        %3331 = vmatprep.subr.mxu0 0.0
        %3332 = vmatpush1.msra.mxu0 0.0
        %3333 = vmatprep.subr.mxu0 0.0
        %3334 = vmatpush1.msra.mxu0 0.0
        %3335 = vmatprep.subr.mxu0 0.0
        %v3336 = vand.u32 %v452, 4294901760
        %v3337 = vsub.f32 %v452, %v3336
        %v3338 = vand.u32 %v3337, 4294901760
        %3339 = vmatpush1.msra.mxu0 %v3338
        %3340 = vmatprep.subr.mxu0 0.0
        %v3341 = vand.u32 %v451, 4294901760
        %v3342 = vsub.f32 %v451, %v3341
        %v3343 = vand.u32 %v3342, 4294901760
        %3344 = vmatpush1.msra.mxu0 %v3343
        %3345 = vmatprep.subr.mxu0 0.0
        %3346 = vmatpush2.msra.mxu0 0.0
        %3347 = vmatprep.subr.mxu0 0.0
        %3348 = vmatpush2.msra.mxu0 0.0
        %3349 = vmatprep.subr.mxu0 0.0
        %3350 = vmatpush2.msra.mxu0 0.0
        %3351 = vmatprep.subr.mxu0 0.0
        %3352 = vmatpush2.msra.mxu0 0.0
        %3353 = vmatprep.subr.mxu0 0.0
        %3354 = vmatpush2.msra.mxu0 0.0
        %3355 = vmatprep.subr.mxu0 0.0
        %3356 = vmatpush2.msra.mxu0 0.0
        %3357 = vmatprep.subr.mxu0 0.0
        %3358 = vmatpush2.msra.mxu0 0.0
        %3359 = vmatprep.subr.mxu0 0.0
        %3360 = vmatpush2.msra.mxu0 0.0
        %3361 = vmatprep.subr.mxu0 0.0
        %3362 = vmatpush2.msra.mxu0 0.0
        %3363 = vmatprep.subr.mxu0 0.0
        %3364 = vmatpush2.msra.mxu0 0.0
        %3365 = vmatprep.subr.mxu0 0.0
        %3366 = vmatpush2.msra.mxu0 0.0
        %3367 = vmatprep.subr.mxu0 0.0
        %3368 = vmatpush2.msra.mxu0 0.0
        %3369 = vmatprep.subr.mxu0 0.0
        %3370 = vmatpush2.msra.mxu0 0.0
        %3371 = vmatprep.subr.mxu0 0.0
        %3372 = vmatpush2.msra.mxu0 0.0
        %3373 = vmatprep.subr.mxu0 0.0
        %3374 = vmatpush2.msra.mxu0 0.0
        %3375 = vmatprep.subr.mxu0 0.0
        %3376 = vmatpush2.msra.mxu0 0.0
        %3377 = vmatprep.mubr.f32.mxu0 0.0
        %v3378 = vand.u32 %v2996, 4294901760
        %3379 = vmatmul.mubr.f32.gmra.mxu0 %v3378
        %v3380 = vpop.f32.mrf.mxu0
        %v3381 = vadd.f32 %v3304, %v3380
        %v3382 = vpop.f32.mrf.mxu0
        %3383 = vdwg.mxu0
        %3384 = vmatprep.subr.mxu0 0.0
        %3385 = vmatpush1.msra.mxu0 0.0
        %3386 = vmatprep.subr.mxu0 0.0
        %3387 = vmatpush1.msra.mxu0 0.0
        %3388 = vmatprep.subr.mxu0 0.0
        %3389 = vmatpush1.msra.mxu0 0.0
        %3390 = vmatprep.subr.mxu0 0.0
        %3391 = vmatpush1.msra.mxu0 0.0
        %3392 = vmatprep.subr.mxu0 0.0
        %3393 = vmatpush1.msra.mxu0 0.0
        %3394 = vmatprep.subr.mxu0 0.0
        %3395 = vmatpush1.msra.mxu0 0.0
        %3396 = vmatprep.subr.mxu0 0.0
        %3397 = vmatpush1.msra.mxu0 0.0
        %3398 = vmatprep.subr.mxu0 0.0
        %3399 = vmatpush1.msra.mxu0 0.0
        %3400 = vmatprep.subr.mxu0 0.0
        %3401 = vmatpush1.msra.mxu0 0.0
        %3402 = vmatprep.subr.mxu0 0.0
        %3403 = vmatpush1.msra.mxu0 0.0
        %3404 = vmatprep.subr.mxu0 0.0
        %3405 = vmatpush1.msra.mxu0 0.0
        %3406 = vmatprep.subr.mxu0 0.0
        %3407 = vmatpush1.msra.mxu0 0.0
        %3408 = vmatprep.subr.mxu0 0.0
        %3409 = vmatpush1.msra.mxu0 0.0
        %3410 = vmatprep.subr.mxu0 0.0
        %3411 = vmatpush1.msra.mxu0 0.0
        %3412 = vmatprep.subr.mxu0 0.0
        %v3413 = vand.u32 %v452, 4294901760
        %3414 = vmatpush1.msra.mxu0 %v3413
        %3415 = vmatprep.subr.mxu0 0.0
        %v3416 = vand.u32 %v451, 4294901760
        %3417 = vmatpush1.msra.mxu0 %v3416
        %3418 = vmatprep.subr.mxu0 0.0
        %3419 = vmatpush2.msra.mxu0 0.0
        %3420 = vmatprep.subr.mxu0 0.0
        %3421 = vmatpush2.msra.mxu0 0.0
        %3422 = vmatprep.subr.mxu0 0.0
        %3423 = vmatpush2.msra.mxu0 0.0
        %3424 = vmatprep.subr.mxu0 0.0
        %3425 = vmatpush2.msra.mxu0 0.0
        %3426 = vmatprep.subr.mxu0 0.0
        %3427 = vmatpush2.msra.mxu0 0.0
        %3428 = vmatprep.subr.mxu0 0.0
        %3429 = vmatpush2.msra.mxu0 0.0
        %3430 = vmatprep.subr.mxu0 0.0
        %3431 = vmatpush2.msra.mxu0 0.0
        %3432 = vmatprep.subr.mxu0 0.0
        %3433 = vmatpush2.msra.mxu0 0.0
        %3434 = vmatprep.subr.mxu0 0.0
        %3435 = vmatpush2.msra.mxu0 0.0
        %3436 = vmatprep.subr.mxu0 0.0
        %3437 = vmatpush2.msra.mxu0 0.0
        %3438 = vmatprep.subr.mxu0 0.0
        %3439 = vmatpush2.msra.mxu0 0.0
        %3440 = vmatprep.subr.mxu0 0.0
        %3441 = vmatpush2.msra.mxu0 0.0
        %3442 = vmatprep.subr.mxu0 0.0
        %3443 = vmatpush2.msra.mxu0 0.0
        %3444 = vmatprep.subr.mxu0 0.0
        %3445 = vmatpush2.msra.mxu0 0.0
        %3446 = vmatprep.subr.mxu0 0.0
        %3447 = vmatpush2.msra.mxu0 0.0
        %3448 = vmatprep.subr.mxu0 0.0
        %3449 = vmatpush2.msra.mxu0 0.0
        %3450 = vmatprep.mubr.f32.mxu0 0.0
        %v3451 = vand.u32 %v2996, 4294901760
        %3452 = vmatmul.mubr.f32.gmra.mxu0 %v3451
        %v3453 = vpop.f32.mrf.mxu0
        %v3454 = vadd.f32 %v3381, %v3453
        %v3455 = vpop.f32.mrf.mxu0
        %3456 = vdwg.mxu0
        %v3457 = vadd.f32 %v2527, %v2990
        %v3458 = vxor.u32 %v3457, 2147483648
        %v3459 = vmul.f32 %v3458, 1.442695
        %v3460 = vpow.pop %v3459
        %v3461 = vadd.f32 %v3460, 1.0
        %v3462 = vrcp.pop %v3461
        %v3463 = vmul.f32 1.0, %v3462
        %v3464 = vadd.f32 %v2990, %v1399
        %3466 = vrot.lane.b32.xlu0 %v3464, 96
        %v3467 = vpop.permute.xlu0 %3466
        %v3469 = vmul.f32 %v3463, %v3467
        %3471 = vrot.lane.b32.xlu0 %v3469, 32
        %v3472 = vpop.permute.xlu0 %3471
        %v3474 = vadd.f32 %v2527, %v3472
        %v3475 = vtanh.pop %v3474
        %v3476 = vsub.f32 %v2503, %v3475
        %3478 = vrot.lane.b32.xlu0 %v3476, 112
        %v3479 = vpop.permute.xlu0 %3478
        %v3481 = vmul.f32 %v3463, %v3479
        %3483 = vrot.lane.b32.xlu0 %v3481, 16
        %v3484 = vpop.permute.xlu0 %3483
        %v3486 = vadd.f32 %v3475, %v3484
        %v3487 = vadd.f32 %v2528, %v3454
        %v3488 = vxor.u32 %v3487, 2147483648
        %v3489 = vmul.f32 %v3488, 1.442695
        %v3490 = vpow.pop %v3489
        %v3491 = vadd.f32 %v3490, 1.0
        %v3492 = vrcp.pop %v3491
        %v3493 = vmul.f32 1.0, %v3492
        %v3494 = vadd.f32 %v3454, %v1436
        %3496 = vrot.lane.b32.xlu0 %v3494, 96
        %v3497 = vpop.permute.xlu0 %3496
        %v3499 = vmul.f32 %v3493, %v3497
        %3501 = vrot.lane.b32.xlu0 %v3499, 32
        %v3502 = vpop.permute.xlu0 %3501
        %v3504 = vadd.f32 %v2528, %v3502
        %v3505 = vtanh.pop %v3504
        %v3506 = vsub.f32 %v2509, %v3505
        %3508 = vrot.lane.b32.xlu0 %v3506, 112
        %v3509 = vpop.permute.xlu0 %3508
        %v3511 = vmul.f32 %v3493, %v3509
        %3513 = vrot.lane.b32.xlu0 %v3511, 16
        %v3514 = vpop.permute.xlu0 %3513
        %v3516 = vadd.f32 %v3505, %v3514
        %v3517 = vstv %s2524
        %vm3518 = vcmp.gt.s32.totalorder %v448, %v3517
        %v3519 = vstv %s2525
        %vm3520 = vcmp.gt.s32.totalorder %v448, %v3519
        %v3521 = vsel %vm3518, 1, 0
        %3522 = vset.pattern.permute.xlu0 0
        %3523 = vperm.xlu0 %3522, %v3521
        %v3524 = vpop.permute.xlu0 %3523
        %vm3525 = vcmp.eq.s32.totalorder %v3524, 1
        %v3526 = vsel %vm3525, %v3486, %v2503
        %v3527 = vsel %vm3520, 1, 0
        %3528 = vset.pattern.permute.xlu0 0
        %3529 = vperm.xlu0 %3528, %v3527
        %v3530 = vpop.permute.xlu0 %3529
        %vm3531 = vcmp.eq.s32.totalorder %v3530, 1
        %v3532 = vsel %vm3531, %v3516, %v2509
        %v3533 = vsel %vm3525, %v3486, 0.0
        %3535 = vrot.lane.b32.xlu0 %v3533, 96
        %v3536 = vpop.permute.xlu0 %3535
        %s3538 = scalar_lea.vmem %s421, 16 [#allocation10]
        %3539 = vst.msk [vmem:[%s3538] sm:$0xff] %vm461, %v3536
        %v3540 = vsel %vm3531, %v3516, 0.0
        %3542 = vrot.lane.b32.xlu0 %v3540, 96
        %v3543 = vpop.permute.xlu0 %3542
        %3545 = vst.msk [vmem:[%s428] sm:$0xff] %vm461, %v3543
        %3547 = vrot.lane.b32.xlu0 %v3526, 96
        %v3548 = vpop.permute.xlu0 %3547
        %3550 = vst.msk [vmem:[#allocation2] sm:$0xff] %vm461, %v3548
        %3552 = vrot.lane.b32.xlu0 %v3532, 96
        %v3553 = vpop.permute.xlu0 %3552
        %3555 = vst.msk [vmem:[#allocation3] sm:$0xff] %vm461, %v3553
        %p3556 = scmp.eq.s32.totalorder %s37, 2
        // Predicated region
        $region61: #{tpu_custom_call.1} parent=43 // pred_check
          %p3557 = pneg %p3556
        $region62: #{tpu_custom_call.1} parent=43 // pred_check_branch
          %3559 = sbr.rel (%p3557) target = $region64
        $region63: #{tpu_custom_call.1} parent=43 // pred_region
          %3560 = vst.msk [vmem:[#allocation13] sm:$0xff] %vm461, %v3548
          %s3561 = scalar_lea.vmem [#allocation13], 8
          %3562 = vst.msk [vmem:[%s3561] sm:$0xff] %vm461, %v3553
        $region64: #{tpu_custom_call.1} parent=43 // pred_fallthru
          _
        %s3563 = sand.u32 %s201, 1
        %s3564 = scalar_lea.sflag [#allocation6], %s3563
        %s3565 = sand.u32 %s201, 1
        %s3566 = smul.addr %s3565, 24
        %s3567 = scalar_lea.vmem [#allocation10], %s3566
        %s3568 = sand.u32 %s32, 1
        %s3569 = scalar_lea.sflag [#allocation12], %s3568
        %s3570 = sand.u32 %s231, 1
        %s3571 = smul.addr %s3570, 24
        %s3572 = scalar_lea.vmem [#allocation11], %s3571
        // Predicated region
        $region65: #{tpu_custom_call.1} parent=43 // pred_check
          %p3573 = pneg %p211
        $region66: #{tpu_custom_call.1} parent=43 // pred_check_branch
          %3575 = sbr.rel (%p3573) target = $region68
        $region67: #{tpu_custom_call.1} parent=43 // pred_region
          %s3576 = smul.u32 3, %s37
          %s3578 = ssub.s32 384, 384
          %3579 = vsyncadd %s3564, %s3578
          %s3580 = sadd.s32 %s36, %s3576
          %s3581 = smul.addr %s3580, 128
          %s3582 = scalar_lea.hbm %s6, %s3581
          %s3583 = sshll.u32 %s3567, 4
          %s3584 = int_to_ptr.vmem [resolvable:$true] %s3583
          %3589 = dma.vmem_to_hbm [thread:$0]  %s3584, 384, %s3582, %s3564, 128, 128, 8
        $region68: #{tpu_custom_call.1} parent=43 // pred_fallthru
          _
        // Predicated region
        $region69: #{tpu_custom_call.1} parent=43 // pred_check
          %p3590 = pneg %p241
        $region70: #{tpu_custom_call.1} parent=43 // pred_check_branch
          %3592 = sbr.rel (%p3590) target = $region72
        $region71: #{tpu_custom_call.1} parent=43 // pred_region
          %s3593 = ssub.s32 2, %s37
          %s3594 = smul.u32 3, %s3593
          %s3596 = ssub.s32 384, 384
          %3597 = vsyncadd %s3569, %s3596
          %s3598 = sadd.s32 %s36, %s3594
          %s3599 = smul.addr %s3598, 128
          %s3600 = scalar_lea.hbm %s7, %s3599
          %s3601 = sshll.u32 %s3572, 4
          %s3602 = int_to_ptr.vmem [resolvable:$true] %s3601
          %3607 = dma.vmem_to_hbm [thread:$0]  %s3602, 384, %s3600, %s3569, 128, 128, 8
        $region72: #{tpu_custom_call.1} parent=43 // pred_fallthru
          _
        // Predicated region
        $region73: #{tpu_custom_call.1} parent=43 // pred_check
          %p3608 = pneg %p267
        $region74: #{tpu_custom_call.1} parent=43 // pred_check_branch
          %3610 = sbr.rel (%p3608) target = $region76
        $region75: #{tpu_custom_call.1} parent=43 // pred_region
          %s3612 = ssub.s32 256, 256
          %3613 = vsyncadd [#allocation12], %s3612
          %s3614 = smul.addr %s36, 128
          %s3615 = scalar_lea.hbm %s8, %s3614
          %s3616 = sshll.u32 [#allocation13], 4
          %s3617 = int_to_ptr.vmem [resolvable:$true] %s3616
          %3622 = dma.vmem_to_hbm [thread:$0]  %s3617, 256, %s3615, [#allocation12], 128, 128, 8
        $region76: #{tpu_custom_call.1} parent=43 // pred_fallthru
          _
        // Predicated region
        $region77: #{tpu_custom_call.1} parent=43 // pred_check
          %p3623 = pneg %p267
        $region78: #{tpu_custom_call.1} parent=43 // pred_check_branch
          %3625 = sbr.rel (%p3623) target = $region80
        $region79: #{tpu_custom_call.1} parent=43 // pred_region
          %3626 = dma.done [#allocation12], 256
        $region80: #{tpu_custom_call.1} parent=43 // pred_fallthru
          _
      $region44: #{tpu_custom_call.1} parent=5 // pred_fallthru
        _
      %p3627 = scmp.le.s32.totalorder 2, %s27
      // Predicated region
      $region81: #{tpu_custom_call.1} parent=5 // pred_check
        %p3628 = pneg %p3627
      $region82: #{tpu_custom_call.1} parent=5 // pred_check_branch
        %3630 = sbr.rel (%p3628) target = $region84
      $region83: #{tpu_custom_call.1} parent=5 // pred_region
        %s3631 = ssub.s32 %s27, 2
        // Predicated region
        $region85: #{tpu_custom_call.1} parent=83 // pred_check
          %p3632 = pneg %p217
        $region86: #{tpu_custom_call.1} parent=83 // pred_check_branch
          %3634 = sbr.rel (%p3632) target = $region88
        $region87: #{tpu_custom_call.1} parent=83 // pred_region
          %s3635 = sand.u32 %s202, 1
          %s3636 = scalar_lea.sflag [#allocation6], %s3635
          %s3637 = sand.u32 %s202, 1
          %s3638 = smul.addr %s3637, 24
          %s3639 = scalar_lea.vmem [#allocation10], %s3638
          %3640 = dma.done %s3636, 384
        $region88: #{tpu_custom_call.1} parent=83 // pred_fallthru
          _
        // Predicated region
        $region89: #{tpu_custom_call.1} parent=83 // pred_check
          %p3641 = pneg %p247
        $region90: #{tpu_custom_call.1} parent=83 // pred_check_branch
          %3643 = sbr.rel (%p3641) target = $region92
        $region91: #{tpu_custom_call.1} parent=83 // pred_region
          %s3644 = sand.u32 %s33, 1
          %s3645 = scalar_lea.sflag [#allocation12], %s3644
          %s3646 = sand.u32 %s232, 1
          %s3647 = smul.addr %s3646, 24
          %s3648 = scalar_lea.vmem [#allocation11], %s3647
          %3649 = dma.done %s3645, 384
        $region92: #{tpu_custom_call.1} parent=83 // pred_fallthru
          _
      $region84: #{tpu_custom_call.1} parent=5 // pred_fallthru
        _
    $region6: #{tpu_custom_call.1} parent=1 // loop_footer
      %s31 = sadd.s32 1, %s27
    $region7: #{tpu_custom_call.1} parent=1 // loop_footer_branch
      %26 = sbr.rel target = $region3
    $region8: #{tpu_custom_call.1} parent=1 // loop_exit
      _
    %3650 = vsyncpa [#allocation5], 1
    %s3651 = scalar_lea.sflag [#allocation5], 1
    %3652 = vsyncpa %s3651, 1
    %3653 = vsyncpa [#allocation8], 1
    %s3654 = scalar_lea.sflag [#allocation8], 1
    %3655 = vsyncpa %s3654, 1
    %3656 = vsyncpa [#allocation6], 1
    %s3657 = scalar_lea.sflag [#allocation6], 1
    %3658 = vsyncpa %s3657, 1
    %3659 = vsyncpa [#allocation12], 1
    %s3660 = scalar_lea.sflag [#allocation12], 1
    %3661 = vsyncpa %s3660, 1

</llo_original>
